<compile_context>
chip_gen: v7x
topology: tpu7x:2x2x1
jax: 0.10.0
libtpu: 0.0.40
codegen_flags: <defaults>
</compile_context>

<pallas_src>
import math

import jax
import jax.numpy as jnp
from jax.experimental import pallas as pl
from jax.experimental.pallas import tpu as pltpu


def _ecg_fused_kernel(x_ref,
                      w1, g1, bt1,           # enc1: Conv(1->32,k7)  + BN
                      w2, g2, bt2,           # enc2: Conv(32->64,k5) + BN
                      w3, g3, bt3,           # enc3: Conv(64->128,k5)+ BN
                      we4, wo4, g4, bt4,     # dec1: ConvT(128->64) polyphase + BN
                      we5, wo5, g5, bt5,     # dec2: ConvT(64->32)  polyphase + BN
                      w6, b6,                # dec3: Conv(32->1,k7) + bias
                      o_ref,
                      buf1, i2c1, buf2, i2c2, buf3, i2c3,
                      bufd1, bufd2, bufd3, i2cd3):
    f32 = jnp.float32
    B, L0, _ = x_ref.shape
    L1, L2 = L0 // 2, L0 // 4

    # ---------------- helpers (traced inline; all shapes static) ----------------
    def fill_padded(dst, val, pad):
        # Zero only the pad edges; the interior is written exactly once.
        Bb, Lp, C = dst.shape
        Lv = val.shape[1]
        dst[:, 0:pad, :] = jnp.zeros((Bb, pad, C), f32)
        dst[:, pad:pad + Lv, :] = val
        dst[:, pad + Lv:Lp, :] = jnp.zeros((Bb, Lp - pad - Lv, C), f32)

    def im2col_matmul(src, i2c, w_ref, K, L):
        # Build im2col (B*L, K*Cin) in VMEM scratch (K static, K<=7), one MXU matmul.
        Bb, _, Cin = src.shape
        for k in range(K):
            i2c[:, k * Cin:(k + 1) * Cin] = src[:, k:k + L, :].reshape(Bb * L, Cin)
        return jnp.dot(i2c[...], w_ref[...], preferred_element_type=f32)

    def bn_relu(y, g_ref, b_ref):
        # Training-mode BatchNorm1d, single pass: biased var = E[y^2] - E[y]^2.
        inv_n = 1.0 / y.shape[0]
        mean = jnp.sum(y, axis=0, keepdims=True) * inv_n
        msq = jnp.sum(y * y, axis=0, keepdims=True) * inv_n
        var = jnp.maximum(msq - mean * mean, 0.0)
        scale = jax.lax.rsqrt(var + 1e-5) * g_ref[...]
        shift = b_ref[...] - mean * scale
        return jnp.maximum(y * scale + shift, 0.0)

    def bn_relu_pair(e, o, g_ref, b_ref):
        # Joint one-pass BN stats over both polyphase halves (= full output length).
        inv_n = 1.0 / (2.0 * e.shape[0])
        mean = (jnp.sum(e, 0, keepdims=True) + jnp.sum(o, 0, keepdims=True)) * inv_n
        msq = (jnp.sum(e * e, 0, keepdims=True)
               + jnp.sum(o * o, 0, keepdims=True)) * inv_n
        var = jnp.maximum(msq - mean * mean, 0.0)
        scale = jax.lax.rsqrt(var + 1e-5) * g_ref[...]
        shift = b_ref[...] - mean * scale
        return (jnp.maximum(e * scale + shift, 0.0),
                jnp.maximum(o * scale + shift, 0.0))

    def maxpool2(y):
        n, c = y.shape
        return jnp.max(y.reshape(n // 2, 2, c), axis=1)

    def convT_polyphase(src, we_ref, wo_ref, L):
        # Stride-2 ConvTranspose, polyphase on a 1-padded input.  Even outputs use
        # taps [W4, W2, W0] at padded offsets {0,1,2}; odd outputs use [W3, W1] at
        # offsets {1,2} (the structural-zero tap is trimmed -> 2 matmuls, not 3).
        Bb, _, Cin = src.shape
        s0 = src[:, 0:L, :].reshape(Bb * L, Cin)
        s1 = src[:, 1:1 + L, :].reshape(Bb * L, Cin)
        s2 = src[:, 2:2 + L, :].reshape(Bb * L, Cin)
        e = (jnp.dot(s0, we_ref[0], preferred_element_type=f32)
             + jnp.dot(s1, we_ref[1], preferred_element_type=f32)
             + jnp.dot(s2, we_ref[2], preferred_element_type=f32))
        o = (jnp.dot(s1, wo_ref[0], preferred_element_type=f32)
             + jnp.dot(s2, wo_ref[1], preferred_element_type=f32))
        return e, o

    def interleave_store(dst, e, o, Lin, pad):
        # Vectorized even/odd interleave: select into a (N, 2, C) slab in-register,
        # collapse to (B, 2*Lin, C) and store it with ONE dense slab write.
        N, C = e.shape                                   # N = B * Lin
        phase = jax.lax.broadcasted_iota(jnp.int32, (N, 2, C), 1)
        inter = jnp.where(phase == 0, e.reshape(N, 1, C), o.reshape(N, 1, C))
        inter = inter.reshape(N * 2, C).reshape(B, 2 * Lin, C)
        Lp = dst.shape[1]
        dst[:, 0:pad, :] = jnp.zeros((B, pad, C), f32)
        dst[:, pad:pad + 2 * Lin, :] = inter
        dst[:, pad + 2 * Lin:Lp, :] = jnp.zeros((B, Lp - pad - 2 * Lin, C), f32)

    # ---------------- encoder ----------------
    fill_padded(buf1, x_ref[...], 3)
    y = bn_relu(im2col_matmul(buf1, i2c1, w1, 7, L0), g1, bt1)
    y = maxpool2(y)                                      # (B*L1, 32)

    fill_padded(buf2, y.reshape(B, L1, 32), 2)
    y = bn_relu(im2col_matmul(buf2, i2c2, w2, 5, L1), g2, bt2)
    y = maxpool2(y)                                      # (B*L2, 64)

    fill_padded(buf3, y.reshape(B, L2, 64), 2)
    y = bn_relu(im2col_matmul(buf3, i2c3, w3, 5, L2), g3, bt3)   # (B*L2, 128)

    # ---------------- decoder (polyphase transposed convolutions) ----------------
    fill_padded(bufd1, y.reshape(B, L2, 128), 1)
    e, o = convT_polyphase(bufd1, we4, wo4, L2)          # (B*L2, 64) each
    e, o = bn_relu_pair(e, o, g4, bt4)
    interleave_store(bufd2, e, o, L2, 1)                 # dec2 input, length L1

    e, o = convT_polyphase(bufd2, we5, wo5, L1)          # (B*L1, 32) each
    e, o = bn_relu_pair(e, o, g5, bt5)
    interleave_store(bufd3, e, o, L1, 3)                 # dec3 input, length L0

    # ---------------- final conv + tanh ----------------
    y = im2col_matmul(bufd3, i2cd3, w6, 7, L0) + b6[...]          # (B*L0, 1)
    o_ref[...] = jnp.tanh(y).reshape(B, L0, 1)


def init_params(key):
    """Deterministic synthetic parameters (PyTorch-like uniform init), already laid
    out for the fused kernel (im2col weights, per-tap trimmed polyphase ConvT)."""
    def u(k, shape, fan_in):
        bound = 1.0 / math.sqrt(fan_in)
        return jax.random.uniform(k, shape, jnp.float32, -bound, bound)

    keys = iter(jax.random.split(key, 16))
    p = {}

    def conv(name, cin, cout, K, with_bias):
        w = u(next(keys), (cout, cin, K), cin * K)              # torch (Cout,Cin,K)
        p[name + "_w"] = jnp.transpose(w, (2, 1, 0)).reshape(K * cin, cout)
        b = u(next(keys), (cout,), cin * K)
        if with_bias:
            p[name + "_b"] = b.reshape(1, cout)
        # conv biases followed by train-mode BN are cancelled by the BN mean sub.

    def convT(name, cin, cout):
        w = u(next(keys), (cin, cout, 5), cout * 5)             # torch (Cin,Cout,K)
        # Polyphase taps for stride=2, padding=2, output_padding=1 on a 1-padded
        # input.  Even outputs: [W4, W2, W0] at offsets {0,1,2}; odd outputs:
        # [W3, W1] at offsets {1,2} (structural-zero tap removed).
        p[name + "_we"] = jnp.stack([w[:, :, 4], w[:, :, 2], w[:, :, 0]], axis=0)
        p[name + "_wo"] = jnp.stack([w[:, :, 3], w[:, :, 1]], axis=0)
        _ = u(next(keys), (cout,), cout * 5)                    # bias (cancelled by BN)

    def bn(name, c):
        p[name + "_g"] = jnp.ones((1, c), jnp.float32)
        p[name + "_beta"] = jnp.zeros((1, c), jnp.float32)

    conv("enc1", 1, 32, 7, False);   bn("enc1", 32)
    conv("enc2", 32, 64, 5, False);  bn("enc2", 64)
    conv("enc3", 64, 128, 5, False); bn("enc3", 128)
    convT("dec1", 128, 64);          bn("dec1", 64)
    convT("dec2", 64, 32);           bn("dec2", 32)
    conv("dec3", 32, 1, 7, True)
    return p


def ecg_privacy_processor(x, p):
    # x: (B, L) or (B, 1, L) in PyTorch layout.
    if x.ndim == 2:
        x = x[:, None, :]                                       # unsqueeze(1)
    B, C, L0 = x.shape
    assert C == 1 and L0 % 4 == 0
    x_nlc = jnp.reshape(x.astype(jnp.float32), (B, L0, 1))      # layout-free reshape

    L1, L2 = L0 // 2, L0 // 4
    f32 = jnp.float32
    vmem = pl.BlockSpec(memory_space=pltpu.MemorySpace.VMEM)

    scratch_dims = [
        (B, L0 + 6, 1),      # buf1  : enc1 padded input
        (B * L0, 7 * 1),     # i2c1
        (B, L1 + 4, 32),     # buf2  : enc2 padded input
        (B * L1, 5 * 32),    # i2c2
        (B, L2 + 4, 64),     # buf3  : enc3 padded input
        (B * L2, 5 * 64),    # i2c3
        (B, L2 + 2, 128),    # bufd1 : dec1 padded input (per-tap, no im2col)
        (B, L1 + 2, 64),     # bufd2 : dec2 padded input (per-tap, no im2col)
        (B, L0 + 6, 32),     # bufd3 : dec3 padded input
        (B * L0, 7 * 32),    # i2cd3
    ]
    scratch = [pltpu.VMEM(s, f32) for s in scratch_dims]

    args = (x_nlc,
            p["enc1_w"], p["enc1_g"], p["enc1_beta"],
            p["enc2_w"], p["enc2_g"], p["enc2_beta"],
            p["enc3_w"], p["enc3_g"], p["enc3_beta"],
            p["dec1_we"], p["dec1_wo"], p["dec1_g"], p["dec1_beta"],
            p["dec2_we"], p["dec2_wo"], p["dec2_g"], p["dec2_beta"],
            p["dec3_w"], p["dec3_b"])

    # Explicit VMEM budget: working set x2 margin, floor at the 32 MiB scoped
    # default, capped at 64 MiB so the value is valid on v7x as well.
    def _bytes(shape):
        n = 1
        for d in shape:
            n *= int(d)
        return 4 * n
    working = (sum(_bytes(s) for s in scratch_dims)
               + sum(int(v.size) * 4 for v in args)
               + 4 * B * L0)
    vmem_limit = int(min(64 * 2 ** 20, max(32 * 2 ** 20, 2 * working)))

    out = pl.pallas_call(
        _ecg_fused_kernel,
        out_shape=jax.ShapeDtypeStruct((B, L0, 1), f32),
        in_specs=[vmem] * len(args),
        out_specs=vmem,
        scratch_shapes=scratch,
        compiler_params=pltpu.CompilerParams(vmem_limit_bytes=vmem_limit),
    )(*args)

    # (B,L,1) -> (B,1,L) is a pure reshape (no transpose / data movement).
    return jnp.reshape(out, (B, 1, L0))


if __name__ == "__main__":
    B, L = 2, 16
    x = jax.random.normal(jax.random.PRNGKey(0), (B, 1, L), jnp.float32)
    params = init_params(jax.random.PRNGKey(1))

    y = jax.jit(ecg_privacy_processor)(x, params)
    y = jax.block_until_ready(y)

    assert y.shape == (B, 1, L), y.shape
    assert y.dtype == jnp.float32
    assert bool(jnp.all(jnp.isfinite(y)))
    assert bool(jnp.all(jnp.abs(y) <= 1.0 + 1e-6))              # tanh range
    print("KERNEL_OK")
</pallas_src>

<mosaic_0001>
module attributes {stable_mosaic.version = 11 : i64} {
  func.func @_ecg_fused_kernel(%arg0: memref<2x16x1xf32, #tpu.memory_space<vmem>>, %arg1: memref<7x32xf32, #tpu.memory_space<vmem>>, %arg2: memref<1x32xf32, #tpu.memory_space<vmem>>, %arg3: memref<1x32xf32, #tpu.memory_space<vmem>>, %arg4: memref<160x64xf32, #tpu.memory_space<vmem>>, %arg5: memref<1x64xf32, #tpu.memory_space<vmem>>, %arg6: memref<1x64xf32, #tpu.memory_space<vmem>>, %arg7: memref<320x128xf32, #tpu.memory_space<vmem>>, %arg8: memref<1x128xf32, #tpu.memory_space<vmem>>, %arg9: memref<1x128xf32, #tpu.memory_space<vmem>>, %arg10: memref<3x128x64xf32, #tpu.memory_space<vmem>>, %arg11: memref<2x128x64xf32, #tpu.memory_space<vmem>>, %arg12: memref<1x64xf32, #tpu.memory_space<vmem>>, %arg13: memref<1x64xf32, #tpu.memory_space<vmem>>, %arg14: memref<3x64x32xf32, #tpu.memory_space<vmem>>, %arg15: memref<2x64x32xf32, #tpu.memory_space<vmem>>, %arg16: memref<1x32xf32, #tpu.memory_space<vmem>>, %arg17: memref<1x32xf32, #tpu.memory_space<vmem>>, %arg18: memref<224x1xf32, #tpu.memory_space<vmem>>, %arg19: memref<1x1xf32, #tpu.memory_space<vmem>>, %arg20: memref<2x16x1xf32, #tpu.memory_space<vmem>>, %arg21: memref<2x22x1xf32, #tpu.memory_space<vmem>>, %arg22: memref<32x7xf32, #tpu.memory_space<vmem>>, %arg23: memref<2x12x32xf32, #tpu.memory_space<vmem>>, %arg24: memref<16x160xf32, #tpu.memory_space<vmem>>, %arg25: memref<2x8x64xf32, #tpu.memory_space<vmem>>, %arg26: memref<8x320xf32, #tpu.memory_space<vmem>>, %arg27: memref<2x6x128xf32, #tpu.memory_space<vmem>>, %arg28: memref<2x10x64xf32, #tpu.memory_space<vmem>>, %arg29: memref<2x22x32xf32, #tpu.memory_space<vmem>>, %arg30: memref<32x224xf32, #tpu.memory_space<vmem>>) attributes {dimension_semantics = [], scalar_prefetch = 0 : i64, scratch_operands = 10 : i64, tpu.core_type = #tpu.core_type<tc>} {
    %c0 = arith.constant 0 : index
    %c0_0 = arith.constant 0 : index
    %c0_1 = arith.constant 0 : index
    %0 = vector.load %arg0[%c0, %c0_0, %c0_1] : memref<2x16x1xf32, #tpu.memory_space<vmem>>, vector<2x16x1xf32>
    %cst = arith.constant 0.000000e+00 : f32
    %1 = vector.broadcast %cst : f32 to vector<2x3x1xf32>
    %c0_2 = arith.constant 0 : index
    %c0_3 = arith.constant 0 : index
    %c0_4 = arith.constant 0 : index
    %2 = vector.load %arg21[%c0_2, %c0_3, %c0_4] : memref<2x22x1xf32, #tpu.memory_space<vmem>>, vector<2x3x1xf32>
    tpu.vector_store %arg21[%c0_2, %c0_3, %c0_4], %1 {strides = array<i32>} : memref<2x22x1xf32, #tpu.memory_space<vmem>>, vector<2x3x1xf32>,
    %c0_5 = arith.constant 0 : index
    %c3 = arith.constant 3 : index
    %c0_6 = arith.constant 0 : index
    %3 = vector.load %arg21[%c0_5, %c3, %c0_6] : memref<2x22x1xf32, #tpu.memory_space<vmem>>, vector<2x16x1xf32>
    tpu.vector_store %arg21[%c0_5, %c3, %c0_6], %0 {strides = array<i32>} : memref<2x22x1xf32, #tpu.memory_space<vmem>>, vector<2x16x1xf32>,
    %cst_7 = arith.constant 0.000000e+00 : f32
    %4 = vector.broadcast %cst_7 : f32 to vector<2x3x1xf32>
    %c0_8 = arith.constant 0 : index
    %c19 = arith.constant 19 : index
    %c0_9 = arith.constant 0 : index
    %5 = vector.load %arg21[%c0_8, %c19, %c0_9] : memref<2x22x1xf32, #tpu.memory_space<vmem>>, vector<2x3x1xf32>
    tpu.vector_store %arg21[%c0_8, %c19, %c0_9], %4 {strides = array<i32>} : memref<2x22x1xf32, #tpu.memory_space<vmem>>, vector<2x3x1xf32>,
    %c0_10 = arith.constant 0 : index
    %c0_11 = arith.constant 0 : index
    %c0_12 = arith.constant 0 : index
    %6 = vector.load %arg21[%c0_10, %c0_11, %c0_12] : memref<2x22x1xf32, #tpu.memory_space<vmem>>, vector<2x16x1xf32>
    %7 = vector.shape_cast %6 : vector<2x16x1xf32> to vector<32x1xf32>
    %c0_13 = arith.constant 0 : index
    %c0_14 = arith.constant 0 : index
    %8 = vector.load %arg22[%c0_13, %c0_14] : memref<32x7xf32, #tpu.memory_space<vmem>>, vector<32x1xf32>
    tpu.vector_store %arg22[%c0_13, %c0_14], %7 {strides = array<i32>} : memref<32x7xf32, #tpu.memory_space<vmem>>, vector<32x1xf32>,
    %c0_15 = arith.constant 0 : index
    %c1 = arith.constant 1 : index
    %c0_16 = arith.constant 0 : index
    %9 = vector.load %arg21[%c0_15, %c1, %c0_16] : memref<2x22x1xf32, #tpu.memory_space<vmem>>, vector<2x16x1xf32>
    %10 = vector.shape_cast %9 : vector<2x16x1xf32> to vector<32x1xf32>
    %c0_17 = arith.constant 0 : index
    %c1_18 = arith.constant 1 : index
    %11 = vector.load %arg22[%c0_17, %c1_18] : memref<32x7xf32, #tpu.memory_space<vmem>>, vector<32x1xf32>
    tpu.vector_store %arg22[%c0_17, %c1_18], %10 {strides = array<i32>} : memref<32x7xf32, #tpu.memory_space<vmem>>, vector<32x1xf32>,
    %c0_19 = arith.constant 0 : index
    %c2 = arith.constant 2 : index
    %c0_20 = arith.constant 0 : index
    %12 = vector.load %arg21[%c0_19, %c2, %c0_20] : memref<2x22x1xf32, #tpu.memory_space<vmem>>, vector<2x16x1xf32>
    %13 = vector.shape_cast %12 : vector<2x16x1xf32> to vector<32x1xf32>
    %c0_21 = arith.constant 0 : index
    %c2_22 = arith.constant 2 : index
    %14 = vector.load %arg22[%c0_21, %c2_22] : memref<32x7xf32, #tpu.memory_space<vmem>>, vector<32x1xf32>
    tpu.vector_store %arg22[%c0_21, %c2_22], %13 {strides = array<i32>} : memref<32x7xf32, #tpu.memory_space<vmem>>, vector<32x1xf32>,
    %c0_23 = arith.constant 0 : index
    %c3_24 = arith.constant 3 : index
    %c0_25 = arith.constant 0 : index
    %15 = vector.load %arg21[%c0_23, %c3_24, %c0_25] : memref<2x22x1xf32, #tpu.memory_space<vmem>>, vector<2x16x1xf32>
    %16 = vector.shape_cast %15 : vector<2x16x1xf32> to vector<32x1xf32>
    %c0_26 = arith.constant 0 : index
    %c3_27 = arith.constant 3 : index
    %17 = vector.load %arg22[%c0_26, %c3_27] : memref<32x7xf32, #tpu.memory_space<vmem>>, vector<32x1xf32>
    tpu.vector_store %arg22[%c0_26, %c3_27], %16 {strides = array<i32>} : memref<32x7xf32, #tpu.memory_space<vmem>>, vector<32x1xf32>,
    %c0_28 = arith.constant 0 : index
    %c4 = arith.constant 4 : index
    %c0_29 = arith.constant 0 : index
    %18 = vector.load %arg21[%c0_28, %c4, %c0_29] : memref<2x22x1xf32, #tpu.memory_space<vmem>>, vector<2x16x1xf32>
    %19 = vector.shape_cast %18 : vector<2x16x1xf32> to vector<32x1xf32>
    %c0_30 = arith.constant 0 : index
    %c4_31 = arith.constant 4 : index
    %20 = vector.load %arg22[%c0_30, %c4_31] : memref<32x7xf32, #tpu.memory_space<vmem>>, vector<32x1xf32>
    tpu.vector_store %arg22[%c0_30, %c4_31], %19 {strides = array<i32>} : memref<32x7xf32, #tpu.memory_space<vmem>>, vector<32x1xf32>,
    %c0_32 = arith.constant 0 : index
    %c5 = arith.constant 5 : index
    %c0_33 = arith.constant 0 : index
    %21 = vector.load %arg21[%c0_32, %c5, %c0_33] : memref<2x22x1xf32, #tpu.memory_space<vmem>>, vector<2x16x1xf32>
    %22 = vector.shape_cast %21 : vector<2x16x1xf32> to vector<32x1xf32>
    %c0_34 = arith.constant 0 : index
    %c5_35 = arith.constant 5 : index
    %23 = vector.load %arg22[%c0_34, %c5_35] : memref<32x7xf32, #tpu.memory_space<vmem>>, vector<32x1xf32>
    tpu.vector_store %arg22[%c0_34, %c5_35], %22 {strides = array<i32>} : memref<32x7xf32, #tpu.memory_space<vmem>>, vector<32x1xf32>,
    %c0_36 = arith.constant 0 : index
    %c6 = arith.constant 6 : index
    %c0_37 = arith.constant 0 : index
    %24 = vector.load %arg21[%c0_36, %c6, %c0_37] : memref<2x22x1xf32, #tpu.memory_space<vmem>>, vector<2x16x1xf32>
    %25 = vector.shape_cast %24 : vector<2x16x1xf32> to vector<32x1xf32>
    %c0_38 = arith.constant 0 : index
    %c6_39 = arith.constant 6 : index
    %26 = vector.load %arg22[%c0_38, %c6_39] : memref<32x7xf32, #tpu.memory_space<vmem>>, vector<32x1xf32>
    tpu.vector_store %arg22[%c0_38, %c6_39], %25 {strides = array<i32>} : memref<32x7xf32, #tpu.memory_space<vmem>>, vector<32x1xf32>,
    %c0_40 = arith.constant 0 : index
    %c0_41 = arith.constant 0 : index
    %27 = vector.load %arg22[%c0_40, %c0_41] : memref<32x7xf32, #tpu.memory_space<vmem>>, vector<32x7xf32>
    %c0_42 = arith.constant 0 : index
    %c0_43 = arith.constant 0 : index
    %28 = vector.load %arg1[%c0_42, %c0_43] : memref<7x32xf32, #tpu.memory_space<vmem>>, vector<7x32xf32>
    %cst_44 = arith.constant dense<0.000000e+00> : vector<32x32xf32>
    %29 = tpu.matmul %27, %28, %cst_44 {dimension_numbers = #tpu.dot_dimension_numbers<[1], [0], [0], [1], [0, 0, 1, 1], [], []>} : vector<32x7xf32>, vector<7x32xf32>, vector<32x32xf32> -> vector<32x32xf32>
    %cst_45 = arith.constant dense<0.000000e+00> : vector<32xf32>
    %30 = vector.multi_reduction <add>, %29, %cst_45 [0] : vector<32x32xf32> to vector<32xf32>
    %31 = vector.shape_cast %30 : vector<32xf32> to vector<1x32xf32>
    %cst_46 = arith.constant 3.125000e-02 : f32
    %32 = vector.broadcast %cst_46 : f32 to vector<1x32xf32>
    %33 = arith.mulf %31, %32 : vector<1x32xf32>
    %34 = arith.mulf %29, %29 : vector<32x32xf32>
    %cst_47 = arith.constant dense<0.000000e+00> : vector<32xf32>
    %35 = vector.multi_reduction <add>, %34, %cst_47 [0] : vector<32x32xf32> to vector<32xf32>
    %36 = vector.shape_cast %35 : vector<32xf32> to vector<1x32xf32>
    %cst_48 = arith.constant 3.125000e-02 : f32
    %37 = vector.broadcast %cst_48 : f32 to vector<1x32xf32>
    %38 = arith.mulf %36, %37 : vector<1x32xf32>
    %39 = arith.mulf %33, %33 : vector<1x32xf32>
    %40 = arith.subf %38, %39 : vector<1x32xf32>
    %cst_49 = arith.constant 0.000000e+00 : f32
    %41 = vector.broadcast %cst_49 : f32 to vector<1x32xf32>
    %42 = arith.maximumf %40, %41 : vector<1x32xf32>
    %cst_50 = arith.constant 9.99999974E-6 : f32
    %43 = vector.broadcast %cst_50 : f32 to vector<1x32xf32>
    %44 = arith.addf %42, %43 : vector<1x32xf32>
    %45 = math.rsqrt %44 : vector<1x32xf32>
    %c0_51 = arith.constant 0 : index
    %c0_52 = arith.constant 0 : index
    %46 = vector.load %arg2[%c0_51, %c0_52] : memref<1x32xf32, #tpu.memory_space<vmem>>, vector<1x32xf32>
    %47 = arith.mulf %45, %46 : vector<1x32xf32>
    %c0_53 = arith.constant 0 : index
    %c0_54 = arith.constant 0 : index
    %48 = vector.load %arg3[%c0_53, %c0_54] : memref<1x32xf32, #tpu.memory_space<vmem>>, vector<1x32xf32>
    %49 = arith.mulf %33, %47 : vector<1x32xf32>
    %50 = arith.subf %48, %49 : vector<1x32xf32>
    %51 = vector.broadcast %47 : vector<1x32xf32> to vector<32x32xf32>
    %52 = arith.mulf %29, %51 : vector<32x32xf32>
    %53 = vector.broadcast %50 : vector<1x32xf32> to vector<32x32xf32>
    %54 = arith.addf %52, %53 : vector<32x32xf32>
    %cst_55 = arith.constant 0.000000e+00 : f32
    %55 = vector.broadcast %cst_55 : f32 to vector<32x32xf32>
    %56 = arith.maximumf %54, %55 : vector<32x32xf32>
    %57 = vector.shape_cast %56 : vector<32x32xf32> to vector<16x2x32xf32>
    %cst_56 = arith.constant dense<0xFF800000> : vector<16x32xf32>
    %58 = vector.multi_reduction <maximumf>, %57, %cst_56 [1] : vector<16x2x32xf32> to vector<16x32xf32>
    %59 = vector.shape_cast %58 : vector<16x32xf32> to vector<2x8x32xf32>
    %cst_57 = arith.constant 0.000000e+00 : f32
    %60 = vector.broadcast %cst_57 : f32 to vector<2x2x32xf32>
    %c0_58 = arith.constant 0 : index
    %c0_59 = arith.constant 0 : index
    %c0_60 = arith.constant 0 : index
    %61 = vector.load %arg23[%c0_58, %c0_59, %c0_60] : memref<2x12x32xf32, #tpu.memory_space<vmem>>, vector<2x2x32xf32>
    tpu.vector_store %arg23[%c0_58, %c0_59, %c0_60], %60 {strides = array<i32>} : memref<2x12x32xf32, #tpu.memory_space<vmem>>, vector<2x2x32xf32>,
    %c0_61 = arith.constant 0 : index
    %c2_62 = arith.constant 2 : index
    %c0_63 = arith.constant 0 : index
    %62 = vector.load %arg23[%c0_61, %c2_62, %c0_63] : memref<2x12x32xf32, #tpu.memory_space<vmem>>, vector<2x8x32xf32>
    tpu.vector_store %arg23[%c0_61, %c2_62, %c0_63], %59 {strides = array<i32>} : memref<2x12x32xf32, #tpu.memory_space<vmem>>, vector<2x8x32xf32>,
    %cst_64 = arith.constant 0.000000e+00 : f32
    %63 = vector.broadcast %cst_64 : f32 to vector<2x2x32xf32>
    %c0_65 = arith.constant 0 : index
    %c10 = arith.constant 10 : index
    %c0_66 = arith.constant 0 : index
    %64 = vector.load %arg23[%c0_65, %c10, %c0_66] : memref<2x12x32xf32, #tpu.memory_space<vmem>>, vector<2x2x32xf32>
    tpu.vector_store %arg23[%c0_65, %c10, %c0_66], %63 {strides = array<i32>} : memref<2x12x32xf32, #tpu.memory_space<vmem>>, vector<2x2x32xf32>,
    %c0_67 = arith.constant 0 : index
    %c0_68 = arith.constant 0 : index
    %c0_69 = arith.constant 0 : index
    %65 = vector.load %arg23[%c0_67, %c0_68, %c0_69] : memref<2x12x32xf32, #tpu.memory_space<vmem>>, vector<2x8x32xf32>
    %66 = vector.shape_cast %65 : vector<2x8x32xf32> to vector<16x32xf32>
    %c0_70 = arith.constant 0 : index
    %c0_71 = arith.constant 0 : index
    %67 = vector.load %arg24[%c0_70, %c0_71] : memref<16x160xf32, #tpu.memory_space<vmem>>, vector<16x32xf32>
    tpu.vector_store %arg24[%c0_70, %c0_71], %66 {strides = array<i32>} : memref<16x160xf32, #tpu.memory_space<vmem>>, vector<16x32xf32>,
    %c0_72 = arith.constant 0 : index
    %c1_73 = arith.constant 1 : index
    %c0_74 = arith.constant 0 : index
    %68 = vector.load %arg23[%c0_72, %c1_73, %c0_74] : memref<2x12x32xf32, #tpu.memory_space<vmem>>, vector<2x8x32xf32>
    %69 = vector.shape_cast %68 : vector<2x8x32xf32> to vector<16x32xf32>
    %c0_75 = arith.constant 0 : index
    %c32 = arith.constant 32 : index
    %70 = vector.load %arg24[%c0_75, %c32] : memref<16x160xf32, #tpu.memory_space<vmem>>, vector<16x32xf32>
    tpu.vector_store %arg24[%c0_75, %c32], %69 {strides = array<i32>} : memref<16x160xf32, #tpu.memory_space<vmem>>, vector<16x32xf32>,
    %c0_76 = arith.constant 0 : index
    %c2_77 = arith.constant 2 : index
    %c0_78 = arith.constant 0 : index
    %71 = vector.load %arg23[%c0_76, %c2_77, %c0_78] : memref<2x12x32xf32, #tpu.memory_space<vmem>>, vector<2x8x32xf32>
    %72 = vector.shape_cast %71 : vector<2x8x32xf32> to vector<16x32xf32>
    %c0_79 = arith.constant 0 : index
    %c64 = arith.constant 64 : index
    %73 = vector.load %arg24[%c0_79, %c64] : memref<16x160xf32, #tpu.memory_space<vmem>>, vector<16x32xf32>
    tpu.vector_store %arg24[%c0_79, %c64], %72 {strides = array<i32>} : memref<16x160xf32, #tpu.memory_space<vmem>>, vector<16x32xf32>,
    %c0_80 = arith.constant 0 : index
    %c3_81 = arith.constant 3 : index
    %c0_82 = arith.constant 0 : index
    %74 = vector.load %arg23[%c0_80, %c3_81, %c0_82] : memref<2x12x32xf32, #tpu.memory_space<vmem>>, vector<2x8x32xf32>
    %75 = vector.shape_cast %74 : vector<2x8x32xf32> to vector<16x32xf32>
    %c0_83 = arith.constant 0 : index
    %c96 = arith.constant 96 : index
    %76 = vector.load %arg24[%c0_83, %c96] : memref<16x160xf32, #tpu.memory_space<vmem>>, vector<16x32xf32>
    tpu.vector_store %arg24[%c0_83, %c96], %75 {strides = array<i32>} : memref<16x160xf32, #tpu.memory_space<vmem>>, vector<16x32xf32>,
    %c0_84 = arith.constant 0 : index
    %c4_85 = arith.constant 4 : index
    %c0_86 = arith.constant 0 : index
    %77 = vector.load %arg23[%c0_84, %c4_85, %c0_86] : memref<2x12x32xf32, #tpu.memory_space<vmem>>, vector<2x8x32xf32>
    %78 = vector.shape_cast %77 : vector<2x8x32xf32> to vector<16x32xf32>
    %c0_87 = arith.constant 0 : index
    %c128 = arith.constant 128 : index
    %79 = vector.load %arg24[%c0_87, %c128] : memref<16x160xf32, #tpu.memory_space<vmem>>, vector<16x32xf32>
    tpu.vector_store %arg24[%c0_87, %c128], %78 {strides = array<i32>} : memref<16x160xf32, #tpu.memory_space<vmem>>, vector<16x32xf32>,
    %c0_88 = arith.constant 0 : index
    %c0_89 = arith.constant 0 : index
    %80 = vector.load %arg24[%c0_88, %c0_89] : memref<16x160xf32, #tpu.memory_space<vmem>>, vector<16x160xf32>
    %c0_90 = arith.constant 0 : index
    %c0_91 = arith.constant 0 : index
    %81 = vector.load %arg4[%c0_90, %c0_91] : memref<160x64xf32, #tpu.memory_space<vmem>>, vector<160x64xf32>
    %cst_92 = arith.constant dense<0.000000e+00> : vector<16x64xf32>
    %82 = tpu.matmul %80, %81, %cst_92 {dimension_numbers = #tpu.dot_dimension_numbers<[1], [0], [0], [1], [0, 0, 1, 1], [], []>} : vector<16x160xf32>, vector<160x64xf32>, vector<16x64xf32> -> vector<16x64xf32>
    %cst_93 = arith.constant dense<0.000000e+00> : vector<64xf32>
    %83 = vector.multi_reduction <add>, %82, %cst_93 [0] : vector<16x64xf32> to vector<64xf32>
    %84 = vector.shape_cast %83 : vector<64xf32> to vector<1x64xf32>
    %cst_94 = arith.constant 6.250000e-02 : f32
    %85 = vector.broadcast %cst_94 : f32 to vector<1x64xf32>
    %86 = arith.mulf %84, %85 : vector<1x64xf32>
    %87 = arith.mulf %82, %82 : vector<16x64xf32>
    %cst_95 = arith.constant dense<0.000000e+00> : vector<64xf32>
    %88 = vector.multi_reduction <add>, %87, %cst_95 [0] : vector<16x64xf32> to vector<64xf32>
    %89 = vector.shape_cast %88 : vector<64xf32> to vector<1x64xf32>
    %cst_96 = arith.constant 6.250000e-02 : f32
    %90 = vector.broadcast %cst_96 : f32 to vector<1x64xf32>
    %91 = arith.mulf %89, %90 : vector<1x64xf32>
    %92 = arith.mulf %86, %86 : vector<1x64xf32>
    %93 = arith.subf %91, %92 : vector<1x64xf32>
    %cst_97 = arith.constant 0.000000e+00 : f32
    %94 = vector.broadcast %cst_97 : f32 to vector<1x64xf32>
    %95 = arith.maximumf %93, %94 : vector<1x64xf32>
    %cst_98 = arith.constant 9.99999974E-6 : f32
    %96 = vector.broadcast %cst_98 : f32 to vector<1x64xf32>
    %97 = arith.addf %95, %96 : vector<1x64xf32>
    %98 = math.rsqrt %97 : vector<1x64xf32>
    %c0_99 = arith.constant 0 : index
    %c0_100 = arith.constant 0 : index
    %99 = vector.load %arg5[%c0_99, %c0_100] : memref<1x64xf32, #tpu.memory_space<vmem>>, vector<1x64xf32>
    %100 = arith.mulf %98, %99 : vector<1x64xf32>
    %c0_101 = arith.constant 0 : index
    %c0_102 = arith.constant 0 : index
    %101 = vector.load %arg6[%c0_101, %c0_102] : memref<1x64xf32, #tpu.memory_space<vmem>>, vector<1x64xf32>
    %102 = arith.mulf %86, %100 : vector<1x64xf32>
    %103 = arith.subf %101, %102 : vector<1x64xf32>
    %104 = vector.broadcast %100 : vector<1x64xf32> to vector<16x64xf32>
    %105 = arith.mulf %82, %104 : vector<16x64xf32>
    %106 = vector.broadcast %103 : vector<1x64xf32> to vector<16x64xf32>
    %107 = arith.addf %105, %106 : vector<16x64xf32>
    %cst_103 = arith.constant 0.000000e+00 : f32
    %108 = vector.broadcast %cst_103 : f32 to vector<16x64xf32>
    %109 = arith.maximumf %107, %108 : vector<16x64xf32>
    %110 = vector.shape_cast %109 : vector<16x64xf32> to vector<8x2x64xf32>
    %cst_104 = arith.constant dense<0xFF800000> : vector<8x64xf32>
    %111 = vector.multi_reduction <maximumf>, %110, %cst_104 [1] : vector<8x2x64xf32> to vector<8x64xf32>
    %112 = vector.shape_cast %111 : vector<8x64xf32> to vector<2x4x64xf32>
    %cst_105 = arith.constant 0.000000e+00 : f32
    %113 = vector.broadcast %cst_105 : f32 to vector<2x2x64xf32>
    %c0_106 = arith.constant 0 : index
    %c0_107 = arith.constant 0 : index
    %c0_108 = arith.constant 0 : index
    %114 = vector.load %arg25[%c0_106, %c0_107, %c0_108] : memref<2x8x64xf32, #tpu.memory_space<vmem>>, vector<2x2x64xf32>
    tpu.vector_store %arg25[%c0_106, %c0_107, %c0_108], %113 {strides = array<i32>} : memref<2x8x64xf32, #tpu.memory_space<vmem>>, vector<2x2x64xf32>,
    %c0_109 = arith.constant 0 : index
    %c2_110 = arith.constant 2 : index
    %c0_111 = arith.constant 0 : index
    %115 = vector.load %arg25[%c0_109, %c2_110, %c0_111] : memref<2x8x64xf32, #tpu.memory_space<vmem>>, vector<2x4x64xf32>
    tpu.vector_store %arg25[%c0_109, %c2_110, %c0_111], %112 {strides = array<i32>} : memref<2x8x64xf32, #tpu.memory_space<vmem>>, vector<2x4x64xf32>,
    %cst_112 = arith.constant 0.000000e+00 : f32
    %116 = vector.broadcast %cst_112 : f32 to vector<2x2x64xf32>
    %c0_113 = arith.constant 0 : index
    %c6_114 = arith.constant 6 : index
    %c0_115 = arith.constant 0 : index
    %117 = vector.load %arg25[%c0_113, %c6_114, %c0_115] : memref<2x8x64xf32, #tpu.memory_space<vmem>>, vector<2x2x64xf32>
    tpu.vector_store %arg25[%c0_113, %c6_114, %c0_115], %116 {strides = array<i32>} : memref<2x8x64xf32, #tpu.memory_space<vmem>>, vector<2x2x64xf32>,
    %c0_116 = arith.constant 0 : index
    %c0_117 = arith.constant 0 : index
    %c0_118 = arith.constant 0 : index
    %118 = vector.load %arg25[%c0_116, %c0_117, %c0_118] : memref<2x8x64xf32, #tpu.memory_space<vmem>>, vector<2x4x64xf32>
    %119 = vector.shape_cast %118 : vector<2x4x64xf32> to vector<8x64xf32>
    %c0_119 = arith.constant 0 : index
    %c0_120 = arith.constant 0 : index
    %120 = vector.load %arg26[%c0_119, %c0_120] : memref<8x320xf32, #tpu.memory_space<vmem>>, vector<8x64xf32>
    tpu.vector_store %arg26[%c0_119, %c0_120], %119 {strides = array<i32>} : memref<8x320xf32, #tpu.memory_space<vmem>>, vector<8x64xf32>,
    %c0_121 = arith.constant 0 : index
    %c1_122 = arith.constant 1 : index
    %c0_123 = arith.constant 0 : index
    %121 = vector.load %arg25[%c0_121, %c1_122, %c0_123] : memref<2x8x64xf32, #tpu.memory_space<vmem>>, vector<2x4x64xf32>
    %122 = vector.shape_cast %121 : vector<2x4x64xf32> to vector<8x64xf32>
    %c0_124 = arith.constant 0 : index
    %c64_125 = arith.constant 64 : index
    %123 = vector.load %arg26[%c0_124, %c64_125] : memref<8x320xf32, #tpu.memory_space<vmem>>, vector<8x64xf32>
    tpu.vector_store %arg26[%c0_124, %c64_125], %122 {strides = array<i32>} : memref<8x320xf32, #tpu.memory_space<vmem>>, vector<8x64xf32>,
    %c0_126 = arith.constant 0 : index
    %c2_127 = arith.constant 2 : index
    %c0_128 = arith.constant 0 : index
    %124 = vector.load %arg25[%c0_126, %c2_127, %c0_128] : memref<2x8x64xf32, #tpu.memory_space<vmem>>, vector<2x4x64xf32>
    %125 = vector.shape_cast %124 : vector<2x4x64xf32> to vector<8x64xf32>
    %c0_129 = arith.constant 0 : index
    %c128_130 = arith.constant 128 : index
    %126 = vector.load %arg26[%c0_129, %c128_130] : memref<8x320xf32, #tpu.memory_space<vmem>>, vector<8x64xf32>
    tpu.vector_store %arg26[%c0_129, %c128_130], %125 {strides = array<i32>} : memref<8x320xf32, #tpu.memory_space<vmem>>, vector<8x64xf32>,
    %c0_131 = arith.constant 0 : index
    %c3_132 = arith.constant 3 : index
    %c0_133 = arith.constant 0 : index
    %127 = vector.load %arg25[%c0_131, %c3_132, %c0_133] : memref<2x8x64xf32, #tpu.memory_space<vmem>>, vector<2x4x64xf32>
    %128 = vector.shape_cast %127 : vector<2x4x64xf32> to vector<8x64xf32>
    %c0_134 = arith.constant 0 : index
    %c192 = arith.constant 192 : index
    %129 = vector.load %arg26[%c0_134, %c192] : memref<8x320xf32, #tpu.memory_space<vmem>>, vector<8x64xf32>
    tpu.vector_store %arg26[%c0_134, %c192], %128 {strides = array<i32>} : memref<8x320xf32, #tpu.memory_space<vmem>>, vector<8x64xf32>,
    %c0_135 = arith.constant 0 : index
    %c4_136 = arith.constant 4 : index
    %c0_137 = arith.constant 0 : index
    %130 = vector.load %arg25[%c0_135, %c4_136, %c0_137] : memref<2x8x64xf32, #tpu.memory_space<vmem>>, vector<2x4x64xf32>
    %131 = vector.shape_cast %130 : vector<2x4x64xf32> to vector<8x64xf32>
    %c0_138 = arith.constant 0 : index
    %c256 = arith.constant 256 : index
    %132 = vector.load %arg26[%c0_138, %c256] : memref<8x320xf32, #tpu.memory_space<vmem>>, vector<8x64xf32>
    tpu.vector_store %arg26[%c0_138, %c256], %131 {strides = array<i32>} : memref<8x320xf32, #tpu.memory_space<vmem>>, vector<8x64xf32>,
    %c0_139 = arith.constant 0 : index
    %c0_140 = arith.constant 0 : index
    %133 = vector.load %arg26[%c0_139, %c0_140] : memref<8x320xf32, #tpu.memory_space<vmem>>, vector<8x320xf32>
    %c0_141 = arith.constant 0 : index
    %c0_142 = arith.constant 0 : index
    %134 = vector.load %arg7[%c0_141, %c0_142] : memref<320x128xf32, #tpu.memory_space<vmem>>, vector<320x128xf32>
    %cst_143 = arith.constant dense<0.000000e+00> : vector<8x128xf32>
    %135 = tpu.matmul %133, %134, %cst_143 {dimension_numbers = #tpu.dot_dimension_numbers<[1], [0], [0], [1], [0, 0, 1, 1], [], []>} : vector<8x320xf32>, vector<320x128xf32>, vector<8x128xf32> -> vector<8x128xf32>
    %cst_144 = arith.constant dense<0.000000e+00> : vector<128xf32>
    %136 = vector.multi_reduction <add>, %135, %cst_144 [0] : vector<8x128xf32> to vector<128xf32>
    %137 = vector.shape_cast %136 : vector<128xf32> to vector<1x128xf32>
    %cst_145 = arith.constant 1.250000e-01 : f32
    %138 = vector.broadcast %cst_145 : f32 to vector<1x128xf32>
    %139 = arith.mulf %137, %138 : vector<1x128xf32>
    %140 = arith.mulf %135, %135 : vector<8x128xf32>
    %cst_146 = arith.constant dense<0.000000e+00> : vector<128xf32>
    %141 = vector.multi_reduction <add>, %140, %cst_146 [0] : vector<8x128xf32> to vector<128xf32>
    %142 = vector.shape_cast %141 : vector<128xf32> to vector<1x128xf32>
    %cst_147 = arith.constant 1.250000e-01 : f32
    %143 = vector.broadcast %cst_147 : f32 to vector<1x128xf32>
    %144 = arith.mulf %142, %143 : vector<1x128xf32>
    %145 = arith.mulf %139, %139 : vector<1x128xf32>
    %146 = arith.subf %144, %145 : vector<1x128xf32>
    %cst_148 = arith.constant 0.000000e+00 : f32
    %147 = vector.broadcast %cst_148 : f32 to vector<1x128xf32>
    %148 = arith.maximumf %146, %147 : vector<1x128xf32>
    %cst_149 = arith.constant 9.99999974E-6 : f32
    %149 = vector.broadcast %cst_149 : f32 to vector<1x128xf32>
    %150 = arith.addf %148, %149 : vector<1x128xf32>
    %151 = math.rsqrt %150 : vector<1x128xf32>
    %c0_150 = arith.constant 0 : index
    %c0_151 = arith.constant 0 : index
    %152 = vector.load %arg8[%c0_150, %c0_151] : memref<1x128xf32, #tpu.memory_space<vmem>>, vector<1x128xf32>
    %153 = arith.mulf %151, %152 : vector<1x128xf32>
    %c0_152 = arith.constant 0 : index
    %c0_153 = arith.constant 0 : index
    %154 = vector.load %arg9[%c0_152, %c0_153] : memref<1x128xf32, #tpu.memory_space<vmem>>, vector<1x128xf32>
    %155 = arith.mulf %139, %153 : vector<1x128xf32>
    %156 = arith.subf %154, %155 : vector<1x128xf32>
    %157 = vector.broadcast %153 : vector<1x128xf32> to vector<8x128xf32>
    %158 = arith.mulf %135, %157 : vector<8x128xf32>
    %159 = vector.broadcast %156 : vector<1x128xf32> to vector<8x128xf32>
    %160 = arith.addf %158, %159 : vector<8x128xf32>
    %cst_154 = arith.constant 0.000000e+00 : f32
    %161 = vector.broadcast %cst_154 : f32 to vector<8x128xf32>
    %162 = arith.maximumf %160, %161 : vector<8x128xf32>
    %163 = vector.shape_cast %162 : vector<8x128xf32> to vector<2x4x128xf32>
    %cst_155 = arith.constant 0.000000e+00 : f32
    %164 = vector.broadcast %cst_155 : f32 to vector<2x1x128xf32>
    %c0_156 = arith.constant 0 : index
    %c0_157 = arith.constant 0 : index
    %c0_158 = arith.constant 0 : index
    %165 = vector.load %arg27[%c0_156, %c0_157, %c0_158] : memref<2x6x128xf32, #tpu.memory_space<vmem>>, vector<2x1x128xf32>
    tpu.vector_store %arg27[%c0_156, %c0_157, %c0_158], %164 {strides = array<i32>} : memref<2x6x128xf32, #tpu.memory_space<vmem>>, vector<2x1x128xf32>,
    %c0_159 = arith.constant 0 : index
    %c1_160 = arith.constant 1 : index
    %c0_161 = arith.constant 0 : index
    %166 = vector.load %arg27[%c0_159, %c1_160, %c0_161] : memref<2x6x128xf32, #tpu.memory_space<vmem>>, vector<2x4x128xf32>
    tpu.vector_store %arg27[%c0_159, %c1_160, %c0_161], %163 {strides = array<i32>} : memref<2x6x128xf32, #tpu.memory_space<vmem>>, vector<2x4x128xf32>,
    %cst_162 = arith.constant 0.000000e+00 : f32
    %167 = vector.broadcast %cst_162 : f32 to vector<2x1x128xf32>
    %c0_163 = arith.constant 0 : index
    %c5_164 = arith.constant 5 : index
    %c0_165 = arith.constant 0 : index
    %168 = vector.load %arg27[%c0_163, %c5_164, %c0_165] : memref<2x6x128xf32, #tpu.memory_space<vmem>>, vector<2x1x128xf32>
    tpu.vector_store %arg27[%c0_163, %c5_164, %c0_165], %167 {strides = array<i32>} : memref<2x6x128xf32, #tpu.memory_space<vmem>>, vector<2x1x128xf32>,
    %c0_166 = arith.constant 0 : index
    %c0_167 = arith.constant 0 : index
    %c0_168 = arith.constant 0 : index
    %169 = vector.load %arg27[%c0_166, %c0_167, %c0_168] : memref<2x6x128xf32, #tpu.memory_space<vmem>>, vector<2x4x128xf32>
    %170 = vector.shape_cast %169 : vector<2x4x128xf32> to vector<8x128xf32>
    %c0_169 = arith.constant 0 : index
    %c1_170 = arith.constant 1 : index
    %c0_171 = arith.constant 0 : index
    %171 = vector.load %arg27[%c0_169, %c1_170, %c0_171] : memref<2x6x128xf32, #tpu.memory_space<vmem>>, vector<2x4x128xf32>
    %172 = vector.shape_cast %171 : vector<2x4x128xf32> to vector<8x128xf32>
    %c0_172 = arith.constant 0 : index
    %c2_173 = arith.constant 2 : index
    %c0_174 = arith.constant 0 : index
    %173 = vector.load %arg27[%c0_172, %c2_173, %c0_174] : memref<2x6x128xf32, #tpu.memory_space<vmem>>, vector<2x4x128xf32>
    %174 = vector.shape_cast %173 : vector<2x4x128xf32> to vector<8x128xf32>
    %c0_175 = arith.constant 0 : index
    %c0_176 = arith.constant 0 : index
    %c0_177 = arith.constant 0 : index
    %175 = vector.load %arg10[%c0_175, %c0_176, %c0_177] : memref<3x128x64xf32, #tpu.memory_space<vmem>>, vector<1x128x64xf32>
    %176 = vector.shape_cast %175 : vector<1x128x64xf32> to vector<128x64xf32>
    %cst_178 = arith.constant dense<0.000000e+00> : vector<8x64xf32>
    %177 = tpu.matmul %170, %176, %cst_178 {dimension_numbers = #tpu.dot_dimension_numbers<[1], [0], [0], [1], [0, 0, 1, 1], [], []>} : vector<8x128xf32>, vector<128x64xf32>, vector<8x64xf32> -> vector<8x64xf32>
    %c1_179 = arith.constant 1 : index
    %c0_180 = arith.constant 0 : index
    %c0_181 = arith.constant 0 : index
    %178 = vector.load %arg10[%c1_179, %c0_180, %c0_181] : memref<3x128x64xf32, #tpu.memory_space<vmem>>, vector<1x128x64xf32>
    %179 = vector.shape_cast %178 : vector<1x128x64xf32> to vector<128x64xf32>
    %cst_182 = arith.constant dense<0.000000e+00> : vector<8x64xf32>
    %180 = tpu.matmul %172, %179, %cst_182 {dimension_numbers = #tpu.dot_dimension_numbers<[1], [0], [0], [1], [0, 0, 1, 1], [], []>} : vector<8x128xf32>, vector<128x64xf32>, vector<8x64xf32> -> vector<8x64xf32>
    %181 = arith.addf %177, %180 : vector<8x64xf32>
    %c2_183 = arith.constant 2 : index
    %c0_184 = arith.constant 0 : index
    %c0_185 = arith.constant 0 : index
    %182 = vector.load %arg10[%c2_183, %c0_184, %c0_185] : memref<3x128x64xf32, #tpu.memory_space<vmem>>, vector<1x128x64xf32>
    %183 = vector.shape_cast %182 : vector<1x128x64xf32> to vector<128x64xf32>
    %cst_186 = arith.constant dense<0.000000e+00> : vector<8x64xf32>
    %184 = tpu.matmul %174, %183, %cst_186 {dimension_numbers = #tpu.dot_dimension_numbers<[1], [0], [0], [1], [0, 0, 1, 1], [], []>} : vector<8x128xf32>, vector<128x64xf32>, vector<8x64xf32> -> vector<8x64xf32>
    %185 = arith.addf %181, %184 : vector<8x64xf32>
    %c0_187 = arith.constant 0 : index
    %c0_188 = arith.constant 0 : index
    %c0_189 = arith.constant 0 : index
    %186 = vector.load %arg11[%c0_187, %c0_188, %c0_189] : memref<2x128x64xf32, #tpu.memory_space<vmem>>, vector<1x128x64xf32>
    %187 = vector.shape_cast %186 : vector<1x128x64xf32> to vector<128x64xf32>
    %cst_190 = arith.constant dense<0.000000e+00> : vector<8x64xf32>
    %188 = tpu.matmul %172, %187, %cst_190 {dimension_numbers = #tpu.dot_dimension_numbers<[1], [0], [0], [1], [0, 0, 1, 1], [], []>} : vector<8x128xf32>, vector<128x64xf32>, vector<8x64xf32> -> vector<8x64xf32>
    %c1_191 = arith.constant 1 : index
    %c0_192 = arith.constant 0 : index
    %c0_193 = arith.constant 0 : index
    %189 = vector.load %arg11[%c1_191, %c0_192, %c0_193] : memref<2x128x64xf32, #tpu.memory_space<vmem>>, vector<1x128x64xf32>
    %190 = vector.shape_cast %189 : vector<1x128x64xf32> to vector<128x64xf32>
    %cst_194 = arith.constant dense<0.000000e+00> : vector<8x64xf32>
    %191 = tpu.matmul %174, %190, %cst_194 {dimension_numbers = #tpu.dot_dimension_numbers<[1], [0], [0], [1], [0, 0, 1, 1], [], []>} : vector<8x128xf32>, vector<128x64xf32>, vector<8x64xf32> -> vector<8x64xf32>
    %192 = arith.addf %188, %191 : vector<8x64xf32>
    %cst_195 = arith.constant dense<0.000000e+00> : vector<64xf32>
    %193 = vector.multi_reduction <add>, %185, %cst_195 [0] : vector<8x64xf32> to vector<64xf32>
    %194 = vector.shape_cast %193 : vector<64xf32> to vector<1x64xf32>
    %cst_196 = arith.constant dense<0.000000e+00> : vector<64xf32>
    %195 = vector.multi_reduction <add>, %192, %cst_196 [0] : vector<8x64xf32> to vector<64xf32>
    %196 = vector.shape_cast %195 : vector<64xf32> to vector<1x64xf32>
    %197 = arith.addf %194, %196 : vector<1x64xf32>
    %cst_197 = arith.constant 6.250000e-02 : f32
    %198 = vector.broadcast %cst_197 : f32 to vector<1x64xf32>
    %199 = arith.mulf %197, %198 : vector<1x64xf32>
    %200 = arith.mulf %185, %185 : vector<8x64xf32>
    %cst_198 = arith.constant dense<0.000000e+00> : vector<64xf32>
    %201 = vector.multi_reduction <add>, %200, %cst_198 [0] : vector<8x64xf32> to vector<64xf32>
    %202 = vector.shape_cast %201 : vector<64xf32> to vector<1x64xf32>
    %203 = arith.mulf %192, %192 : vector<8x64xf32>
    %cst_199 = arith.constant dense<0.000000e+00> : vector<64xf32>
    %204 = vector.multi_reduction <add>, %203, %cst_199 [0] : vector<8x64xf32> to vector<64xf32>
    %205 = vector.shape_cast %204 : vector<64xf32> to vector<1x64xf32>
    %206 = arith.addf %202, %205 : vector<1x64xf32>
    %cst_200 = arith.constant 6.250000e-02 : f32
    %207 = vector.broadcast %cst_200 : f32 to vector<1x64xf32>
    %208 = arith.mulf %206, %207 : vector<1x64xf32>
    %209 = arith.mulf %199, %199 : vector<1x64xf32>
    %210 = arith.subf %208, %209 : vector<1x64xf32>
    %cst_201 = arith.constant 0.000000e+00 : f32
    %211 = vector.broadcast %cst_201 : f32 to vector<1x64xf32>
    %212 = arith.maximumf %210, %211 : vector<1x64xf32>
    %cst_202 = arith.constant 9.99999974E-6 : f32
    %213 = vector.broadcast %cst_202 : f32 to vector<1x64xf32>
    %214 = arith.addf %212, %213 : vector<1x64xf32>
    %215 = math.rsqrt %214 : vector<1x64xf32>
    %c0_203 = arith.constant 0 : index
    %c0_204 = arith.constant 0 : index
    %216 = vector.load %arg12[%c0_203, %c0_204] : memref<1x64xf32, #tpu.memory_space<vmem>>, vector<1x64xf32>
    %217 = arith.mulf %215, %216 : vector<1x64xf32>
    %c0_205 = arith.constant 0 : index
    %c0_206 = arith.constant 0 : index
    %218 = vector.load %arg13[%c0_205, %c0_206] : memref<1x64xf32, #tpu.memory_space<vmem>>, vector<1x64xf32>
    %219 = arith.mulf %199, %217 : vector<1x64xf32>
    %220 = arith.subf %218, %219 : vector<1x64xf32>
    %221 = vector.broadcast %217 : vector<1x64xf32> to vector<8x64xf32>
    %222 = arith.mulf %185, %221 : vector<8x64xf32>
    %223 = vector.broadcast %220 : vector<1x64xf32> to vector<8x64xf32>
    %224 = arith.addf %222, %223 : vector<8x64xf32>
    %cst_207 = arith.constant 0.000000e+00 : f32
    %225 = vector.broadcast %cst_207 : f32 to vector<8x64xf32>
    %226 = arith.maximumf %224, %225 : vector<8x64xf32>
    %227 = vector.broadcast %217 : vector<1x64xf32> to vector<8x64xf32>
    %228 = arith.mulf %192, %227 : vector<8x64xf32>
    %229 = vector.broadcast %220 : vector<1x64xf32> to vector<8x64xf32>
    %230 = arith.addf %228, %229 : vector<8x64xf32>
    %cst_208 = arith.constant 0.000000e+00 : f32
    %231 = vector.broadcast %cst_208 : f32 to vector<8x64xf32>
    %232 = arith.maximumf %230, %231 : vector<8x64xf32>
    %233 = tpu.iota {dimensions = array<i32: 1>} : vector<8x2x64xi32>
    %c0_i32 = arith.constant 0 : i32
    %234 = vector.broadcast %c0_i32 : i32 to vector<8x2x64xi32>
    %235 = arith.cmpi eq, %233, %234 : vector<8x2x64xi32>
    %236 = vector.shape_cast %226 : vector<8x64xf32> to vector<8x1x64xf32>
    %237 = vector.shape_cast %232 : vector<8x64xf32> to vector<8x1x64xf32>
    %238 = vector.shape_cast %236 : vector<8x1x64xf32> to vector<8x1x64xf32>
    %239 = vector.broadcast %238 : vector<8x1x64xf32> to vector<8x2x64xf32>
    %240 = vector.shape_cast %237 : vector<8x1x64xf32> to vector<8x1x64xf32>
    %241 = vector.broadcast %240 : vector<8x1x64xf32> to vector<8x2x64xf32>
    %242 = arith.select %235, %239, %241 : vector<8x2x64xi1>, vector<8x2x64xf32>
    %243 = vector.shape_cast %242 : vector<8x2x64xf32> to vector<16x64xf32>
    %244 = vector.shape_cast %243 : vector<16x64xf32> to vector<2x8x64xf32>
    %cst_209 = arith.constant 0.000000e+00 : f32
    %245 = vector.broadcast %cst_209 : f32 to vector<2x1x64xf32>
    %c0_210 = arith.constant 0 : index
    %c0_211 = arith.constant 0 : index
    %c0_212 = arith.constant 0 : index
    %246 = vector.load %arg28[%c0_210, %c0_211, %c0_212] : memref<2x10x64xf32, #tpu.memory_space<vmem>>, vector<2x1x64xf32>
    tpu.vector_store %arg28[%c0_210, %c0_211, %c0_212], %245 {strides = array<i32>} : memref<2x10x64xf32, #tpu.memory_space<vmem>>, vector<2x1x64xf32>,
    %c0_213 = arith.constant 0 : index
    %c1_214 = arith.constant 1 : index
    %c0_215 = arith.constant 0 : index
    %247 = vector.load %arg28[%c0_213, %c1_214, %c0_215] : memref<2x10x64xf32, #tpu.memory_space<vmem>>, vector<2x8x64xf32>
    tpu.vector_store %arg28[%c0_213, %c1_214, %c0_215], %244 {strides = array<i32>} : memref<2x10x64xf32, #tpu.memory_space<vmem>>, vector<2x8x64xf32>,
    %cst_216 = arith.constant 0.000000e+00 : f32
    %248 = vector.broadcast %cst_216 : f32 to vector<2x1x64xf32>
    %c0_217 = arith.constant 0 : index
    %c9 = arith.constant 9 : index
    %c0_218 = arith.constant 0 : index
    %249 = vector.load %arg28[%c0_217, %c9, %c0_218] : memref<2x10x64xf32, #tpu.memory_space<vmem>>, vector<2x1x64xf32>
    tpu.vector_store %arg28[%c0_217, %c9, %c0_218], %248 {strides = array<i32>} : memref<2x10x64xf32, #tpu.memory_space<vmem>>, vector<2x1x64xf32>,
    %c0_219 = arith.constant 0 : index
    %c0_220 = arith.constant 0 : index
    %c0_221 = arith.constant 0 : index
    %250 = vector.load %arg28[%c0_219, %c0_220, %c0_221] : memref<2x10x64xf32, #tpu.memory_space<vmem>>, vector<2x8x64xf32>
    %251 = vector.shape_cast %250 : vector<2x8x64xf32> to vector<16x64xf32>
    %c0_222 = arith.constant 0 : index
    %c1_223 = arith.constant 1 : index
    %c0_224 = arith.constant 0 : index
    %252 = vector.load %arg28[%c0_222, %c1_223, %c0_224] : memref<2x10x64xf32, #tpu.memory_space<vmem>>, vector<2x8x64xf32>
    %253 = vector.shape_cast %252 : vector<2x8x64xf32> to vector<16x64xf32>
    %c0_225 = arith.constant 0 : index
    %c2_226 = arith.constant 2 : index
    %c0_227 = arith.constant 0 : index
    %254 = vector.load %arg28[%c0_225, %c2_226, %c0_227] : memref<2x10x64xf32, #tpu.memory_space<vmem>>, vector<2x8x64xf32>
    %255 = vector.shape_cast %254 : vector<2x8x64xf32> to vector<16x64xf32>
    %c0_228 = arith.constant 0 : index
    %c0_229 = arith.constant 0 : index
    %c0_230 = arith.constant 0 : index
    %256 = vector.load %arg14[%c0_228, %c0_229, %c0_230] : memref<3x64x32xf32, #tpu.memory_space<vmem>>, vector<1x64x32xf32>
    %257 = vector.shape_cast %256 : vector<1x64x32xf32> to vector<64x32xf32>
    %cst_231 = arith.constant dense<0.000000e+00> : vector<16x32xf32>
    %258 = tpu.matmul %251, %257, %cst_231 {dimension_numbers = #tpu.dot_dimension_numbers<[1], [0], [0], [1], [0, 0, 1, 1], [], []>} : vector<16x64xf32>, vector<64x32xf32>, vector<16x32xf32> -> vector<16x32xf32>
    %c1_232 = arith.constant 1 : index
    %c0_233 = arith.constant 0 : index
    %c0_234 = arith.constant 0 : index
    %259 = vector.load %arg14[%c1_232, %c0_233, %c0_234] : memref<3x64x32xf32, #tpu.memory_space<vmem>>, vector<1x64x32xf32>
    %260 = vector.shape_cast %259 : vector<1x64x32xf32> to vector<64x32xf32>
    %cst_235 = arith.constant dense<0.000000e+00> : vector<16x32xf32>
    %261 = tpu.matmul %253, %260, %cst_235 {dimension_numbers = #tpu.dot_dimension_numbers<[1], [0], [0], [1], [0, 0, 1, 1], [], []>} : vector<16x64xf32>, vector<64x32xf32>, vector<16x32xf32> -> vector<16x32xf32>
    %262 = arith.addf %258, %261 : vector<16x32xf32>
    %c2_236 = arith.constant 2 : index
    %c0_237 = arith.constant 0 : index
    %c0_238 = arith.constant 0 : index
    %263 = vector.load %arg14[%c2_236, %c0_237, %c0_238] : memref<3x64x32xf32, #tpu.memory_space<vmem>>, vector<1x64x32xf32>
    %264 = vector.shape_cast %263 : vector<1x64x32xf32> to vector<64x32xf32>
    %cst_239 = arith.constant dense<0.000000e+00> : vector<16x32xf32>
    %265 = tpu.matmul %255, %264, %cst_239 {dimension_numbers = #tpu.dot_dimension_numbers<[1], [0], [0], [1], [0, 0, 1, 1], [], []>} : vector<16x64xf32>, vector<64x32xf32>, vector<16x32xf32> -> vector<16x32xf32>
    %266 = arith.addf %262, %265 : vector<16x32xf32>
    %c0_240 = arith.constant 0 : index
    %c0_241 = arith.constant 0 : index
    %c0_242 = arith.constant 0 : index
    %267 = vector.load %arg15[%c0_240, %c0_241, %c0_242] : memref<2x64x32xf32, #tpu.memory_space<vmem>>, vector<1x64x32xf32>
    %268 = vector.shape_cast %267 : vector<1x64x32xf32> to vector<64x32xf32>
    %cst_243 = arith.constant dense<0.000000e+00> : vector<16x32xf32>
    %269 = tpu.matmul %253, %268, %cst_243 {dimension_numbers = #tpu.dot_dimension_numbers<[1], [0], [0], [1], [0, 0, 1, 1], [], []>} : vector<16x64xf32>, vector<64x32xf32>, vector<16x32xf32> -> vector<16x32xf32>
    %c1_244 = arith.constant 1 : index
    %c0_245 = arith.constant 0 : index
    %c0_246 = arith.constant 0 : index
    %270 = vector.load %arg15[%c1_244, %c0_245, %c0_246] : memref<2x64x32xf32, #tpu.memory_space<vmem>>, vector<1x64x32xf32>
    %271 = vector.shape_cast %270 : vector<1x64x32xf32> to vector<64x32xf32>
    %cst_247 = arith.constant dense<0.000000e+00> : vector<16x32xf32>
    %272 = tpu.matmul %255, %271, %cst_247 {dimension_numbers = #tpu.dot_dimension_numbers<[1], [0], [0], [1], [0, 0, 1, 1], [], []>} : vector<16x64xf32>, vector<64x32xf32>, vector<16x32xf32> -> vector<16x32xf32>
    %273 = arith.addf %269, %272 : vector<16x32xf32>
    %cst_248 = arith.constant dense<0.000000e+00> : vector<32xf32>
    %274 = vector.multi_reduction <add>, %266, %cst_248 [0] : vector<16x32xf32> to vector<32xf32>
    %275 = vector.shape_cast %274 : vector<32xf32> to vector<1x32xf32>
    %cst_249 = arith.constant dense<0.000000e+00> : vector<32xf32>
    %276 = vector.multi_reduction <add>, %273, %cst_249 [0] : vector<16x32xf32> to vector<32xf32>
    %277 = vector.shape_cast %276 : vector<32xf32> to vector<1x32xf32>
    %278 = arith.addf %275, %277 : vector<1x32xf32>
    %cst_250 = arith.constant 3.125000e-02 : f32
    %279 = vector.broadcast %cst_250 : f32 to vector<1x32xf32>
    %280 = arith.mulf %278, %279 : vector<1x32xf32>
    %281 = arith.mulf %266, %266 : vector<16x32xf32>
    %cst_251 = arith.constant dense<0.000000e+00> : vector<32xf32>
    %282 = vector.multi_reduction <add>, %281, %cst_251 [0] : vector<16x32xf32> to vector<32xf32>
    %283 = vector.shape_cast %282 : vector<32xf32> to vector<1x32xf32>
    %284 = arith.mulf %273, %273 : vector<16x32xf32>
    %cst_252 = arith.constant dense<0.000000e+00> : vector<32xf32>
    %285 = vector.multi_reduction <add>, %284, %cst_252 [0] : vector<16x32xf32> to vector<32xf32>
    %286 = vector.shape_cast %285 : vector<32xf32> to vector<1x32xf32>
    %287 = arith.addf %283, %286 : vector<1x32xf32>
    %cst_253 = arith.constant 3.125000e-02 : f32
    %288 = vector.broadcast %cst_253 : f32 to vector<1x32xf32>
    %289 = arith.mulf %287, %288 : vector<1x32xf32>
    %290 = arith.mulf %280, %280 : vector<1x32xf32>
    %291 = arith.subf %289, %290 : vector<1x32xf32>
    %cst_254 = arith.constant 0.000000e+00 : f32
    %292 = vector.broadcast %cst_254 : f32 to vector<1x32xf32>
    %293 = arith.maximumf %291, %292 : vector<1x32xf32>
    %cst_255 = arith.constant 9.99999974E-6 : f32
    %294 = vector.broadcast %cst_255 : f32 to vector<1x32xf32>
    %295 = arith.addf %293, %294 : vector<1x32xf32>
    %296 = math.rsqrt %295 : vector<1x32xf32>
    %c0_256 = arith.constant 0 : index
    %c0_257 = arith.constant 0 : index
    %297 = vector.load %arg16[%c0_256, %c0_257] : memref<1x32xf32, #tpu.memory_space<vmem>>, vector<1x32xf32>
    %298 = arith.mulf %296, %297 : vector<1x32xf32>
    %c0_258 = arith.constant 0 : index
    %c0_259 = arith.constant 0 : index
    %299 = vector.load %arg17[%c0_258, %c0_259] : memref<1x32xf32, #tpu.memory_space<vmem>>, vector<1x32xf32>
    %300 = arith.mulf %280, %298 : vector<1x32xf32>
    %301 = arith.subf %299, %300 : vector<1x32xf32>
    %302 = vector.broadcast %298 : vector<1x32xf32> to vector<16x32xf32>
    %303 = arith.mulf %266, %302 : vector<16x32xf32>
    %304 = vector.broadcast %301 : vector<1x32xf32> to vector<16x32xf32>
    %305 = arith.addf %303, %304 : vector<16x32xf32>
    %cst_260 = arith.constant 0.000000e+00 : f32
    %306 = vector.broadcast %cst_260 : f32 to vector<16x32xf32>
    %307 = arith.maximumf %305, %306 : vector<16x32xf32>
    %308 = vector.broadcast %298 : vector<1x32xf32> to vector<16x32xf32>
    %309 = arith.mulf %273, %308 : vector<16x32xf32>
    %310 = vector.broadcast %301 : vector<1x32xf32> to vector<16x32xf32>
    %311 = arith.addf %309, %310 : vector<16x32xf32>
    %cst_261 = arith.constant 0.000000e+00 : f32
    %312 = vector.broadcast %cst_261 : f32 to vector<16x32xf32>
    %313 = arith.maximumf %311, %312 : vector<16x32xf32>
    %314 = tpu.iota {dimensions = array<i32: 1>} : vector<16x2x32xi32>
    %c0_i32_262 = arith.constant 0 : i32
    %315 = vector.broadcast %c0_i32_262 : i32 to vector<16x2x32xi32>
    %316 = arith.cmpi eq, %314, %315 : vector<16x2x32xi32>
    %317 = vector.shape_cast %307 : vector<16x32xf32> to vector<16x1x32xf32>
    %318 = vector.shape_cast %313 : vector<16x32xf32> to vector<16x1x32xf32>
    %319 = vector.shape_cast %317 : vector<16x1x32xf32> to vector<16x1x32xf32>
    %320 = vector.broadcast %319 : vector<16x1x32xf32> to vector<16x2x32xf32>
    %321 = vector.shape_cast %318 : vector<16x1x32xf32> to vector<16x1x32xf32>
    %322 = vector.broadcast %321 : vector<16x1x32xf32> to vector<16x2x32xf32>
    %323 = arith.select %316, %320, %322 : vector<16x2x32xi1>, vector<16x2x32xf32>
    %324 = vector.shape_cast %323 : vector<16x2x32xf32> to vector<32x32xf32>
    %325 = vector.shape_cast %324 : vector<32x32xf32> to vector<2x16x32xf32>
    %cst_263 = arith.constant 0.000000e+00 : f32
    %326 = vector.broadcast %cst_263 : f32 to vector<2x3x32xf32>
    %c0_264 = arith.constant 0 : index
    %c0_265 = arith.constant 0 : index
    %c0_266 = arith.constant 0 : index
    %327 = vector.load %arg29[%c0_264, %c0_265, %c0_266] : memref<2x22x32xf32, #tpu.memory_space<vmem>>, vector<2x3x32xf32>
    tpu.vector_store %arg29[%c0_264, %c0_265, %c0_266], %326 {strides = array<i32>} : memref<2x22x32xf32, #tpu.memory_space<vmem>>, vector<2x3x32xf32>,
    %c0_267 = arith.constant 0 : index
    %c3_268 = arith.constant 3 : index
    %c0_269 = arith.constant 0 : index
    %328 = vector.load %arg29[%c0_267, %c3_268, %c0_269] : memref<2x22x32xf32, #tpu.memory_space<vmem>>, vector<2x16x32xf32>
    tpu.vector_store %arg29[%c0_267, %c3_268, %c0_269], %325 {strides = array<i32>} : memref<2x22x32xf32, #tpu.memory_space<vmem>>, vector<2x16x32xf32>,
    %cst_270 = arith.constant 0.000000e+00 : f32
    %329 = vector.broadcast %cst_270 : f32 to vector<2x3x32xf32>
    %c0_271 = arith.constant 0 : index
    %c19_272 = arith.constant 19 : index
    %c0_273 = arith.constant 0 : index
    %330 = vector.load %arg29[%c0_271, %c19_272, %c0_273] : memref<2x22x32xf32, #tpu.memory_space<vmem>>, vector<2x3x32xf32>
    tpu.vector_store %arg29[%c0_271, %c19_272, %c0_273], %329 {strides = array<i32>} : memref<2x22x32xf32, #tpu.memory_space<vmem>>, vector<2x3x32xf32>,
    %c0_274 = arith.constant 0 : index
    %c0_275 = arith.constant 0 : index
    %c0_276 = arith.constant 0 : index
    %331 = vector.load %arg29[%c0_274, %c0_275, %c0_276] : memref<2x22x32xf32, #tpu.memory_space<vmem>>, vector<2x16x32xf32>
    %332 = vector.shape_cast %331 : vector<2x16x32xf32> to vector<32x32xf32>
    %c0_277 = arith.constant 0 : index
    %c0_278 = arith.constant 0 : index
    %333 = vector.load %arg30[%c0_277, %c0_278] : memref<32x224xf32, #tpu.memory_space<vmem>>, vector<32x32xf32>
    tpu.vector_store %arg30[%c0_277, %c0_278], %332 {strides = array<i32>} : memref<32x224xf32, #tpu.memory_space<vmem>>, vector<32x32xf32>,
    %c0_279 = arith.constant 0 : index
    %c1_280 = arith.constant 1 : index
    %c0_281 = arith.constant 0 : index
    %334 = vector.load %arg29[%c0_279, %c1_280, %c0_281] : memref<2x22x32xf32, #tpu.memory_space<vmem>>, vector<2x16x32xf32>
    %335 = vector.shape_cast %334 : vector<2x16x32xf32> to vector<32x32xf32>
    %c0_282 = arith.constant 0 : index
    %c32_283 = arith.constant 32 : index
    %336 = vector.load %arg30[%c0_282, %c32_283] : memref<32x224xf32, #tpu.memory_space<vmem>>, vector<32x32xf32>
    tpu.vector_store %arg30[%c0_282, %c32_283], %335 {strides = array<i32>} : memref<32x224xf32, #tpu.memory_space<vmem>>, vector<32x32xf32>,
    %c0_284 = arith.constant 0 : index
    %c2_285 = arith.constant 2 : index
    %c0_286 = arith.constant 0 : index
    %337 = vector.load %arg29[%c0_284, %c2_285, %c0_286] : memref<2x22x32xf32, #tpu.memory_space<vmem>>, vector<2x16x32xf32>
    %338 = vector.shape_cast %337 : vector<2x16x32xf32> to vector<32x32xf32>
    %c0_287 = arith.constant 0 : index
    %c64_288 = arith.constant 64 : index
    %339 = vector.load %arg30[%c0_287, %c64_288] : memref<32x224xf32, #tpu.memory_space<vmem>>, vector<32x32xf32>
    tpu.vector_store %arg30[%c0_287, %c64_288], %338 {strides = array<i32>} : memref<32x224xf32, #tpu.memory_space<vmem>>, vector<32x32xf32>,
    %c0_289 = arith.constant 0 : index
    %c3_290 = arith.constant 3 : index
    %c0_291 = arith.constant 0 : index
    %340 = vector.load %arg29[%c0_289, %c3_290, %c0_291] : memref<2x22x32xf32, #tpu.memory_space<vmem>>, vector<2x16x32xf32>
    %341 = vector.shape_cast %340 : vector<2x16x32xf32> to vector<32x32xf32>
    %c0_292 = arith.constant 0 : index
    %c96_293 = arith.constant 96 : index
    %342 = vector.load %arg30[%c0_292, %c96_293] : memref<32x224xf32, #tpu.memory_space<vmem>>, vector<32x32xf32>
    tpu.vector_store %arg30[%c0_292, %c96_293], %341 {strides = array<i32>} : memref<32x224xf32, #tpu.memory_space<vmem>>, vector<32x32xf32>,
    %c0_294 = arith.constant 0 : index
    %c4_295 = arith.constant 4 : index
    %c0_296 = arith.constant 0 : index
    %343 = vector.load %arg29[%c0_294, %c4_295, %c0_296] : memref<2x22x32xf32, #tpu.memory_space<vmem>>, vector<2x16x32xf32>
    %344 = vector.shape_cast %343 : vector<2x16x32xf32> to vector<32x32xf32>
    %c0_297 = arith.constant 0 : index
    %c128_298 = arith.constant 128 : index
    %345 = vector.load %arg30[%c0_297, %c128_298] : memref<32x224xf32, #tpu.memory_space<vmem>>, vector<32x32xf32>
    tpu.vector_store %arg30[%c0_297, %c128_298], %344 {strides = array<i32>} : memref<32x224xf32, #tpu.memory_space<vmem>>, vector<32x32xf32>,
    %c0_299 = arith.constant 0 : index
    %c5_300 = arith.constant 5 : index
    %c0_301 = arith.constant 0 : index
    %346 = vector.load %arg29[%c0_299, %c5_300, %c0_301] : memref<2x22x32xf32, #tpu.memory_space<vmem>>, vector<2x16x32xf32>
    %347 = vector.shape_cast %346 : vector<2x16x32xf32> to vector<32x32xf32>
    %c0_302 = arith.constant 0 : index
    %c160 = arith.constant 160 : index
    %348 = vector.load %arg30[%c0_302, %c160] : memref<32x224xf32, #tpu.memory_space<vmem>>, vector<32x32xf32>
    tpu.vector_store %arg30[%c0_302, %c160], %347 {strides = array<i32>} : memref<32x224xf32, #tpu.memory_space<vmem>>, vector<32x32xf32>,
    %c0_303 = arith.constant 0 : index
    %c6_304 = arith.constant 6 : index
    %c0_305 = arith.constant 0 : index
    %349 = vector.load %arg29[%c0_303, %c6_304, %c0_305] : memref<2x22x32xf32, #tpu.memory_space<vmem>>, vector<2x16x32xf32>
    %350 = vector.shape_cast %349 : vector<2x16x32xf32> to vector<32x32xf32>
    %c0_306 = arith.constant 0 : index
    %c192_307 = arith.constant 192 : index
    %351 = vector.load %arg30[%c0_306, %c192_307] : memref<32x224xf32, #tpu.memory_space<vmem>>, vector<32x32xf32>
    tpu.vector_store %arg30[%c0_306, %c192_307], %350 {strides = array<i32>} : memref<32x224xf32, #tpu.memory_space<vmem>>, vector<32x32xf32>,
    %c0_308 = arith.constant 0 : index
    %c0_309 = arith.constant 0 : index
    %352 = vector.load %arg30[%c0_308, %c0_309] : memref<32x224xf32, #tpu.memory_space<vmem>>, vector<32x224xf32>
    %c0_310 = arith.constant 0 : index
    %c0_311 = arith.constant 0 : index
    %353 = vector.load %arg18[%c0_310, %c0_311] : memref<224x1xf32, #tpu.memory_space<vmem>>, vector<224x1xf32>
    %cst_312 = arith.constant dense<0.000000e+00> : vector<32x1xf32>
    %354 = tpu.matmul %352, %353, %cst_312 {dimension_numbers = #tpu.dot_dimension_numbers<[1], [0], [0], [1], [0, 0, 1, 1], [], []>} : vector<32x224xf32>, vector<224x1xf32>, vector<32x1xf32> -> vector<32x1xf32>
    %c0_313 = arith.constant 0 : index
    %c0_314 = arith.constant 0 : index
    %355 = vector.load %arg19[%c0_313, %c0_314] : memref<1x1xf32, #tpu.memory_space<vmem>>, vector<1x1xf32>
    %356 = vector.broadcast %355 : vector<1x1xf32> to vector<32x1xf32>
    %357 = arith.addf %354, %356 : vector<32x1xf32>
    %358 = math.tanh %357 : vector<32x1xf32>
    %359 = vector.shape_cast %358 : vector<32x1xf32> to vector<2x16x1xf32>
    %c0_315 = arith.constant 0 : index
    %c0_316 = arith.constant 0 : index
    %c0_317 = arith.constant 0 : index
    %360 = vector.load %arg20[%c0_315, %c0_316, %c0_317] : memref<2x16x1xf32, #tpu.memory_space<vmem>>, vector<2x16x1xf32>
    tpu.vector_store %arg20[%c0_315, %c0_316, %c0_317], %359 {strides = array<i32>} : memref<2x16x1xf32, #tpu.memory_space<vmem>>, vector<2x16x1xf32>,
    return
  }
}

</mosaic_0001>

<llo_original>
// kernel: ecg_privacy_processor.1
$region0: #{ecg_privacy_processor.1}
  #allocation0 [shape = 'u32[]', space=smem, size = 0x4, offset = 0x4, fixed_abs, tag = 'smem constant byte address 0x4 - core index']
  #allocation1 [shape = 'u32[144,128]{1,0:T(1,128)}', space=vmem, size = 0x12000, scoped, tag = 'internal scratch']
  #allocation2 [shape = 'f32[2,22,1]{2,1,0:T(8,128)}', space=vmem, size = 0x6000, scoped, tag = 'scratch operand']
  #allocation3 [shape = 'f32[32,7]{1,0:T(8,128)}', space=vmem, size = 0x4000, scoped, tag = 'scratch operand']
  #allocation4 [shape = 'f32[2,12,32]{2,1,0:T(8,128)}', space=vmem, size = 0x4000, scoped, tag = 'scratch operand']
  #allocation5 [shape = 'f32[16,160]{1,0:T(8,128)}', space=vmem, size = 0x4000, scoped, tag = 'scratch operand']
  #allocation6 [shape = 'f32[2,8,64]{2,1,0:T(8,128)}', space=vmem, size = 0x2000, scoped, tag = 'scratch operand']
  #allocation7 [shape = 'f32[8,320]{1,0:T(8,128)}', space=vmem, size = 0x3000, scoped, tag = 'scratch operand']
  #allocation8 [shape = 'f32[2,6,128]{2,1,0:T(8,128)}', space=vmem, size = 0x2000, scoped, tag = 'scratch operand']
  #allocation9 [shape = 'f32[2,10,64]{2,1,0:T(8,128)}', space=vmem, size = 0x4000, scoped, tag = 'scratch operand']
  #allocation10 [shape = 'f32[2,22,32]{2,1,0:T(8,128)}', space=vmem, size = 0x6000, scoped, tag = 'scratch operand']
  #allocation11 [shape = 'f32[32,224]{1,0:T(8,128)}', space=vmem, size = 0x8000, scoped, tag = 'scratch operand']
  #allocation12 [shape = 'f32[1,1]{1,0:T(1,128)S(1)}', space=vmem, size = 0x200, scoped, tag = 'scoped memory for ecg_privacy_processor.1']
  %s0 = inlined_call_operand.vmem [shape: f32[2,16,1], index: 0, kind: input, shape index: {}]
  %s1 = inlined_call_operand.vmem [shape: f32[7,32], index: 1, kind: input, shape index: {}]
  %s2 = inlined_call_operand.vmem [shape: f32[1,32], index: 2, kind: input, shape index: {}]
  %s3 = inlined_call_operand.vmem [shape: f32[1,32], index: 3, kind: input, shape index: {}]
  %s4 = inlined_call_operand.vmem [shape: f32[160,64], index: 4, kind: input, shape index: {}]
  %s5 = inlined_call_operand.vmem [shape: f32[1,64], index: 5, kind: input, shape index: {}]
  %s6 = inlined_call_operand.vmem [shape: f32[1,64], index: 6, kind: input, shape index: {}]
  %s7 = inlined_call_operand.vmem [shape: f32[320,128], index: 7, kind: input, shape index: {}]
  %s8 = inlined_call_operand.vmem [shape: f32[1,128], index: 8, kind: input, shape index: {}]
  %s9 = inlined_call_operand.vmem [shape: f32[1,128], index: 9, kind: input, shape index: {}]
  %s10 = inlined_call_operand.vmem [shape: f32[3,128,64], index: 10, kind: input, shape index: {}]
  %s11 = inlined_call_operand.vmem [shape: f32[2,128,64], index: 11, kind: input, shape index: {}]
  %s12 = inlined_call_operand.vmem [shape: f32[1,64], index: 12, kind: input, shape index: {}]
  %s13 = inlined_call_operand.vmem [shape: f32[1,64], index: 13, kind: input, shape index: {}]
  %s14 = inlined_call_operand.vmem [shape: f32[3,64,32], index: 14, kind: input, shape index: {}]
  %s15 = inlined_call_operand.vmem [shape: f32[2,64,32], index: 15, kind: input, shape index: {}]
  %s16 = inlined_call_operand.vmem [shape: f32[1,32], index: 16, kind: input, shape index: {}]
  %s17 = inlined_call_operand.vmem [shape: f32[1,32], index: 17, kind: input, shape index: {}]
  %s18 = inlined_call_operand.vmem [shape: f32[224,1], index: 18, kind: input, shape index: {}]
  %s19 = inlined_call_operand.<no memory space> [shape: f32[1,1], index: 19, kind: input, shape index: {}]
  %s20 = inlined_call_operand.vmem [shape: f32[2,16,1], index: 20, kind: output, shape index: {}]
  %s21 = sld [smem:[#allocation0]]
  $region90: #{ecg_privacy_processor.1} parent=0
    _
  %s23 = ssub.s32 1, %s21
  %s24 = scalar_select 0, %s23, %s21
  %v25 = vstv %s19
  %26 = vst [vmem:[#allocation12] sm:$0x1] %v25
  // Predicated region
  $region2: #{ecg_privacy_processor.1} parent=0 // pred_check
    _
  $region3: #{ecg_privacy_processor.1} parent=0 // pred_check_branch
    %28 = sbr.rel (0) target = $region5
  $region4: #{ecg_privacy_processor.1} parent=0 // pred_region
    _
  $region5: #{ecg_privacy_processor.1} parent=0 // pred_fallthru
    _
  // Predicated region
  $region6: #{ecg_privacy_processor.1} parent=0 // pred_check
    _
  $region7: #{ecg_privacy_processor.1} parent=0 // pred_check_branch
    %30 = sbr.rel (0) target = $region9
  $region8: #{ecg_privacy_processor.1} parent=0 // pred_region
    _
  $region9: #{ecg_privacy_processor.1} parent=0 // pred_fallthru
    _
  // Predicated region
  $region10: #{ecg_privacy_processor.1} parent=0 // pred_check
    _
  $region11: #{ecg_privacy_processor.1} parent=0 // pred_check_branch
    %32 = sbr.rel (0) target = $region13
  $region12: #{ecg_privacy_processor.1} parent=0 // pred_region
    _
  $region13: #{ecg_privacy_processor.1} parent=0 // pred_fallthru
    _
  // Predicated region
  $region14: #{ecg_privacy_processor.1} parent=0 // pred_check
    _
  $region15: #{ecg_privacy_processor.1} parent=0 // pred_check_branch
    %34 = sbr.rel (0) target = $region17
  $region16: #{ecg_privacy_processor.1} parent=0 // pred_region
    _
  $region17: #{ecg_privacy_processor.1} parent=0 // pred_fallthru
    _
  // Predicated region
  $region18: #{ecg_privacy_processor.1} parent=0 // pred_check
    _
  $region19: #{ecg_privacy_processor.1} parent=0 // pred_check_branch
    %36 = sbr.rel (0) target = $region21
  $region20: #{ecg_privacy_processor.1} parent=0 // pred_region
    _
  $region21: #{ecg_privacy_processor.1} parent=0 // pred_fallthru
    _
  // Predicated region
  $region22: #{ecg_privacy_processor.1} parent=0 // pred_check
    _
  $region23: #{ecg_privacy_processor.1} parent=0 // pred_check_branch
    %38 = sbr.rel (0) target = $region25
  $region24: #{ecg_privacy_processor.1} parent=0 // pred_region
    _
  $region25: #{ecg_privacy_processor.1} parent=0 // pred_fallthru
    _
  // Predicated region
  $region26: #{ecg_privacy_processor.1} parent=0 // pred_check
    _
  $region27: #{ecg_privacy_processor.1} parent=0 // pred_check_branch
    %40 = sbr.rel (0) target = $region29
  $region28: #{ecg_privacy_processor.1} parent=0 // pred_region
    _
  $region29: #{ecg_privacy_processor.1} parent=0 // pred_fallthru
    _
  // Predicated region
  $region30: #{ecg_privacy_processor.1} parent=0 // pred_check
    _
  $region31: #{ecg_privacy_processor.1} parent=0 // pred_check_branch
    %42 = sbr.rel (0) target = $region33
  $region32: #{ecg_privacy_processor.1} parent=0 // pred_region
    _
  $region33: #{ecg_privacy_processor.1} parent=0 // pred_fallthru
    _
  // Predicated region
  $region34: #{ecg_privacy_processor.1} parent=0 // pred_check
    _
  $region35: #{ecg_privacy_processor.1} parent=0 // pred_check_branch
    %44 = sbr.rel (0) target = $region37
  $region36: #{ecg_privacy_processor.1} parent=0 // pred_region
    _
  $region37: #{ecg_privacy_processor.1} parent=0 // pred_fallthru
    _
  // Predicated region
  $region38: #{ecg_privacy_processor.1} parent=0 // pred_check
    _
  $region39: #{ecg_privacy_processor.1} parent=0 // pred_check_branch
    %46 = sbr.rel (0) target = $region41
  $region40: #{ecg_privacy_processor.1} parent=0 // pred_region
    _
  $region41: #{ecg_privacy_processor.1} parent=0 // pred_fallthru
    _
  // Predicated region
  $region42: #{ecg_privacy_processor.1} parent=0 // pred_check
    _
  $region43: #{ecg_privacy_processor.1} parent=0 // pred_check_branch
    %48 = sbr.rel (0) target = $region45
  $region44: #{ecg_privacy_processor.1} parent=0 // pred_region
    _
  $region45: #{ecg_privacy_processor.1} parent=0 // pred_fallthru
    _
  // Predicated region
  $region46: #{ecg_privacy_processor.1} parent=0 // pred_check
    _
  $region47: #{ecg_privacy_processor.1} parent=0 // pred_check_branch
    %50 = sbr.rel (0) target = $region49
  $region48: #{ecg_privacy_processor.1} parent=0 // pred_region
    _
  $region49: #{ecg_privacy_processor.1} parent=0 // pred_fallthru
    _
  // Predicated region
  $region50: #{ecg_privacy_processor.1} parent=0 // pred_check
    _
  $region51: #{ecg_privacy_processor.1} parent=0 // pred_check_branch
    %52 = sbr.rel (0) target = $region53
  $region52: #{ecg_privacy_processor.1} parent=0 // pred_region
    _
  $region53: #{ecg_privacy_processor.1} parent=0 // pred_fallthru
    _
  // Predicated region
  $region54: #{ecg_privacy_processor.1} parent=0 // pred_check
    _
  $region55: #{ecg_privacy_processor.1} parent=0 // pred_check_branch
    %54 = sbr.rel (0) target = $region57
  $region56: #{ecg_privacy_processor.1} parent=0 // pred_region
    _
  $region57: #{ecg_privacy_processor.1} parent=0 // pred_fallthru
    _
  // Predicated region
  $region58: #{ecg_privacy_processor.1} parent=0 // pred_check
    _
  $region59: #{ecg_privacy_processor.1} parent=0 // pred_check_branch
    %56 = sbr.rel (0) target = $region61
  $region60: #{ecg_privacy_processor.1} parent=0 // pred_region
    _
  $region61: #{ecg_privacy_processor.1} parent=0 // pred_fallthru
    _
  // Predicated region
  $region62: #{ecg_privacy_processor.1} parent=0 // pred_check
    _
  $region63: #{ecg_privacy_processor.1} parent=0 // pred_check_branch
    %58 = sbr.rel (0) target = $region65
  $region64: #{ecg_privacy_processor.1} parent=0 // pred_region
    _
  $region65: #{ecg_privacy_processor.1} parent=0 // pred_fallthru
    _
  // Predicated region
  $region66: #{ecg_privacy_processor.1} parent=0 // pred_check
    _
  $region67: #{ecg_privacy_processor.1} parent=0 // pred_check_branch
    %60 = sbr.rel (0) target = $region69
  $region68: #{ecg_privacy_processor.1} parent=0 // pred_region
    _
  $region69: #{ecg_privacy_processor.1} parent=0 // pred_fallthru
    _
  // Predicated region
  $region70: #{ecg_privacy_processor.1} parent=0 // pred_check
    _
  $region71: #{ecg_privacy_processor.1} parent=0 // pred_check_branch
    %62 = sbr.rel (0) target = $region73
  $region72: #{ecg_privacy_processor.1} parent=0 // pred_region
    _
  $region73: #{ecg_privacy_processor.1} parent=0 // pred_fallthru
    _
  // Predicated region
  $region74: #{ecg_privacy_processor.1} parent=0 // pred_check
    _
  $region75: #{ecg_privacy_processor.1} parent=0 // pred_check_branch
    %64 = sbr.rel (0) target = $region77
  $region76: #{ecg_privacy_processor.1} parent=0 // pred_region
    _
  $region77: #{ecg_privacy_processor.1} parent=0 // pred_fallthru
    _
  // Predicated region
  $region78: #{ecg_privacy_processor.1} parent=0 // pred_check
    _
  $region79: #{ecg_privacy_processor.1} parent=0 // pred_check_branch
    %66 = sbr.rel (0) target = $region81
  $region80: #{ecg_privacy_processor.1} parent=0 // pred_region
    _
  $region81: #{ecg_privacy_processor.1} parent=0 // pred_fallthru
    _
  %v67 = vld [vmem:[%s0] sm:$0xff]
  %v68 = vld [vmem:[%s0 + $0x8] sm:$0xff]
  %v69 = vld [vmem:[%s0 + $0x10] sm:$0xff]
  %v70 = vld [vmem:[%s0 + $0x18] sm:$0xff]
  %vm71 = vcmask 2048
  %72 = vst.msk [vmem:[#allocation2] sm:$0x7] %vm71, 0.0
  %73 = vst.msk [vmem:[#allocation2 + $0x18] sm:$0x7] %vm71, 0.0
  %vm74 = vcmask 7168
  %75 = vst.msk [vmem:[#allocation2 + $0x3] sm:$0xff] %vm74, %v67
  %76 = vst.msk [vmem:[#allocation2 + $0xb] sm:$0xff] %vm74, %v68
  %77 = vst.msk [vmem:[#allocation2 + $0x1b] sm:$0xff] %vm74, %v69
  %78 = vst.msk [vmem:[#allocation2 + $0x23] sm:$0xff] %vm74, %v70
  %79 = vst.msk [vmem:[#allocation2 + $0x13] sm:$0x7] %vm71, 0.0
  %80 = vst.msk [vmem:[#allocation2 + $0x2b] sm:$0x7] %vm71, 0.0
  %v81 = vld [vmem:[#allocation2] sm:$0xff]
  %v82 = vld [vmem:[#allocation2 + $0x8] sm:$0xff]
  %v83 = vld [vmem:[#allocation2 + $0x18] sm:$0xff]
  %v84 = vld [vmem:[#allocation2 + $0x20] sm:$0xff]
  %85 = vst.msk [vmem:[#allocation3] sm:$0xff] %vm74, %v81
  %86 = vst.msk [vmem:[#allocation3 + $0x8] sm:$0xff] %vm74, %v82
  %87 = vst.msk [vmem:[#allocation3 + $0x10] sm:$0xff] %vm74, %v83
  %88 = vst.msk [vmem:[#allocation3 + $0x18] sm:$0xff] %vm74, %v84
  %v89 = vld [vmem:[#allocation2 + $0x1] sm:$0xff]
  %v90 = vld [vmem:[#allocation2 + $0x9] sm:$0xff]
  %v91 = vld [vmem:[#allocation2 + $0x19] sm:$0xff]
  %v92 = vld [vmem:[#allocation2 + $0x21] sm:$0xff]
  %97 = vrot.lane.b32.xlu0 %v89, 1
  %v98 = vpop.permute.xlu0 %97
  %99 = vrot.lane.b32.xlu0 %v90, 1
  %v100 = vpop.permute.xlu0 %99
  %101 = vrot.lane.b32.xlu0 %v91, 1
  %v102 = vpop.permute.xlu0 %101
  %103 = vrot.lane.b32.xlu0 %v92, 1
  %v104 = vpop.permute.xlu0 %103
  %vm109 = vcmask 15368
  %110 = vst.msk [vmem:[#allocation3] sm:$0xff] %vm109, %v98
  %111 = vst.msk [vmem:[#allocation3 + $0x8] sm:$0xff] %vm109, %v100
  %112 = vst.msk [vmem:[#allocation3 + $0x10] sm:$0xff] %vm109, %v102
  %113 = vst.msk [vmem:[#allocation3 + $0x18] sm:$0xff] %vm109, %v104
  %v114 = vld [vmem:[#allocation2 + $0x2] sm:$0xff]
  %v115 = vld [vmem:[#allocation2 + $0xa] sm:$0xff]
  %v116 = vld [vmem:[#allocation2 + $0x1a] sm:$0xff]
  %v117 = vld [vmem:[#allocation2 + $0x22] sm:$0xff]
  %122 = vrot.lane.b32.xlu0 %v114, 2
  %v123 = vpop.permute.xlu0 %122
  %124 = vrot.lane.b32.xlu0 %v115, 2
  %v125 = vpop.permute.xlu0 %124
  %126 = vrot.lane.b32.xlu0 %v116, 2
  %v127 = vpop.permute.xlu0 %126
  %128 = vrot.lane.b32.xlu0 %v117, 2
  %v129 = vpop.permute.xlu0 %128
  %vm134 = vcmask 23568
  %135 = vst.msk [vmem:[#allocation3] sm:$0xff] %vm134, %v123
  %136 = vst.msk [vmem:[#allocation3 + $0x8] sm:$0xff] %vm134, %v125
  %137 = vst.msk [vmem:[#allocation3 + $0x10] sm:$0xff] %vm134, %v127
  %138 = vst.msk [vmem:[#allocation3 + $0x18] sm:$0xff] %vm134, %v129
  %v139 = vld [vmem:[#allocation2 + $0x3] sm:$0xff]
  %v140 = vld [vmem:[#allocation2 + $0xb] sm:$0xff]
  %v141 = vld [vmem:[#allocation2 + $0x1b] sm:$0xff]
  %v142 = vld [vmem:[#allocation2 + $0x23] sm:$0xff]
  %147 = vrot.lane.b32.xlu0 %v139, 3
  %v148 = vpop.permute.xlu0 %147
  %149 = vrot.lane.b32.xlu0 %v140, 3
  %v150 = vpop.permute.xlu0 %149
  %151 = vrot.lane.b32.xlu0 %v141, 3
  %v152 = vpop.permute.xlu0 %151
  %153 = vrot.lane.b32.xlu0 %v142, 3
  %v154 = vpop.permute.xlu0 %153
  %vm159 = vcmask 31768
  %160 = vst.msk [vmem:[#allocation3] sm:$0xff] %vm159, %v148
  %161 = vst.msk [vmem:[#allocation3 + $0x8] sm:$0xff] %vm159, %v150
  %162 = vst.msk [vmem:[#allocation3 + $0x10] sm:$0xff] %vm159, %v152
  %163 = vst.msk [vmem:[#allocation3 + $0x18] sm:$0xff] %vm159, %v154
  %v164 = vld [vmem:[#allocation2 + $0x4] sm:$0xff]
  %v165 = vld [vmem:[#allocation2 + $0xc] sm:$0xff]
  %v166 = vld [vmem:[#allocation2 + $0x1c] sm:$0xff]
  %v167 = vld [vmem:[#allocation2 + $0x24] sm:$0xff]
  %172 = vrot.lane.b32.xlu0 %v164, 4
  %v173 = vpop.permute.xlu0 %172
  %174 = vrot.lane.b32.xlu0 %v165, 4
  %v175 = vpop.permute.xlu0 %174
  %176 = vrot.lane.b32.xlu0 %v166, 4
  %v177 = vpop.permute.xlu0 %176
  %178 = vrot.lane.b32.xlu0 %v167, 4
  %v179 = vpop.permute.xlu0 %178
  %vm184 = vcmask 39968
  %185 = vst.msk [vmem:[#allocation3] sm:$0xff] %vm184, %v173
  %186 = vst.msk [vmem:[#allocation3 + $0x8] sm:$0xff] %vm184, %v175
  %187 = vst.msk [vmem:[#allocation3 + $0x10] sm:$0xff] %vm184, %v177
  %188 = vst.msk [vmem:[#allocation3 + $0x18] sm:$0xff] %vm184, %v179
  %v189 = vld [vmem:[#allocation2 + $0x5] sm:$0xff]
  %v190 = vld [vmem:[#allocation2 + $0xd] sm:$0xff]
  %v191 = vld [vmem:[#allocation2 + $0x1d] sm:$0xff]
  %v192 = vld [vmem:[#allocation2 + $0x25] sm:$0xff]
  %197 = vrot.lane.b32.xlu0 %v189, 5
  %v198 = vpop.permute.xlu0 %197
  %199 = vrot.lane.b32.xlu0 %v190, 5
  %v200 = vpop.permute.xlu0 %199
  %201 = vrot.lane.b32.xlu0 %v191, 5
  %v202 = vpop.permute.xlu0 %201
  %203 = vrot.lane.b32.xlu0 %v192, 5
  %v204 = vpop.permute.xlu0 %203
  %vm209 = vcmask 48168
  %210 = vst.msk [vmem:[#allocation3] sm:$0xff] %vm209, %v198
  %211 = vst.msk [vmem:[#allocation3 + $0x8] sm:$0xff] %vm209, %v200
  %212 = vst.msk [vmem:[#allocation3 + $0x10] sm:$0xff] %vm209, %v202
  %213 = vst.msk [vmem:[#allocation3 + $0x18] sm:$0xff] %vm209, %v204
  %v214 = vld [vmem:[#allocation2 + $0x6] sm:$0xff]
  %v215 = vld [vmem:[#allocation2 + $0xe] sm:$0xff]
  %v216 = vld [vmem:[#allocation2 + $0x1e] sm:$0xff]
  %v217 = vld [vmem:[#allocation2 + $0x26] sm:$0xff]
  %222 = vrot.lane.b32.xlu0 %v214, 6
  %v223 = vpop.permute.xlu0 %222
  %224 = vrot.lane.b32.xlu0 %v215, 6
  %v225 = vpop.permute.xlu0 %224
  %226 = vrot.lane.b32.xlu0 %v216, 6
  %v227 = vpop.permute.xlu0 %226
  %228 = vrot.lane.b32.xlu0 %v217, 6
  %v229 = vpop.permute.xlu0 %228
  %vm234 = vcmask 56368
  %235 = vst.msk [vmem:[#allocation3] sm:$0xff] %vm234, %v223
  %236 = vst.msk [vmem:[#allocation3 + $0x8] sm:$0xff] %vm234, %v225
  %237 = vst.msk [vmem:[#allocation3 + $0x10] sm:$0xff] %vm234, %v227
  %238 = vst.msk [vmem:[#allocation3 + $0x18] sm:$0xff] %vm234, %v229
  %v239 = vld [vmem:[#allocation3] sm:$0xff]
  %v240 = vld [vmem:[#allocation3 + $0x8] sm:$0xff]
  %v241 = vld [vmem:[#allocation3 + $0x10] sm:$0xff]
  %v242 = vld [vmem:[#allocation3 + $0x18] sm:$0xff]
  %v243 = vld [vmem:[%s1] sm:$0x7f]
  %vm244 = vcmask 56320
  %v246 = vsel %vm244, %v239, 0
  %v249 = vsel %vm244, %v240, 0
  %v252 = vsel %vm244, %v241, 0
  %v255 = vsel %vm244, %v242, 0
  %vm257 = vcmask 1046528
  %v259 = vsel %vm257, %v243, 0
  %261 = vmatprep.subr.mxu0 0.0
  %262 = vmatpush1.msra.mxu0 %v259
  %263 = vmatprep.subr.mxu0 0.0
  %264 = vmatpush1.msra.mxu0 0.0
  %265 = vmatprep.subr.mxu0 0.0
  %266 = vmatpush1.msra.mxu0 0.0
  %267 = vmatprep.subr.mxu0 0.0
  %268 = vmatpush1.msra.mxu0 0.0
  %269 = vmatprep.subr.mxu0 0.0
  %270 = vmatpush1.msra.mxu0 0.0
  %271 = vmatprep.subr.mxu0 0.0
  %272 = vmatpush1.msra.mxu0 0.0
  %273 = vmatprep.subr.mxu0 0.0
  %274 = vmatpush1.msra.mxu0 0.0
  %275 = vmatprep.subr.mxu0 0.0
  %276 = vmatpush1.msra.mxu0 0.0
  %277 = vmatprep.subr.mxu0 0.0
  %278 = vmatpush1.msra.mxu0 0.0
  %279 = vmatprep.subr.mxu0 0.0
  %280 = vmatpush1.msra.mxu0 0.0
  %281 = vmatprep.subr.mxu0 0.0
  %282 = vmatpush1.msra.mxu0 0.0
  %283 = vmatprep.subr.mxu0 0.0
  %284 = vmatpush1.msra.mxu0 0.0
  %285 = vmatprep.subr.mxu0 0.0
  %286 = vmatpush1.msra.mxu0 0.0
  %287 = vmatprep.subr.mxu0 0.0
  %288 = vmatpush1.msra.mxu0 0.0
  %289 = vmatprep.subr.mxu0 0.0
  %290 = vmatpush1.msra.mxu0 0.0
  %291 = vmatprep.subr.mxu0 0.0
  %292 = vmatpush1.msra.mxu0 0.0
  %293 = vmatprep.subr.mxu0 0.0
  %294 = vmatpush1.msra.mxu0 0.0
  %295 = vmatprep.subr.mxu0 0.0
  %296 = vmatpush1.msra.mxu0 0.0
  %297 = vmatprep.subr.mxu0 0.0
  %298 = vmatpush1.msra.mxu0 0.0
  %299 = vmatprep.subr.mxu0 0.0
  %300 = vmatpush1.msra.mxu0 0.0
  %301 = vmatprep.subr.mxu0 0.0
  %302 = vmatpush1.msra.mxu0 0.0
  %303 = vmatprep.subr.mxu0 0.0
  %304 = vmatpush1.msra.mxu0 0.0
  %305 = vmatprep.subr.mxu0 0.0
  %306 = vmatpush1.msra.mxu0 0.0
  %307 = vmatprep.subr.mxu0 0.0
  %308 = vmatpush1.msra.mxu0 0.0
  %309 = vmatprep.subr.mxu0 0.0
  %310 = vmatpush1.msra.mxu0 0.0
  %311 = vmatprep.subr.mxu0 0.0
  %312 = vmatpush1.msra.mxu0 0.0
  %313 = vmatprep.subr.mxu0 0.0
  %314 = vmatpush1.msra.mxu0 0.0
  %315 = vmatprep.subr.mxu0 0.0
  %316 = vmatpush1.msra.mxu0 0.0
  %317 = vmatprep.subr.mxu0 0.0
  %318 = vmatpush1.msra.mxu0 0.0
  %319 = vmatprep.subr.mxu0 0.0
  %320 = vmatpush1.msra.mxu0 0.0
  %321 = vmatprep.subr.mxu0 0.0
  %322 = vmatpush1.msra.mxu0 0.0
  %323 = vmatprep.subr.mxu0 0.0
  %324 = vmatpush1.msra.mxu0 0.0
  %325 = vmatprep.mubr.f32.mxu0 0.0
  %326 = vmatmul.mubr.f32.gmra.mrb[0].mxu0 %v246
  %v327 = vpop.f32.mrb[0].mxu0
  %v328 = vadd.f32 0.0, %v327
  %v329 = vpop.f32.mrb[0].mxu0
  %330 = vmatprep.mubr.f32.mxu0 0.0
  %331 = vmatmul.mubr.f32.gmra.mrb[0].mxu0 %v249
  %v332 = vpop.f32.mrb[0].mxu0
  %v333 = vadd.f32 0.0, %v332
  %v334 = vpop.f32.mrb[0].mxu0
  %335 = vmatprep.mubr.f32.mxu0 0.0
  %336 = vmatmul.mubr.f32.gmra.mrb[0].mxu0 %v252
  %v337 = vpop.f32.mrb[0].mxu0
  %v338 = vadd.f32 0.0, %v337
  %v339 = vpop.f32.mrb[0].mxu0
  %340 = vmatprep.mubr.f32.mxu0 0.0
  %341 = vmatmul.mubr.f32.gmra.mrb[0].mxu0 %v255
  %v342 = vpop.f32.mrb[0].mxu0
  %v343 = vadd.f32 0.0, %v342
  %v344 = vpop.f32.mrb[0].mxu0
  %345 = vdwg.mxu0
  %vm346 = vcmask 261120
  %v347 = vsel %vm346, %v328, 0.0
  %v348 = vsel %vm346, %v333, 0.0
  %v349 = vadd.f32 %v347, %v348
  %v350 = vsel %vm346, %v338, 0.0
  %v351 = vadd.f32 %v349, %v350
  %v352 = vsel %vm346, %v343, 0.0
  %v353 = vadd.f32 %v351, %v352
  %v354 = vrot.slane %v353, 4
  %v355 = vadd.f32 %v353, %v354
  %v356 = vrot.slane %v355, 2
  %v357 = vadd.f32 %v355, %v356
  %v358 = vrot.slane %v357, 1
  %v359 = vadd.f32 %v357, %v358
  %v360 = vmul.f32 %v359, 0.03125
  %v361 = vmul.f32 %v328, %v328
  %v362 = vmul.f32 %v333, %v333
  %v363 = vmul.f32 %v338, %v338
  %v364 = vmul.f32 %v343, %v343
  %v365 = vsel %vm346, %v361, 0.0
  %v366 = vsel %vm346, %v362, 0.0
  %v367 = vadd.f32 %v365, %v366
  %v368 = vsel %vm346, %v363, 0.0
  %v369 = vadd.f32 %v367, %v368
  %v370 = vsel %vm346, %v364, 0.0
  %v371 = vadd.f32 %v369, %v370
  %v372 = vrot.slane %v371, 4
  %v373 = vadd.f32 %v371, %v372
  %v374 = vrot.slane %v373, 2
  %v375 = vadd.f32 %v373, %v374
  %v376 = vrot.slane %v375, 1
  %v377 = vadd.f32 %v375, %v376
  %v378 = vmul.f32 %v377, 0.03125
  %v379 = vmul.f32 %v360, %v360
  %v380 = vsub.f32 %v378, %v379
  %v381 = vmax.f32 %v380, 0.0
  %v382 = vadd.f32 %v381, 1e-05
  %v383 = vrsqrt.pop %v382
  %v384 = vld [vmem:[%s2] sm:$0x1]
  %v385 = vmul.f32 %v383, %v384
  %v386 = vld [vmem:[%s3] sm:$0x1]
  %v387 = vmul.f32 %v360, %v385
  %v388 = vsub.f32 %v386, %v387
  %v389 = vlaneseq
  %v390 = vshrl.u32 %v389, 7
  %v391 = vsub.s32 0, %v390
  %v392 = vrot.slane %v385, %v391
  %v393 = vmul.f32 %v328, %v392
  %v394 = vmul.f32 %v333, %v392
  %v395 = vmul.f32 %v338, %v392
  %v396 = vmul.f32 %v343, %v392
  %v398 = vlaneseq
  %v399 = vshrl.u32 %v398, 7
  %v400 = vsub.s32 0, %v399
  %v401 = vrot.slane %v388, %v400
  %v403 = vadd.f32 %v393, %v401
  %v404 = vadd.f32 %v394, %v401
  %v405 = vadd.f32 %v395, %v401
  %v406 = vadd.f32 %v396, %v401
  %v407 = vmax.f32 %v403, 0.0
  %v408 = vmax.f32 %v404, 0.0
  %v409 = vmax.f32 %v405, 0.0
  %v410 = vmax.f32 %v406, 0.0
  %v415 = vcombine.high %v407, %v407
  %v417 = vunpack.c.l.s4 1983009808
  %v418 = vunpack.c.0.s8 %v417
  %v419 = vlaneseq
  %v420 = vshrl.u32 %v419, 7
  %v421 = vsub.s32 %v418, %v420
  %v422 = vrot.slane %v407, %v421
  %v424 = vunpack.c.l.s4 1983009808
  %v425 = vunpack.c.0.s8 %v424
  %v426 = vlaneseq
  %v427 = vshrl.u32 %v426, 7
  %v428 = vsub.s32 %v425, %v427
  %v429 = vrot.slane %v415, %v428
  %v430 = vcombine.high %v422, %v422
  %v431 = vcombine.high %v429, %v429
  %v432 = vcombine.high %v408, %v408
  %v434 = vunpack.c.l.s4 1983009808
  %v435 = vunpack.c.0.s8 %v434
  %v436 = vlaneseq
  %v437 = vshrl.u32 %v436, 7
  %v438 = vsub.s32 %v435, %v437
  %v439 = vrot.slane %v408, %v438
  %v441 = vunpack.c.l.s4 1983009808
  %v442 = vunpack.c.0.s8 %v441
  %v443 = vlaneseq
  %v444 = vshrl.u32 %v443, 7
  %v445 = vsub.s32 %v442, %v444
  %v446 = vrot.slane %v432, %v445
  %v447 = vcombine.high %v439, %v439
  %v448 = vcombine.high %v446, %v446
  %v449 = vcombine.high %v409, %v409
  %v451 = vunpack.c.l.s4 1983009808
  %v452 = vunpack.c.0.s8 %v451
  %v453 = vlaneseq
  %v454 = vshrl.u32 %v453, 7
  %v455 = vsub.s32 %v452, %v454
  %v456 = vrot.slane %v409, %v455
  %v458 = vunpack.c.l.s4 1983009808
  %v459 = vunpack.c.0.s8 %v458
  %v460 = vlaneseq
  %v461 = vshrl.u32 %v460, 7
  %v462 = vsub.s32 %v459, %v461
  %v463 = vrot.slane %v449, %v462
  %v464 = vcombine.high %v456, %v456
  %v465 = vcombine.high %v463, %v463
  %v466 = vcombine.high %v410, %v410
  %v468 = vunpack.c.l.s4 1983009808
  %v469 = vunpack.c.0.s8 %v468
  %v470 = vlaneseq
  %v471 = vshrl.u32 %v470, 7
  %v472 = vsub.s32 %v469, %v471
  %v473 = vrot.slane %v410, %v472
  %v475 = vunpack.c.l.s4 1983009808
  %v476 = vunpack.c.0.s8 %v475
  %v477 = vlaneseq
  %v478 = vshrl.u32 %v477, 7
  %v479 = vsub.s32 %v476, %v478
  %v480 = vrot.slane %v466, %v479
  %v481 = vcombine.high %v473, %v473
  %v482 = vcombine.high %v480, %v480
  %vm499 = vcmask 254976
  %v500 = vsel %vm499, %v422, -inf
  %v501 = vrot.slane %v500, 4
  %v502 = vmax.f32 %v500, %v501
  %v503 = vrot.slane %v502, 2
  %v504 = vmax.f32 %v502, %v503
  %v505 = vrot.slane %v504, 1
  %v506 = vmax.f32 %v504, %v505
  %v507 = vsel %vm499, %v430, -inf
  %v508 = vrot.slane %v507, 4
  %v509 = vmax.f32 %v507, %v508
  %v510 = vrot.slane %v509, 2
  %v511 = vmax.f32 %v509, %v510
  %v512 = vrot.slane %v511, 1
  %v513 = vmax.f32 %v511, %v512
  %v514 = vsel %vm499, %v429, -inf
  %v515 = vrot.slane %v514, 4
  %v516 = vmax.f32 %v514, %v515
  %v517 = vrot.slane %v516, 2
  %v518 = vmax.f32 %v516, %v517
  %v519 = vrot.slane %v518, 1
  %v520 = vmax.f32 %v518, %v519
  %v521 = vsel %vm499, %v431, -inf
  %v522 = vrot.slane %v521, 4
  %v523 = vmax.f32 %v521, %v522
  %v524 = vrot.slane %v523, 2
  %v525 = vmax.f32 %v523, %v524
  %v526 = vrot.slane %v525, 1
  %v527 = vmax.f32 %v525, %v526
  %v528 = vsel %vm499, %v439, -inf
  %v529 = vrot.slane %v528, 4
  %v530 = vmax.f32 %v528, %v529
  %v531 = vrot.slane %v530, 2
  %v532 = vmax.f32 %v530, %v531
  %v533 = vrot.slane %v532, 1
  %v534 = vmax.f32 %v532, %v533
  %v535 = vsel %vm499, %v447, -inf
  %v536 = vrot.slane %v535, 4
  %v537 = vmax.f32 %v535, %v536
  %v538 = vrot.slane %v537, 2
  %v539 = vmax.f32 %v537, %v538
  %v540 = vrot.slane %v539, 1
  %v541 = vmax.f32 %v539, %v540
  %v542 = vsel %vm499, %v446, -inf
  %v543 = vrot.slane %v542, 4
  %v544 = vmax.f32 %v542, %v543
  %v545 = vrot.slane %v544, 2
  %v546 = vmax.f32 %v544, %v545
  %v547 = vrot.slane %v546, 1
  %v548 = vmax.f32 %v546, %v547
  %v549 = vsel %vm499, %v448, -inf
  %v550 = vrot.slane %v549, 4
  %v551 = vmax.f32 %v549, %v550
  %v552 = vrot.slane %v551, 2
  %v553 = vmax.f32 %v551, %v552
  %v554 = vrot.slane %v553, 1
  %v555 = vmax.f32 %v553, %v554
  %v556 = vsel %vm499, %v456, -inf
  %v557 = vrot.slane %v556, 4
  %v558 = vmax.f32 %v556, %v557
  %v559 = vrot.slane %v558, 2
  %v560 = vmax.f32 %v558, %v559
  %v561 = vrot.slane %v560, 1
  %v562 = vmax.f32 %v560, %v561
  %v563 = vsel %vm499, %v464, -inf
  %v564 = vrot.slane %v563, 4
  %v565 = vmax.f32 %v563, %v564
  %v566 = vrot.slane %v565, 2
  %v567 = vmax.f32 %v565, %v566
  %v568 = vrot.slane %v567, 1
  %v569 = vmax.f32 %v567, %v568
  %v570 = vsel %vm499, %v463, -inf
  %v571 = vrot.slane %v570, 4
  %v572 = vmax.f32 %v570, %v571
  %v573 = vrot.slane %v572, 2
  %v574 = vmax.f32 %v572, %v573
  %v575 = vrot.slane %v574, 1
  %v576 = vmax.f32 %v574, %v575
  %v577 = vsel %vm499, %v465, -inf
  %v578 = vrot.slane %v577, 4
  %v579 = vmax.f32 %v577, %v578
  %v580 = vrot.slane %v579, 2
  %v581 = vmax.f32 %v579, %v580
  %v582 = vrot.slane %v581, 1
  %v583 = vmax.f32 %v581, %v582
  %v584 = vsel %vm499, %v473, -inf
  %v585 = vrot.slane %v584, 4
  %v586 = vmax.f32 %v584, %v585
  %v587 = vrot.slane %v586, 2
  %v588 = vmax.f32 %v586, %v587
  %v589 = vrot.slane %v588, 1
  %v590 = vmax.f32 %v588, %v589
  %v591 = vsel %vm499, %v481, -inf
  %v592 = vrot.slane %v591, 4
  %v593 = vmax.f32 %v591, %v592
  %v594 = vrot.slane %v593, 2
  %v595 = vmax.f32 %v593, %v594
  %v596 = vrot.slane %v595, 1
  %v597 = vmax.f32 %v595, %v596
  %v598 = vsel %vm499, %v480, -inf
  %v599 = vrot.slane %v598, 4
  %v600 = vmax.f32 %v598, %v599
  %v601 = vrot.slane %v600, 2
  %v602 = vmax.f32 %v600, %v601
  %v603 = vrot.slane %v602, 1
  %v604 = vmax.f32 %v602, %v603
  %v605 = vsel %vm499, %v482, -inf
  %v606 = vrot.slane %v605, 4
  %v607 = vmax.f32 %v605, %v606
  %v608 = vrot.slane %v607, 2
  %v609 = vmax.f32 %v607, %v608
  %v610 = vrot.slane %v609, 1
  %v611 = vmax.f32 %v609, %v610
  %612 = vst.msk [vmem:[#allocation4] sm:$0x3] %vm499, 0.0
  %613 = vst.msk [vmem:[#allocation4 + $0x10] sm:$0x3] %vm499, 0.0
  %vm630 = vcmask 1041409
  %v631 = vsel %vm630, %v513, %v506
  %vm632 = vcmask 1042434
  %v633 = vsel %vm632, %v520, %v631
  %vm634 = vcmask 1043459
  %v635 = vsel %vm634, %v527, %v633
  %vm636 = vcmask 1044484
  %v637 = vsel %vm636, %v534, %v635
  %vm638 = vcmask 1045509
  %v639 = vsel %vm638, %v541, %v637
  %vm640 = vcmask 1046534
  %v641 = vsel %vm640, %v548, %v639
  %vm642 = vcmask 1047559
  %v643 = vsel %vm642, %v555, %v641
  %v644 = vsel %vm630, %v569, %v562
  %v645 = vsel %vm632, %v576, %v644
  %v646 = vsel %vm634, %v583, %v645
  %v647 = vsel %vm636, %v590, %v646
  %v648 = vsel %vm638, %v597, %v647
  %v649 = vsel %vm640, %v604, %v648
  %v650 = vsel %vm642, %v611, %v649
  %653 = vst.msk [vmem:[#allocation4 + $0x2] sm:$0xff] %vm346, %v643
  %654 = vst.msk [vmem:[#allocation4 + $0x12] sm:$0xff] %vm346, %v650
  %655 = vst.msk [vmem:[#allocation4 + $0xa] sm:$0x3] %vm499, 0.0
  %656 = vst.msk [vmem:[#allocation4 + $0x1a] sm:$0x3] %vm499, 0.0
  %v657 = vld [vmem:[#allocation4] sm:$0xff]
  %v658 = vld [vmem:[#allocation4 + $0x10] sm:$0xff]
  %659 = vst.msk [vmem:[#allocation5] sm:$0xff] %vm346, %v657
  %660 = vst.msk [vmem:[#allocation5 + $0x10] sm:$0xff] %vm346, %v658
  %v661 = vld [vmem:[#allocation4 + $0x1] sm:$0xff]
  %v662 = vld [vmem:[#allocation4 + $0x11] sm:$0xff]
  %665 = vrot.lane.b32.xlu0 %v661, 32
  %v666 = vpop.permute.xlu0 %665
  %667 = vrot.lane.b32.xlu0 %v662, 32
  %v668 = vpop.permute.xlu0 %667
  %vm671 = vcmask 523520
  %672 = vst.msk [vmem:[#allocation5] sm:$0xff] %vm671, %v666
  %673 = vst.msk [vmem:[#allocation5 + $0x10] sm:$0xff] %vm671, %v668
  %v674 = vld [vmem:[#allocation4 + $0x2] sm:$0xff]
  %v675 = vld [vmem:[#allocation4 + $0x12] sm:$0xff]
  %678 = vrot.lane.b32.xlu0 %v674, 64
  %v679 = vpop.permute.xlu0 %678
  %680 = vrot.lane.b32.xlu0 %v675, 64
  %v681 = vpop.permute.xlu0 %680
  %vm684 = vcmask 785920
  %685 = vst.msk [vmem:[#allocation5] sm:$0xff] %vm684, %v679
  %686 = vst.msk [vmem:[#allocation5 + $0x10] sm:$0xff] %vm684, %v681
  %v687 = vld [vmem:[#allocation4 + $0x3] sm:$0xff]
  %v688 = vld [vmem:[#allocation4 + $0x13] sm:$0xff]
  %691 = vrot.lane.b32.xlu0 %v687, 96
  %v692 = vpop.permute.xlu0 %691
  %693 = vrot.lane.b32.xlu0 %v688, 96
  %v694 = vpop.permute.xlu0 %693
  %vm697 = vcmask 1048320
  %698 = vst.msk [vmem:[#allocation5] sm:$0xff] %vm697, %v692
  %699 = vst.msk [vmem:[#allocation5 + $0x10] sm:$0xff] %vm697, %v694
  %v700 = vld [vmem:[#allocation4 + $0x4] sm:$0xff]
  %v701 = vld [vmem:[#allocation4 + $0x14] sm:$0xff]
  %702 = vst.msk [vmem:[#allocation5 + $0x8] sm:$0xff] %vm346, %v700
  %703 = vst.msk [vmem:[#allocation5 + $0x18] sm:$0xff] %vm346, %v701
  %v704 = vld [vmem:[#allocation5] sm:$0xff]
  %v705 = vld [vmem:[#allocation5 + $0x8] sm:$0xff]
  %v706 = vld [vmem:[#allocation5 + $0x10] sm:$0xff]
  %v707 = vld [vmem:[#allocation5 + $0x18] sm:$0xff]
  %v708 = vld [vmem:[%s4] sm:$0xff]
  %v709 = vld [vmem:[%s4 + $0x8] sm:$0xff]
  %v710 = vld [vmem:[%s4 + $0x10] sm:$0xff]
  %v711 = vld [vmem:[%s4 + $0x18] sm:$0xff]
  %v712 = vld [vmem:[%s4 + $0x20] sm:$0xff]
  %v713 = vld [vmem:[%s4 + $0x28] sm:$0xff]
  %v714 = vld [vmem:[%s4 + $0x30] sm:$0xff]
  %v715 = vld [vmem:[%s4 + $0x38] sm:$0xff]
  %v716 = vld [vmem:[%s4 + $0x40] sm:$0xff]
  %v717 = vld [vmem:[%s4 + $0x48] sm:$0xff]
  %v718 = vld [vmem:[%s4 + $0x50] sm:$0xff]
  %v719 = vld [vmem:[%s4 + $0x58] sm:$0xff]
  %v720 = vld [vmem:[%s4 + $0x60] sm:$0xff]
  %v721 = vld [vmem:[%s4 + $0x68] sm:$0xff]
  %v722 = vld [vmem:[%s4 + $0x70] sm:$0xff]
  %v723 = vld [vmem:[%s4 + $0x78] sm:$0xff]
  %v724 = vld [vmem:[%s4 + $0x80] sm:$0xff]
  %v725 = vld [vmem:[%s4 + $0x88] sm:$0xff]
  %v726 = vld [vmem:[%s4 + $0x90] sm:$0xff]
  %v727 = vld [vmem:[%s4 + $0x98] sm:$0xff]
  %v729 = vsel %vm346, %v705, 0
  %v732 = vsel %vm346, %v707, 0
  %734 = vmatprep.subr.mxu0 0.0
  %735 = vmatpush1.msra.mxu0 %v708
  %736 = vmatprep.subr.mxu0 0.0
  %737 = vmatpush1.msra.mxu0 %v709
  %738 = vmatprep.subr.mxu0 0.0
  %739 = vmatpush1.msra.mxu0 %v710
  %740 = vmatprep.subr.mxu0 0.0
  %741 = vmatpush1.msra.mxu0 %v711
  %742 = vmatprep.subr.mxu0 0.0
  %743 = vmatpush1.msra.mxu0 %v712
  %744 = vmatprep.subr.mxu0 0.0
  %745 = vmatpush1.msra.mxu0 %v713
  %746 = vmatprep.subr.mxu0 0.0
  %747 = vmatpush1.msra.mxu0 %v714
  %748 = vmatprep.subr.mxu0 0.0
  %749 = vmatpush1.msra.mxu0 %v715
  %750 = vmatprep.subr.mxu0 0.0
  %751 = vmatpush1.msra.mxu0 %v716
  %752 = vmatprep.subr.mxu0 0.0
  %753 = vmatpush1.msra.mxu0 %v717
  %754 = vmatprep.subr.mxu0 0.0
  %755 = vmatpush1.msra.mxu0 %v718
  %756 = vmatprep.subr.mxu0 0.0
  %757 = vmatpush1.msra.mxu0 %v719
  %758 = vmatprep.subr.mxu0 0.0
  %759 = vmatpush1.msra.mxu0 %v720
  %760 = vmatprep.subr.mxu0 0.0
  %761 = vmatpush1.msra.mxu0 %v721
  %762 = vmatprep.subr.mxu0 0.0
  %763 = vmatpush1.msra.mxu0 %v722
  %764 = vmatprep.subr.mxu0 0.0
  %765 = vmatpush1.msra.mxu0 %v723
  %766 = vmatprep.subr.mxu0 0.0
  %767 = vmatpush1.msra.mxu0 %v724
  %768 = vmatprep.subr.mxu0 0.0
  %769 = vmatpush1.msra.mxu0 %v725
  %770 = vmatprep.subr.mxu0 0.0
  %771 = vmatpush1.msra.mxu0 %v726
  %772 = vmatprep.subr.mxu0 0.0
  %773 = vmatpush1.msra.mxu0 %v727
  %774 = vmatprep.subr.mxu0 0.0
  %775 = vmatpush1.msra.mxu0 0.0
  %776 = vmatprep.subr.mxu0 0.0
  %777 = vmatpush1.msra.mxu0 0.0
  %778 = vmatprep.subr.mxu0 0.0
  %779 = vmatpush1.msra.mxu0 0.0
  %780 = vmatprep.subr.mxu0 0.0
  %781 = vmatpush1.msra.mxu0 0.0
  %782 = vmatprep.subr.mxu0 0.0
  %783 = vmatpush1.msra.mxu0 0.0
  %784 = vmatprep.subr.mxu0 0.0
  %785 = vmatpush1.msra.mxu0 0.0
  %786 = vmatprep.subr.mxu0 0.0
  %787 = vmatpush1.msra.mxu0 0.0
  %788 = vmatprep.subr.mxu0 0.0
  %789 = vmatpush1.msra.mxu0 0.0
  %790 = vmatprep.subr.mxu0 0.0
  %791 = vmatpush1.msra.mxu0 0.0
  %792 = vmatprep.subr.mxu0 0.0
  %793 = vmatpush1.msra.mxu0 0.0
  %794 = vmatprep.subr.mxu0 0.0
  %795 = vmatpush1.msra.mxu0 0.0
  %796 = vmatprep.subr.mxu0 0.0
  %797 = vmatpush1.msra.mxu0 0.0
  %798 = vmatprep.mubr.f32.mxu0 %v729
  %799 = vmatmul.mubr.f32.gmra.mrb[0].mxu0 %v704
  %v800 = vpop.f32.mrb[0].mxu0
  %v801 = vadd.f32 0.0, %v800
  %v802 = vpop.f32.mrb[0].mxu0
  %803 = vmatprep.mubr.f32.mxu0 %v732
  %804 = vmatmul.mubr.f32.gmra.mrb[0].mxu0 %v706
  %v805 = vpop.f32.mrb[0].mxu0
  %v806 = vadd.f32 0.0, %v805
  %v807 = vpop.f32.mrb[0].mxu0
  %808 = vdwg.mxu0
  %vm809 = vcmask 523264
  %v810 = vsel %vm809, %v801, 0.0
  %v811 = vsel %vm809, %v806, 0.0
  %v812 = vadd.f32 %v810, %v811
  %v813 = vrot.slane %v812, 4
  %v814 = vadd.f32 %v812, %v813
  %v815 = vrot.slane %v814, 2
  %v816 = vadd.f32 %v814, %v815
  %v817 = vrot.slane %v816, 1
  %v818 = vadd.f32 %v816, %v817
  %v819 = vmul.f32 %v818, 0.0625
  %v820 = vmul.f32 %v801, %v801
  %v821 = vmul.f32 %v806, %v806
  %v822 = vsel %vm809, %v820, 0.0
  %v823 = vsel %vm809, %v821, 0.0
  %v824 = vadd.f32 %v822, %v823
  %v825 = vrot.slane %v824, 4
  %v826 = vadd.f32 %v824, %v825
  %v827 = vrot.slane %v826, 2
  %v828 = vadd.f32 %v826, %v827
  %v829 = vrot.slane %v828, 1
  %v830 = vadd.f32 %v828, %v829
  %v831 = vmul.f32 %v830, 0.0625
  %v832 = vmul.f32 %v819, %v819
  %v833 = vsub.f32 %v831, %v832
  %v834 = vmax.f32 %v833, 0.0
  %v835 = vadd.f32 %v834, 1e-05
  %v836 = vrsqrt.pop %v835
  %v837 = vld [vmem:[%s5] sm:$0x1]
  %v838 = vmul.f32 %v836, %v837
  %v839 = vld [vmem:[%s6] sm:$0x1]
  %v840 = vmul.f32 %v819, %v838
  %v841 = vsub.f32 %v839, %v840
  %v842 = vlaneseq
  %v843 = vshrl.u32 %v842, 7
  %v844 = vsub.s32 0, %v843
  %v845 = vrot.slane %v838, %v844
  %v846 = vmul.f32 %v801, %v845
  %v847 = vmul.f32 %v806, %v845
  %v849 = vlaneseq
  %v850 = vshrl.u32 %v849, 7
  %v851 = vsub.s32 0, %v850
  %v852 = vrot.slane %v841, %v851
  %v854 = vadd.f32 %v846, %v852
  %v855 = vadd.f32 %v847, %v852
  %v856 = vmax.f32 %v854, 0.0
  %v857 = vmax.f32 %v855, 0.0
  %v860 = vcombine.high %v856, %v856
  %v862 = vunpack.c.l.s4 1983009808
  %v863 = vunpack.c.0.s8 %v862
  %v864 = vlaneseq
  %v865 = vshrl.u32 %v864, 7
  %v866 = vsub.s32 %v863, %v865
  %v867 = vrot.slane %v856, %v866
  %v869 = vunpack.c.l.s4 1983009808
  %v870 = vunpack.c.0.s8 %v869
  %v871 = vlaneseq
  %v872 = vshrl.u32 %v871, 7
  %v873 = vsub.s32 %v870, %v872
  %v874 = vrot.slane %v860, %v873
  %v875 = vcombine.high %v867, %v867
  %v876 = vcombine.high %v874, %v874
  %v877 = vcombine.high %v857, %v857
  %v879 = vunpack.c.l.s4 1983009808
  %v880 = vunpack.c.0.s8 %v879
  %v881 = vlaneseq
  %v882 = vshrl.u32 %v881, 7
  %v883 = vsub.s32 %v880, %v882
  %v884 = vrot.slane %v857, %v883
  %v886 = vunpack.c.l.s4 1983009808
  %v887 = vunpack.c.0.s8 %v886
  %v888 = vlaneseq
  %v889 = vshrl.u32 %v888, 7
  %v890 = vsub.s32 %v887, %v889
  %v891 = vrot.slane %v877, %v890
  %v892 = vcombine.high %v884, %v884
  %v893 = vcombine.high %v891, %v891
  %vm902 = vcmask 517120
  %v903 = vsel %vm902, %v867, -inf
  %v904 = vrot.slane %v903, 4
  %v905 = vmax.f32 %v903, %v904
  %v906 = vrot.slane %v905, 2
  %v907 = vmax.f32 %v905, %v906
  %v908 = vrot.slane %v907, 1
  %v909 = vmax.f32 %v907, %v908
  %v910 = vsel %vm902, %v875, -inf
  %v911 = vrot.slane %v910, 4
  %v912 = vmax.f32 %v910, %v911
  %v913 = vrot.slane %v912, 2
  %v914 = vmax.f32 %v912, %v913
  %v915 = vrot.slane %v914, 1
  %v916 = vmax.f32 %v914, %v915
  %v917 = vsel %vm902, %v874, -inf
  %v918 = vrot.slane %v917, 4
  %v919 = vmax.f32 %v917, %v918
  %v920 = vrot.slane %v919, 2
  %v921 = vmax.f32 %v919, %v920
  %v922 = vrot.slane %v921, 1
  %v923 = vmax.f32 %v921, %v922
  %v924 = vsel %vm902, %v876, -inf
  %v925 = vrot.slane %v924, 4
  %v926 = vmax.f32 %v924, %v925
  %v927 = vrot.slane %v926, 2
  %v928 = vmax.f32 %v926, %v927
  %v929 = vrot.slane %v928, 1
  %v930 = vmax.f32 %v928, %v929
  %v931 = vsel %vm902, %v884, -inf
  %v932 = vrot.slane %v931, 4
  %v933 = vmax.f32 %v931, %v932
  %v934 = vrot.slane %v933, 2
  %v935 = vmax.f32 %v933, %v934
  %v936 = vrot.slane %v935, 1
  %v937 = vmax.f32 %v935, %v936
  %v938 = vsel %vm902, %v892, -inf
  %v939 = vrot.slane %v938, 4
  %v940 = vmax.f32 %v938, %v939
  %v941 = vrot.slane %v940, 2
  %v942 = vmax.f32 %v940, %v941
  %v943 = vrot.slane %v942, 1
  %v944 = vmax.f32 %v942, %v943
  %v945 = vsel %vm902, %v891, -inf
  %v946 = vrot.slane %v945, 4
  %v947 = vmax.f32 %v945, %v946
  %v948 = vrot.slane %v947, 2
  %v949 = vmax.f32 %v947, %v948
  %v950 = vrot.slane %v949, 1
  %v951 = vmax.f32 %v949, %v950
  %v952 = vsel %vm902, %v893, -inf
  %v953 = vrot.slane %v952, 4
  %v954 = vmax.f32 %v952, %v953
  %v955 = vrot.slane %v954, 2
  %v956 = vmax.f32 %v954, %v955
  %v957 = vrot.slane %v956, 1
  %v958 = vmax.f32 %v956, %v957
  %959 = vst.msk [vmem:[#allocation6] sm:$0x3] %vm902, 0.0
  %960 = vst.msk [vmem:[#allocation6 + $0x8] sm:$0x3] %vm902, 0.0
  %v969 = vsel %vm630, %v916, %v909
  %v970 = vsel %vm632, %v923, %v969
  %v971 = vsel %vm634, %v930, %v970
  %v972 = vsel %vm630, %v944, %v937
  %v973 = vsel %vm632, %v951, %v972
  %v974 = vsel %vm634, %v958, %v973
  %vm977 = vcmask 519168
  %978 = vst.msk [vmem:[#allocation6 + $0x2] sm:$0xf] %vm977, %v971
  %979 = vst.msk [vmem:[#allocation6 + $0xa] sm:$0xf] %vm977, %v974
  %980 = vst.msk [vmem:[#allocation6 + $0x6] sm:$0x3] %vm902, 0.0
  %981 = vst.msk [vmem:[#allocation6 + $0xe] sm:$0x3] %vm902, 0.0
  %v982 = vld [vmem:[#allocation6] sm:$0xf]
  %v983 = vld [vmem:[#allocation6 + $0x8] sm:$0xf]
  %v986 = vcombine.low %v982, %v983
  %988 = vst.msk [vmem:[#allocation7] sm:$0xff] %vm809, %v986
  %v989 = vld [vmem:[#allocation6 + $0x1] sm:$0xf]
  %v990 = vld [vmem:[#allocation6 + $0x9] sm:$0xf]
  %v993 = vcombine.low %v989, %v990
  %994 = vrot.lane.b32.xlu0 %v993, 64
  %v995 = vpop.permute.xlu0 %994
  %vm997 = vcmask 1048064
  %998 = vst.msk [vmem:[#allocation7] sm:$0xff] %vm997, %v995
  %v999 = vld [vmem:[#allocation6 + $0x2] sm:$0xf]
  %v1000 = vld [vmem:[#allocation6 + $0xa] sm:$0xf]
  %v1003 = vcombine.low %v999, %v1000
  %1005 = vst.msk [vmem:[#allocation7 + $0x8] sm:$0xff] %vm809, %v1003
  %v1006 = vld [vmem:[#allocation6 + $0x3] sm:$0xf]
  %v1007 = vld [vmem:[#allocation6 + $0xb] sm:$0xf]
  %v1010 = vcombine.low %v1006, %v1007
  %1011 = vrot.lane.b32.xlu0 %v1010, 64
  %v1012 = vpop.permute.xlu0 %1011
  %1014 = vst.msk [vmem:[#allocation7 + $0x8] sm:$0xff] %vm997, %v1012
  %v1015 = vld [vmem:[#allocation6 + $0x4] sm:$0xf]
  %v1016 = vld [vmem:[#allocation6 + $0xc] sm:$0xf]
  %v1019 = vcombine.low %v1015, %v1016
  %1021 = vst.msk [vmem:[#allocation7 + $0x10] sm:$0xff] %vm809, %v1019
  %v1022 = vld [vmem:[#allocation7] sm:$0xff]
  %v1023 = vld [vmem:[#allocation7 + $0x8] sm:$0xff]
  %v1024 = vld [vmem:[#allocation7 + $0x10] sm:$0xff]
  %v1025 = vld [vmem:[%s7] sm:$0xff]
  %v1026 = vld [vmem:[%s7 + $0x8] sm:$0xff]
  %v1027 = vld [vmem:[%s7 + $0x10] sm:$0xff]
  %v1028 = vld [vmem:[%s7 + $0x18] sm:$0xff]
  %v1029 = vld [vmem:[%s7 + $0x20] sm:$0xff]
  %v1030 = vld [vmem:[%s7 + $0x28] sm:$0xff]
  %v1031 = vld [vmem:[%s7 + $0x30] sm:$0xff]
  %v1032 = vld [vmem:[%s7 + $0x38] sm:$0xff]
  %v1033 = vld [vmem:[%s7 + $0x40] sm:$0xff]
  %v1034 = vld [vmem:[%s7 + $0x48] sm:$0xff]
  %v1035 = vld [vmem:[%s7 + $0x50] sm:$0xff]
  %v1036 = vld [vmem:[%s7 + $0x58] sm:$0xff]
  %v1037 = vld [vmem:[%s7 + $0x60] sm:$0xff]
  %v1038 = vld [vmem:[%s7 + $0x68] sm:$0xff]
  %v1039 = vld [vmem:[%s7 + $0x70] sm:$0xff]
  %v1040 = vld [vmem:[%s7 + $0x78] sm:$0xff]
  %v1041 = vld [vmem:[%s7 + $0x80] sm:$0xff]
  %v1042 = vld [vmem:[%s7 + $0x88] sm:$0xff]
  %v1043 = vld [vmem:[%s7 + $0x90] sm:$0xff]
  %v1044 = vld [vmem:[%s7 + $0x98] sm:$0xff]
  %v1045 = vld [vmem:[%s7 + $0xa0] sm:$0xff]
  %v1046 = vld [vmem:[%s7 + $0xa8] sm:$0xff]
  %v1047 = vld [vmem:[%s7 + $0xb0] sm:$0xff]
  %v1048 = vld [vmem:[%s7 + $0xb8] sm:$0xff]
  %v1049 = vld [vmem:[%s7 + $0xc0] sm:$0xff]
  %v1050 = vld [vmem:[%s7 + $0xc8] sm:$0xff]
  %v1051 = vld [vmem:[%s7 + $0xd0] sm:$0xff]
  %v1052 = vld [vmem:[%s7 + $0xd8] sm:$0xff]
  %v1053 = vld [vmem:[%s7 + $0xe0] sm:$0xff]
  %v1054 = vld [vmem:[%s7 + $0xe8] sm:$0xff]
  %v1055 = vld [vmem:[%s7 + $0xf0] sm:$0xff]
  %v1056 = vld [vmem:[%s7 + $0xf8] sm:$0xff]
  %v1057 = vld [vmem:[%s7 + $0x100] sm:$0xff]
  %v1058 = vld [vmem:[%s7 + $0x108] sm:$0xff]
  %v1059 = vld [vmem:[%s7 + $0x110] sm:$0xff]
  %v1060 = vld [vmem:[%s7 + $0x118] sm:$0xff]
  %v1061 = vld [vmem:[%s7 + $0x120] sm:$0xff]
  %v1062 = vld [vmem:[%s7 + $0x128] sm:$0xff]
  %v1063 = vld [vmem:[%s7 + $0x130] sm:$0xff]
  %v1064 = vld [vmem:[%s7 + $0x138] sm:$0xff]
  %v1066 = vsel %vm809, %v1024, 0
  %1068 = vmatprep.subr.mxu0 0.0
  %1069 = vmatpush1.msra.mxu0 %v1025
  %1070 = vmatprep.subr.mxu0 0.0
  %1071 = vmatpush1.msra.mxu0 %v1026
  %1072 = vmatprep.subr.mxu0 0.0
  %1073 = vmatpush1.msra.mxu0 %v1027
  %1074 = vmatprep.subr.mxu0 0.0
  %1075 = vmatpush1.msra.mxu0 %v1028
  %1076 = vmatprep.subr.mxu0 0.0
  %1077 = vmatpush1.msra.mxu0 %v1029
  %1078 = vmatprep.subr.mxu0 0.0
  %1079 = vmatpush1.msra.mxu0 %v1030
  %1080 = vmatprep.subr.mxu0 0.0
  %1081 = vmatpush1.msra.mxu0 %v1031
  %1082 = vmatprep.subr.mxu0 0.0
  %1083 = vmatpush1.msra.mxu0 %v1032
  %1084 = vmatprep.subr.mxu0 0.0
  %1085 = vmatpush1.msra.mxu0 %v1033
  %1086 = vmatprep.subr.mxu0 0.0
  %1087 = vmatpush1.msra.mxu0 %v1034
  %1088 = vmatprep.subr.mxu0 0.0
  %1089 = vmatpush1.msra.mxu0 %v1035
  %1090 = vmatprep.subr.mxu0 0.0
  %1091 = vmatpush1.msra.mxu0 %v1036
  %1092 = vmatprep.subr.mxu0 0.0
  %1093 = vmatpush1.msra.mxu0 %v1037
  %1094 = vmatprep.subr.mxu0 0.0
  %1095 = vmatpush1.msra.mxu0 %v1038
  %1096 = vmatprep.subr.mxu0 0.0
  %1097 = vmatpush1.msra.mxu0 %v1039
  %1098 = vmatprep.subr.mxu0 0.0
  %1099 = vmatpush1.msra.mxu0 %v1040
  %1100 = vmatprep.subr.mxu0 0.0
  %1101 = vmatpush1.msra.mxu0 %v1041
  %1102 = vmatprep.subr.mxu0 0.0
  %1103 = vmatpush1.msra.mxu0 %v1042
  %1104 = vmatprep.subr.mxu0 0.0
  %1105 = vmatpush1.msra.mxu0 %v1043
  %1106 = vmatprep.subr.mxu0 0.0
  %1107 = vmatpush1.msra.mxu0 %v1044
  %1108 = vmatprep.subr.mxu0 0.0
  %1109 = vmatpush1.msra.mxu0 %v1045
  %1110 = vmatprep.subr.mxu0 0.0
  %1111 = vmatpush1.msra.mxu0 %v1046
  %1112 = vmatprep.subr.mxu0 0.0
  %1113 = vmatpush1.msra.mxu0 %v1047
  %1114 = vmatprep.subr.mxu0 0.0
  %1115 = vmatpush1.msra.mxu0 %v1048
  %1116 = vmatprep.subr.mxu0 0.0
  %1117 = vmatpush1.msra.mxu0 %v1049
  %1118 = vmatprep.subr.mxu0 0.0
  %1119 = vmatpush1.msra.mxu0 %v1050
  %1120 = vmatprep.subr.mxu0 0.0
  %1121 = vmatpush1.msra.mxu0 %v1051
  %1122 = vmatprep.subr.mxu0 0.0
  %1123 = vmatpush1.msra.mxu0 %v1052
  %1124 = vmatprep.subr.mxu0 0.0
  %1125 = vmatpush1.msra.mxu0 %v1053
  %1126 = vmatprep.subr.mxu0 0.0
  %1127 = vmatpush1.msra.mxu0 %v1054
  %1128 = vmatprep.subr.mxu0 0.0
  %1129 = vmatpush1.msra.mxu0 %v1055
  %1130 = vmatprep.subr.mxu0 0.0
  %1131 = vmatpush1.msra.mxu0 %v1056
  %1132 = vmatprep.mubr.f32.mxu0 %v1023
  %1133 = vmatmul.mubr.f32.gmra.mrb[0].mxu0 %v1022
  %v1134 = vpop.f32.mrb[0].mxu0
  %v1135 = vadd.f32 0.0, %v1134
  %v1136 = vpop.f32.mrb[0].mxu0
  %1137 = vdwg.mxu0
  %1138 = vmatprep.subr.mxu0 0.0
  %1139 = vmatpush1.msra.mxu0 %v1057
  %1140 = vmatprep.subr.mxu0 0.0
  %1141 = vmatpush1.msra.mxu0 %v1058
  %1142 = vmatprep.subr.mxu0 0.0
  %1143 = vmatpush1.msra.mxu0 %v1059
  %1144 = vmatprep.subr.mxu0 0.0
  %1145 = vmatpush1.msra.mxu0 %v1060
  %1146 = vmatprep.subr.mxu0 0.0
  %1147 = vmatpush1.msra.mxu0 %v1061
  %1148 = vmatprep.subr.mxu0 0.0
  %1149 = vmatpush1.msra.mxu0 %v1062
  %1150 = vmatprep.subr.mxu0 0.0
  %1151 = vmatpush1.msra.mxu0 %v1063
  %1152 = vmatprep.subr.mxu0 0.0
  %1153 = vmatpush1.msra.mxu0 %v1064
  %1154 = vmatprep.subr.mxu0 0.0
  %1155 = vmatpush1.msra.mxu0 0.0
  %1156 = vmatprep.subr.mxu0 0.0
  %1157 = vmatpush1.msra.mxu0 0.0
  %1158 = vmatprep.subr.mxu0 0.0
  %1159 = vmatpush1.msra.mxu0 0.0
  %1160 = vmatprep.subr.mxu0 0.0
  %1161 = vmatpush1.msra.mxu0 0.0
  %1162 = vmatprep.subr.mxu0 0.0
  %1163 = vmatpush1.msra.mxu0 0.0
  %1164 = vmatprep.subr.mxu0 0.0
  %1165 = vmatpush1.msra.mxu0 0.0
  %1166 = vmatprep.subr.mxu0 0.0
  %1167 = vmatpush1.msra.mxu0 0.0
  %1168 = vmatprep.subr.mxu0 0.0
  %1169 = vmatpush1.msra.mxu0 0.0
  %1170 = vmatprep.subr.mxu0 0.0
  %1171 = vmatpush1.msra.mxu0 0.0
  %1172 = vmatprep.subr.mxu0 0.0
  %1173 = vmatpush1.msra.mxu0 0.0
  %1174 = vmatprep.subr.mxu0 0.0
  %1175 = vmatpush1.msra.mxu0 0.0
  %1176 = vmatprep.subr.mxu0 0.0
  %1177 = vmatpush1.msra.mxu0 0.0
  %1178 = vmatprep.subr.mxu0 0.0
  %1179 = vmatpush1.msra.mxu0 0.0
  %1180 = vmatprep.subr.mxu0 0.0
  %1181 = vmatpush1.msra.mxu0 0.0
  %1182 = vmatprep.subr.mxu0 0.0
  %1183 = vmatpush1.msra.mxu0 0.0
  %1184 = vmatprep.subr.mxu0 0.0
  %1185 = vmatpush1.msra.mxu0 0.0
  %1186 = vmatprep.subr.mxu0 0.0
  %1187 = vmatpush1.msra.mxu0 0.0
  %1188 = vmatprep.subr.mxu0 0.0
  %1189 = vmatpush1.msra.mxu0 0.0
  %1190 = vmatprep.subr.mxu0 0.0
  %1191 = vmatpush1.msra.mxu0 0.0
  %1192 = vmatprep.subr.mxu0 0.0
  %1193 = vmatpush1.msra.mxu0 0.0
  %1194 = vmatprep.subr.mxu0 0.0
  %1195 = vmatpush1.msra.mxu0 0.0
  %1196 = vmatprep.subr.mxu0 0.0
  %1197 = vmatpush1.msra.mxu0 0.0
  %1198 = vmatprep.subr.mxu0 0.0
  %1199 = vmatpush1.msra.mxu0 0.0
  %1200 = vmatprep.subr.mxu0 0.0
  %1201 = vmatpush1.msra.mxu0 0.0
  %1202 = vmatprep.mubr.f32.mxu0 0.0
  %1203 = vmatmul.mubr.f32.gmra.mrb[0].mxu0 %v1066
  %v1204 = vpop.f32.mrb[0].mxu0
  %v1205 = vadd.f32 %v1135, %v1204
  %v1206 = vpop.f32.mrb[0].mxu0
  %1207 = vdwg.mxu0
  %v1208 = vrot.slane %v1205, 4
  %v1209 = vadd.f32 %v1205, %v1208
  %v1210 = vrot.slane %v1209, 2
  %v1211 = vadd.f32 %v1209, %v1210
  %v1212 = vrot.slane %v1211, 1
  %v1213 = vadd.f32 %v1211, %v1212
  %v1214 = vmul.f32 %v1213, 0.125
  %v1215 = vmul.f32 %v1205, %v1205
  %v1216 = vrot.slane %v1215, 4
  %v1217 = vadd.f32 %v1215, %v1216
  %v1218 = vrot.slane %v1217, 2
  %v1219 = vadd.f32 %v1217, %v1218
  %v1220 = vrot.slane %v1219, 1
  %v1221 = vadd.f32 %v1219, %v1220
  %v1222 = vmul.f32 %v1221, 0.125
  %v1223 = vmul.f32 %v1214, %v1214
  %v1224 = vsub.f32 %v1222, %v1223
  %v1225 = vmax.f32 %v1224, 0.0
  %v1226 = vadd.f32 %v1225, 1e-05
  %v1227 = vrsqrt.pop %v1226
  %v1228 = vld [vmem:[%s8] sm:$0x1]
  %v1229 = vmul.f32 %v1227, %v1228
  %v1230 = vld [vmem:[%s9] sm:$0x1]
  %v1231 = vmul.f32 %v1214, %v1229
  %v1232 = vsub.f32 %v1230, %v1231
  %v1233 = vlaneseq
  %v1234 = vshrl.u32 %v1233, 7
  %v1235 = vsub.s32 0, %v1234
  %v1236 = vrot.slane %v1229, %v1235
  %v1237 = vmul.f32 %v1205, %v1236
  %v1239 = vlaneseq
  %v1240 = vshrl.u32 %v1239, 7
  %v1241 = vsub.s32 0, %v1240
  %v1242 = vrot.slane %v1232, %v1241
  %v1244 = vadd.f32 %v1237, %v1242
  %v1245 = vmax.f32 %v1244, 0.0
  %v1247 = vcombine.high %v1245, %v1245
  %1249 = vst [vmem:[#allocation8] sm:$0x1] 0.0
  %1250 = vst [vmem:[#allocation8 + $0x8] sm:$0x1] 0.0
  %1251 = vst [vmem:[#allocation8 + $0x1] sm:$0xf] %v1245
  %1252 = vst [vmem:[#allocation8 + $0x9] sm:$0xf] %v1247
  %1253 = vst [vmem:[#allocation8 + $0x5] sm:$0x1] 0.0
  %1254 = vst [vmem:[#allocation8 + $0xd] sm:$0x1] 0.0
  %v1255 = vld [vmem:[#allocation8] sm:$0xf]
  %v1256 = vld [vmem:[#allocation8 + $0x8] sm:$0xf]
  %v1257 = vld [vmem:[#allocation8 + $0x1] sm:$0xf]
  %v1258 = vld [vmem:[#allocation8 + $0x9] sm:$0xf]
  %v1259 = vld [vmem:[#allocation8 + $0x2] sm:$0xf]
  %v1260 = vld [vmem:[#allocation8 + $0xa] sm:$0xf]
  %v1261 = vld [vmem:[%s10] sm:$0xff]
  %v1262 = vld [vmem:[%s10 + $0x8] sm:$0xff]
  %v1263 = vld [vmem:[%s10 + $0x10] sm:$0xff]
  %v1264 = vld [vmem:[%s10 + $0x18] sm:$0xff]
  %v1265 = vld [vmem:[%s10 + $0x20] sm:$0xff]
  %v1266 = vld [vmem:[%s10 + $0x28] sm:$0xff]
  %v1267 = vld [vmem:[%s10 + $0x30] sm:$0xff]
  %v1268 = vld [vmem:[%s10 + $0x38] sm:$0xff]
  %v1269 = vld [vmem:[%s10 + $0x40] sm:$0xff]
  %v1270 = vld [vmem:[%s10 + $0x48] sm:$0xff]
  %v1271 = vld [vmem:[%s10 + $0x50] sm:$0xff]
  %v1272 = vld [vmem:[%s10 + $0x58] sm:$0xff]
  %v1273 = vld [vmem:[%s10 + $0x60] sm:$0xff]
  %v1274 = vld [vmem:[%s10 + $0x68] sm:$0xff]
  %v1275 = vld [vmem:[%s10 + $0x70] sm:$0xff]
  %v1276 = vld [vmem:[%s10 + $0x78] sm:$0xff]
  %s1277 = scalar_lea.vmem %s10, 128
  %v1278 = vld [vmem:[%s1277] sm:$0xff]
  %v1279 = vld [vmem:[%s1277 + $0x8] sm:$0xff]
  %v1280 = vld [vmem:[%s1277 + $0x10] sm:$0xff]
  %v1281 = vld [vmem:[%s1277 + $0x18] sm:$0xff]
  %v1282 = vld [vmem:[%s1277 + $0x20] sm:$0xff]
  %v1283 = vld [vmem:[%s1277 + $0x28] sm:$0xff]
  %v1284 = vld [vmem:[%s1277 + $0x30] sm:$0xff]
  %v1285 = vld [vmem:[%s1277 + $0x38] sm:$0xff]
  %v1286 = vld [vmem:[%s1277 + $0x40] sm:$0xff]
  %v1287 = vld [vmem:[%s1277 + $0x48] sm:$0xff]
  %v1288 = vld [vmem:[%s1277 + $0x50] sm:$0xff]
  %v1289 = vld [vmem:[%s1277 + $0x58] sm:$0xff]
  %v1290 = vld [vmem:[%s1277 + $0x60] sm:$0xff]
  %v1291 = vld [vmem:[%s1277 + $0x68] sm:$0xff]
  %v1292 = vld [vmem:[%s1277 + $0x70] sm:$0xff]
  %v1293 = vld [vmem:[%s1277 + $0x78] sm:$0xff]
  %v1296 = vcombine.low %v1257, %v1258
  %1298 = vmatprep.subr.mxu0 0.0
  %1299 = vmatpush1.msra.mxu0 %v1278
  %1300 = vmatprep.subr.mxu0 0.0
  %1301 = vmatpush1.msra.mxu0 %v1279
  %1302 = vmatprep.subr.mxu0 0.0
  %1303 = vmatpush1.msra.mxu0 %v1280
  %1304 = vmatprep.subr.mxu0 0.0
  %1305 = vmatpush1.msra.mxu0 %v1281
  %1306 = vmatprep.subr.mxu0 0.0
  %1307 = vmatpush1.msra.mxu0 %v1282
  %1308 = vmatprep.subr.mxu0 0.0
  %1309 = vmatpush1.msra.mxu0 %v1283
  %1310 = vmatprep.subr.mxu0 0.0
  %1311 = vmatpush1.msra.mxu0 %v1284
  %1312 = vmatprep.subr.mxu0 0.0
  %1313 = vmatpush1.msra.mxu0 %v1285
  %1314 = vmatprep.subr.mxu0 0.0
  %1315 = vmatpush1.msra.mxu0 %v1286
  %1316 = vmatprep.subr.mxu0 0.0
  %1317 = vmatpush1.msra.mxu0 %v1287
  %1318 = vmatprep.subr.mxu0 0.0
  %1319 = vmatpush1.msra.mxu0 %v1288
  %1320 = vmatprep.subr.mxu0 0.0
  %1321 = vmatpush1.msra.mxu0 %v1289
  %1322 = vmatprep.subr.mxu0 0.0
  %1323 = vmatpush1.msra.mxu0 %v1290
  %1324 = vmatprep.subr.mxu0 0.0
  %1325 = vmatpush1.msra.mxu0 %v1291
  %1326 = vmatprep.subr.mxu0 0.0
  %1327 = vmatpush1.msra.mxu0 %v1292
  %1328 = vmatprep.subr.mxu0 0.0
  %1329 = vmatpush1.msra.mxu0 %v1293
  %1330 = vmatprep.subr.mxu0 0.0
  %1331 = vmatpush1.msra.mxu0 0.0
  %1332 = vmatprep.subr.mxu0 0.0
  %1333 = vmatpush1.msra.mxu0 0.0
  %1334 = vmatprep.subr.mxu0 0.0
  %1335 = vmatpush1.msra.mxu0 0.0
  %1336 = vmatprep.subr.mxu0 0.0
  %1337 = vmatpush1.msra.mxu0 0.0
  %1338 = vmatprep.subr.mxu0 0.0
  %1339 = vmatpush1.msra.mxu0 0.0
  %1340 = vmatprep.subr.mxu0 0.0
  %1341 = vmatpush1.msra.mxu0 0.0
  %1342 = vmatprep.subr.mxu0 0.0
  %1343 = vmatpush1.msra.mxu0 0.0
  %1344 = vmatprep.subr.mxu0 0.0
  %1345 = vmatpush1.msra.mxu0 0.0
  %1346 = vmatprep.subr.mxu0 0.0
  %1347 = vmatpush1.msra.mxu0 0.0
  %1348 = vmatprep.subr.mxu0 0.0
  %1349 = vmatpush1.msra.mxu0 0.0
  %1350 = vmatprep.subr.mxu0 0.0
  %1351 = vmatpush1.msra.mxu0 0.0
  %1352 = vmatprep.subr.mxu0 0.0
  %1353 = vmatpush1.msra.mxu0 0.0
  %1354 = vmatprep.subr.mxu0 0.0
  %1355 = vmatpush1.msra.mxu0 0.0
  %1356 = vmatprep.subr.mxu0 0.0
  %1357 = vmatpush1.msra.mxu0 0.0
  %1358 = vmatprep.subr.mxu0 0.0
  %1359 = vmatpush1.msra.mxu0 0.0
  %1360 = vmatprep.subr.mxu0 0.0
  %1361 = vmatpush1.msra.mxu0 0.0
  %1362 = vmatprep.mubr.f32.mxu0 0.0
  %1363 = vmatmul.mubr.f32.gmra.mrb[0].mxu0 %v1296
  %v1364 = vpop.f32.mrb[0].mxu0
  %v1365 = vadd.f32 0.0, %v1364
  %v1366 = vpop.f32.mrb[0].mxu0
  %1367 = vdwg.mxu0
  %v1370 = vcombine.low %v1255, %v1256
  %1372 = vmatprep.subr.mxu0 0.0
  %1373 = vmatpush1.msra.mxu0 %v1261
  %1374 = vmatprep.subr.mxu0 0.0
  %1375 = vmatpush1.msra.mxu0 %v1262
  %1376 = vmatprep.subr.mxu0 0.0
  %1377 = vmatpush1.msra.mxu0 %v1263
  %1378 = vmatprep.subr.mxu0 0.0
  %1379 = vmatpush1.msra.mxu0 %v1264
  %1380 = vmatprep.subr.mxu0 0.0
  %1381 = vmatpush1.msra.mxu0 %v1265
  %1382 = vmatprep.subr.mxu0 0.0
  %1383 = vmatpush1.msra.mxu0 %v1266
  %1384 = vmatprep.subr.mxu0 0.0
  %1385 = vmatpush1.msra.mxu0 %v1267
  %1386 = vmatprep.subr.mxu0 0.0
  %1387 = vmatpush1.msra.mxu0 %v1268
  %1388 = vmatprep.subr.mxu0 0.0
  %1389 = vmatpush1.msra.mxu0 %v1269
  %1390 = vmatprep.subr.mxu0 0.0
  %1391 = vmatpush1.msra.mxu0 %v1270
  %1392 = vmatprep.subr.mxu0 0.0
  %1393 = vmatpush1.msra.mxu0 %v1271
  %1394 = vmatprep.subr.mxu0 0.0
  %1395 = vmatpush1.msra.mxu0 %v1272
  %1396 = vmatprep.subr.mxu0 0.0
  %1397 = vmatpush1.msra.mxu0 %v1273
  %1398 = vmatprep.subr.mxu0 0.0
  %1399 = vmatpush1.msra.mxu0 %v1274
  %1400 = vmatprep.subr.mxu0 0.0
  %1401 = vmatpush1.msra.mxu0 %v1275
  %1402 = vmatprep.subr.mxu0 0.0
  %1403 = vmatpush1.msra.mxu0 %v1276
  %1404 = vmatprep.subr.mxu0 0.0
  %1405 = vmatpush1.msra.mxu0 0.0
  %1406 = vmatprep.subr.mxu0 0.0
  %1407 = vmatpush1.msra.mxu0 0.0
  %1408 = vmatprep.subr.mxu0 0.0
  %1409 = vmatpush1.msra.mxu0 0.0
  %1410 = vmatprep.subr.mxu0 0.0
  %1411 = vmatpush1.msra.mxu0 0.0
  %1412 = vmatprep.subr.mxu0 0.0
  %1413 = vmatpush1.msra.mxu0 0.0
  %1414 = vmatprep.subr.mxu0 0.0
  %1415 = vmatpush1.msra.mxu0 0.0
  %1416 = vmatprep.subr.mxu0 0.0
  %1417 = vmatpush1.msra.mxu0 0.0
  %1418 = vmatprep.subr.mxu0 0.0
  %1419 = vmatpush1.msra.mxu0 0.0
  %1420 = vmatprep.subr.mxu0 0.0
  %1421 = vmatpush1.msra.mxu0 0.0
  %1422 = vmatprep.subr.mxu0 0.0
  %1423 = vmatpush1.msra.mxu0 0.0
  %1424 = vmatprep.subr.mxu0 0.0
  %1425 = vmatpush1.msra.mxu0 0.0
  %1426 = vmatprep.subr.mxu0 0.0
  %1427 = vmatpush1.msra.mxu0 0.0
  %1428 = vmatprep.subr.mxu0 0.0
  %1429 = vmatpush1.msra.mxu0 0.0
  %1430 = vmatprep.subr.mxu0 0.0
  %1431 = vmatpush1.msra.mxu0 0.0
  %1432 = vmatprep.subr.mxu0 0.0
  %1433 = vmatpush1.msra.mxu0 0.0
  %1434 = vmatprep.subr.mxu0 0.0
  %1435 = vmatpush1.msra.mxu0 0.0
  %1436 = vmatprep.mubr.f32.mxu0 0.0
  %1437 = vmatmul.mubr.f32.gmra.mrb[0].mxu0 %v1370
  %v1438 = vpop.f32.mrb[0].mxu0
  %v1439 = vadd.f32 %v1365, %v1438
  %v1440 = vpop.f32.mrb[0].mxu0
  %1441 = vdwg.mxu0
  %s1442 = scalar_lea.vmem %s10, 256
  %v1443 = vld [vmem:[%s1442] sm:$0xff]
  %v1444 = vld [vmem:[%s1442 + $0x8] sm:$0xff]
  %v1445 = vld [vmem:[%s1442 + $0x10] sm:$0xff]
  %v1446 = vld [vmem:[%s1442 + $0x18] sm:$0xff]
  %v1447 = vld [vmem:[%s1442 + $0x20] sm:$0xff]
  %v1448 = vld [vmem:[%s1442 + $0x28] sm:$0xff]
  %v1449 = vld [vmem:[%s1442 + $0x30] sm:$0xff]
  %v1450 = vld [vmem:[%s1442 + $0x38] sm:$0xff]
  %v1451 = vld [vmem:[%s1442 + $0x40] sm:$0xff]
  %v1452 = vld [vmem:[%s1442 + $0x48] sm:$0xff]
  %v1453 = vld [vmem:[%s1442 + $0x50] sm:$0xff]
  %v1454 = vld [vmem:[%s1442 + $0x58] sm:$0xff]
  %v1455 = vld [vmem:[%s1442 + $0x60] sm:$0xff]
  %v1456 = vld [vmem:[%s1442 + $0x68] sm:$0xff]
  %v1457 = vld [vmem:[%s1442 + $0x70] sm:$0xff]
  %v1458 = vld [vmem:[%s1442 + $0x78] sm:$0xff]
  %v1461 = vcombine.low %v1259, %v1260
  %1463 = vmatprep.subr.mxu0 0.0
  %1464 = vmatpush1.msra.mxu0 %v1443
  %1465 = vmatprep.subr.mxu0 0.0
  %1466 = vmatpush1.msra.mxu0 %v1444
  %1467 = vmatprep.subr.mxu0 0.0
  %1468 = vmatpush1.msra.mxu0 %v1445
  %1469 = vmatprep.subr.mxu0 0.0
  %1470 = vmatpush1.msra.mxu0 %v1446
  %1471 = vmatprep.subr.mxu0 0.0
  %1472 = vmatpush1.msra.mxu0 %v1447
  %1473 = vmatprep.subr.mxu0 0.0
  %1474 = vmatpush1.msra.mxu0 %v1448
  %1475 = vmatprep.subr.mxu0 0.0
  %1476 = vmatpush1.msra.mxu0 %v1449
  %1477 = vmatprep.subr.mxu0 0.0
  %1478 = vmatpush1.msra.mxu0 %v1450
  %1479 = vmatprep.subr.mxu0 0.0
  %1480 = vmatpush1.msra.mxu0 %v1451
  %1481 = vmatprep.subr.mxu0 0.0
  %1482 = vmatpush1.msra.mxu0 %v1452
  %1483 = vmatprep.subr.mxu0 0.0
  %1484 = vmatpush1.msra.mxu0 %v1453
  %1485 = vmatprep.subr.mxu0 0.0
  %1486 = vmatpush1.msra.mxu0 %v1454
  %1487 = vmatprep.subr.mxu0 0.0
  %1488 = vmatpush1.msra.mxu0 %v1455
  %1489 = vmatprep.subr.mxu0 0.0
  %1490 = vmatpush1.msra.mxu0 %v1456
  %1491 = vmatprep.subr.mxu0 0.0
  %1492 = vmatpush1.msra.mxu0 %v1457
  %1493 = vmatprep.subr.mxu0 0.0
  %1494 = vmatpush1.msra.mxu0 %v1458
  %1495 = vmatprep.subr.mxu0 0.0
  %1496 = vmatpush1.msra.mxu0 0.0
  %1497 = vmatprep.subr.mxu0 0.0
  %1498 = vmatpush1.msra.mxu0 0.0
  %1499 = vmatprep.subr.mxu0 0.0
  %1500 = vmatpush1.msra.mxu0 0.0
  %1501 = vmatprep.subr.mxu0 0.0
  %1502 = vmatpush1.msra.mxu0 0.0
  %1503 = vmatprep.subr.mxu0 0.0
  %1504 = vmatpush1.msra.mxu0 0.0
  %1505 = vmatprep.subr.mxu0 0.0
  %1506 = vmatpush1.msra.mxu0 0.0
  %1507 = vmatprep.subr.mxu0 0.0
  %1508 = vmatpush1.msra.mxu0 0.0
  %1509 = vmatprep.subr.mxu0 0.0
  %1510 = vmatpush1.msra.mxu0 0.0
  %1511 = vmatprep.subr.mxu0 0.0
  %1512 = vmatpush1.msra.mxu0 0.0
  %1513 = vmatprep.subr.mxu0 0.0
  %1514 = vmatpush1.msra.mxu0 0.0
  %1515 = vmatprep.subr.mxu0 0.0
  %1516 = vmatpush1.msra.mxu0 0.0
  %1517 = vmatprep.subr.mxu0 0.0
  %1518 = vmatpush1.msra.mxu0 0.0
  %1519 = vmatprep.subr.mxu0 0.0
  %1520 = vmatpush1.msra.mxu0 0.0
  %1521 = vmatprep.subr.mxu0 0.0
  %1522 = vmatpush1.msra.mxu0 0.0
  %1523 = vmatprep.subr.mxu0 0.0
  %1524 = vmatpush1.msra.mxu0 0.0
  %1525 = vmatprep.subr.mxu0 0.0
  %1526 = vmatpush1.msra.mxu0 0.0
  %1527 = vmatprep.mubr.f32.mxu0 0.0
  %1528 = vmatmul.mubr.f32.gmra.mrb[0].mxu0 %v1461
  %v1529 = vpop.f32.mrb[0].mxu0
  %v1530 = vadd.f32 0.0, %v1529
  %v1531 = vpop.f32.mrb[0].mxu0
  %1532 = vdwg.mxu0
  %v1533 = vadd.f32 %v1439, %v1530
  %v1534 = vld [vmem:[%s11] sm:$0xff]
  %v1535 = vld [vmem:[%s11 + $0x8] sm:$0xff]
  %v1536 = vld [vmem:[%s11 + $0x10] sm:$0xff]
  %v1537 = vld [vmem:[%s11 + $0x18] sm:$0xff]
  %v1538 = vld [vmem:[%s11 + $0x20] sm:$0xff]
  %v1539 = vld [vmem:[%s11 + $0x28] sm:$0xff]
  %v1540 = vld [vmem:[%s11 + $0x30] sm:$0xff]
  %v1541 = vld [vmem:[%s11 + $0x38] sm:$0xff]
  %v1542 = vld [vmem:[%s11 + $0x40] sm:$0xff]
  %v1543 = vld [vmem:[%s11 + $0x48] sm:$0xff]
  %v1544 = vld [vmem:[%s11 + $0x50] sm:$0xff]
  %v1545 = vld [vmem:[%s11 + $0x58] sm:$0xff]
  %v1546 = vld [vmem:[%s11 + $0x60] sm:$0xff]
  %v1547 = vld [vmem:[%s11 + $0x68] sm:$0xff]
  %v1548 = vld [vmem:[%s11 + $0x70] sm:$0xff]
  %v1549 = vld [vmem:[%s11 + $0x78] sm:$0xff]
  %s1550 = scalar_lea.vmem %s11, 128
  %v1551 = vld [vmem:[%s1550] sm:$0xff]
  %v1552 = vld [vmem:[%s1550 + $0x8] sm:$0xff]
  %v1553 = vld [vmem:[%s1550 + $0x10] sm:$0xff]
  %v1554 = vld [vmem:[%s1550 + $0x18] sm:$0xff]
  %v1555 = vld [vmem:[%s1550 + $0x20] sm:$0xff]
  %v1556 = vld [vmem:[%s1550 + $0x28] sm:$0xff]
  %v1557 = vld [vmem:[%s1550 + $0x30] sm:$0xff]
  %v1558 = vld [vmem:[%s1550 + $0x38] sm:$0xff]
  %v1559 = vld [vmem:[%s1550 + $0x40] sm:$0xff]
  %v1560 = vld [vmem:[%s1550 + $0x48] sm:$0xff]
  %v1561 = vld [vmem:[%s1550 + $0x50] sm:$0xff]
  %v1562 = vld [vmem:[%s1550 + $0x58] sm:$0xff]
  %v1563 = vld [vmem:[%s1550 + $0x60] sm:$0xff]
  %v1564 = vld [vmem:[%s1550 + $0x68] sm:$0xff]
  %v1565 = vld [vmem:[%s1550 + $0x70] sm:$0xff]
  %v1566 = vld [vmem:[%s1550 + $0x78] sm:$0xff]
  %1567 = vmatprep.subr.mxu0 0.0
  %1568 = vmatpush1.msra.mxu0 %v1551
  %1569 = vmatprep.subr.mxu0 0.0
  %1570 = vmatpush1.msra.mxu0 %v1552
  %1571 = vmatprep.subr.mxu0 0.0
  %1572 = vmatpush1.msra.mxu0 %v1553
  %1573 = vmatprep.subr.mxu0 0.0
  %1574 = vmatpush1.msra.mxu0 %v1554
  %1575 = vmatprep.subr.mxu0 0.0
  %1576 = vmatpush1.msra.mxu0 %v1555
  %1577 = vmatprep.subr.mxu0 0.0
  %1578 = vmatpush1.msra.mxu0 %v1556
  %1579 = vmatprep.subr.mxu0 0.0
  %1580 = vmatpush1.msra.mxu0 %v1557
  %1581 = vmatprep.subr.mxu0 0.0
  %1582 = vmatpush1.msra.mxu0 %v1558
  %1583 = vmatprep.subr.mxu0 0.0
  %1584 = vmatpush1.msra.mxu0 %v1559
  %1585 = vmatprep.subr.mxu0 0.0
  %1586 = vmatpush1.msra.mxu0 %v1560
  %1587 = vmatprep.subr.mxu0 0.0
  %1588 = vmatpush1.msra.mxu0 %v1561
  %1589 = vmatprep.subr.mxu0 0.0
  %1590 = vmatpush1.msra.mxu0 %v1562
  %1591 = vmatprep.subr.mxu0 0.0
  %1592 = vmatpush1.msra.mxu0 %v1563
  %1593 = vmatprep.subr.mxu0 0.0
  %1594 = vmatpush1.msra.mxu0 %v1564
  %1595 = vmatprep.subr.mxu0 0.0
  %1596 = vmatpush1.msra.mxu0 %v1565
  %1597 = vmatprep.subr.mxu0 0.0
  %1598 = vmatpush1.msra.mxu0 %v1566
  %1599 = vmatprep.subr.mxu0 0.0
  %1600 = vmatpush1.msra.mxu0 0.0
  %1601 = vmatprep.subr.mxu0 0.0
  %1602 = vmatpush1.msra.mxu0 0.0
  %1603 = vmatprep.subr.mxu0 0.0
  %1604 = vmatpush1.msra.mxu0 0.0
  %1605 = vmatprep.subr.mxu0 0.0
  %1606 = vmatpush1.msra.mxu0 0.0
  %1607 = vmatprep.subr.mxu0 0.0
  %1608 = vmatpush1.msra.mxu0 0.0
  %1609 = vmatprep.subr.mxu0 0.0
  %1610 = vmatpush1.msra.mxu0 0.0
  %1611 = vmatprep.subr.mxu0 0.0
  %1612 = vmatpush1.msra.mxu0 0.0
  %1613 = vmatprep.subr.mxu0 0.0
  %1614 = vmatpush1.msra.mxu0 0.0
  %1615 = vmatprep.subr.mxu0 0.0
  %1616 = vmatpush1.msra.mxu0 0.0
  %1617 = vmatprep.subr.mxu0 0.0
  %1618 = vmatpush1.msra.mxu0 0.0
  %1619 = vmatprep.subr.mxu0 0.0
  %1620 = vmatpush1.msra.mxu0 0.0
  %1621 = vmatprep.subr.mxu0 0.0
  %1622 = vmatpush1.msra.mxu0 0.0
  %1623 = vmatprep.subr.mxu0 0.0
  %1624 = vmatpush1.msra.mxu0 0.0
  %1625 = vmatprep.subr.mxu0 0.0
  %1626 = vmatpush1.msra.mxu0 0.0
  %1627 = vmatprep.subr.mxu0 0.0
  %1628 = vmatpush1.msra.mxu0 0.0
  %1629 = vmatprep.subr.mxu0 0.0
  %1630 = vmatpush1.msra.mxu0 0.0
  %1631 = vmatprep.mubr.f32.mxu0 0.0
  %1632 = vmatmul.mubr.f32.gmra.mrb[0].mxu0 %v1461
  %v1633 = vpop.f32.mrb[0].mxu0
  %v1634 = vadd.f32 0.0, %v1633
  %v1635 = vpop.f32.mrb[0].mxu0
  %1636 = vdwg.mxu0
  %1637 = vmatprep.subr.mxu0 0.0
  %1638 = vmatpush1.msra.mxu0 %v1534
  %1639 = vmatprep.subr.mxu0 0.0
  %1640 = vmatpush1.msra.mxu0 %v1535
  %1641 = vmatprep.subr.mxu0 0.0
  %1642 = vmatpush1.msra.mxu0 %v1536
  %1643 = vmatprep.subr.mxu0 0.0
  %1644 = vmatpush1.msra.mxu0 %v1537
  %1645 = vmatprep.subr.mxu0 0.0
  %1646 = vmatpush1.msra.mxu0 %v1538
  %1647 = vmatprep.subr.mxu0 0.0
  %1648 = vmatpush1.msra.mxu0 %v1539
  %1649 = vmatprep.subr.mxu0 0.0
  %1650 = vmatpush1.msra.mxu0 %v1540
  %1651 = vmatprep.subr.mxu0 0.0
  %1652 = vmatpush1.msra.mxu0 %v1541
  %1653 = vmatprep.subr.mxu0 0.0
  %1654 = vmatpush1.msra.mxu0 %v1542
  %1655 = vmatprep.subr.mxu0 0.0
  %1656 = vmatpush1.msra.mxu0 %v1543
  %1657 = vmatprep.subr.mxu0 0.0
  %1658 = vmatpush1.msra.mxu0 %v1544
  %1659 = vmatprep.subr.mxu0 0.0
  %1660 = vmatpush1.msra.mxu0 %v1545
  %1661 = vmatprep.subr.mxu0 0.0
  %1662 = vmatpush1.msra.mxu0 %v1546
  %1663 = vmatprep.subr.mxu0 0.0
  %1664 = vmatpush1.msra.mxu0 %v1547
  %1665 = vmatprep.subr.mxu0 0.0
  %1666 = vmatpush1.msra.mxu0 %v1548
  %1667 = vmatprep.subr.mxu0 0.0
  %1668 = vmatpush1.msra.mxu0 %v1549
  %1669 = vmatprep.subr.mxu0 0.0
  %1670 = vmatpush1.msra.mxu0 0.0
  %1671 = vmatprep.subr.mxu0 0.0
  %1672 = vmatpush1.msra.mxu0 0.0
  %1673 = vmatprep.subr.mxu0 0.0
  %1674 = vmatpush1.msra.mxu0 0.0
  %1675 = vmatprep.subr.mxu0 0.0
  %1676 = vmatpush1.msra.mxu0 0.0
  %1677 = vmatprep.subr.mxu0 0.0
  %1678 = vmatpush1.msra.mxu0 0.0
  %1679 = vmatprep.subr.mxu0 0.0
  %1680 = vmatpush1.msra.mxu0 0.0
  %1681 = vmatprep.subr.mxu0 0.0
  %1682 = vmatpush1.msra.mxu0 0.0
  %1683 = vmatprep.subr.mxu0 0.0
  %1684 = vmatpush1.msra.mxu0 0.0
  %1685 = vmatprep.subr.mxu0 0.0
  %1686 = vmatpush1.msra.mxu0 0.0
  %1687 = vmatprep.subr.mxu0 0.0
  %1688 = vmatpush1.msra.mxu0 0.0
  %1689 = vmatprep.subr.mxu0 0.0
  %1690 = vmatpush1.msra.mxu0 0.0
  %1691 = vmatprep.subr.mxu0 0.0
  %1692 = vmatpush1.msra.mxu0 0.0
  %1693 = vmatprep.subr.mxu0 0.0
  %1694 = vmatpush1.msra.mxu0 0.0
  %1695 = vmatprep.subr.mxu0 0.0
  %1696 = vmatpush1.msra.mxu0 0.0
  %1697 = vmatprep.subr.mxu0 0.0
  %1698 = vmatpush1.msra.mxu0 0.0
  %1699 = vmatprep.subr.mxu0 0.0
  %1700 = vmatpush1.msra.mxu0 0.0
  %1701 = vmatprep.mubr.f32.mxu0 0.0
  %1702 = vmatmul.mubr.f32.gmra.mrb[0].mxu0 %v1296
  %v1703 = vpop.f32.mrb[0].mxu0
  %v1704 = vadd.f32 %v1634, %v1703
  %v1705 = vpop.f32.mrb[0].mxu0
  %1706 = vdwg.mxu0
  %v1707 = vsel %vm809, %v1533, 0.0
  %v1708 = vrot.slane %v1707, 4
  %v1709 = vadd.f32 %v1707, %v1708
  %v1710 = vrot.slane %v1709, 2
  %v1711 = vadd.f32 %v1709, %v1710
  %v1712 = vrot.slane %v1711, 1
  %v1713 = vadd.f32 %v1711, %v1712
  %v1714 = vsel %vm809, %v1704, 0.0
  %v1715 = vrot.slane %v1714, 4
  %v1716 = vadd.f32 %v1714, %v1715
  %v1717 = vrot.slane %v1716, 2
  %v1718 = vadd.f32 %v1716, %v1717
  %v1719 = vrot.slane %v1718, 1
  %v1720 = vadd.f32 %v1718, %v1719
  %v1721 = vadd.f32 %v1713, %v1720
  %v1722 = vmul.f32 %v1721, 0.0625
  %v1723 = vmul.f32 %v1533, %v1533
  %v1724 = vsel %vm809, %v1723, 0.0
  %v1725 = vrot.slane %v1724, 4
  %v1726 = vadd.f32 %v1724, %v1725
  %v1727 = vrot.slane %v1726, 2
  %v1728 = vadd.f32 %v1726, %v1727
  %v1729 = vrot.slane %v1728, 1
  %v1730 = vadd.f32 %v1728, %v1729
  %v1731 = vmul.f32 %v1704, %v1704
  %v1732 = vsel %vm809, %v1731, 0.0
  %v1733 = vrot.slane %v1732, 4
  %v1734 = vadd.f32 %v1732, %v1733
  %v1735 = vrot.slane %v1734, 2
  %v1736 = vadd.f32 %v1734, %v1735
  %v1737 = vrot.slane %v1736, 1
  %v1738 = vadd.f32 %v1736, %v1737
  %v1739 = vadd.f32 %v1730, %v1738
  %v1740 = vmul.f32 %v1739, 0.0625
  %v1741 = vmul.f32 %v1722, %v1722
  %v1742 = vsub.f32 %v1740, %v1741
  %v1743 = vmax.f32 %v1742, 0.0
  %v1744 = vadd.f32 %v1743, 1e-05
  %v1745 = vrsqrt.pop %v1744
  %v1746 = vld [vmem:[%s12] sm:$0x1]
  %v1747 = vmul.f32 %v1745, %v1746
  %v1748 = vld [vmem:[%s13] sm:$0x1]
  %v1749 = vmul.f32 %v1722, %v1747
  %v1750 = vsub.f32 %v1748, %v1749
  %v1751 = vlaneseq
  %v1752 = vshrl.u32 %v1751, 7
  %v1753 = vsub.s32 0, %v1752
  %v1754 = vrot.slane %v1747, %v1753
  %v1755 = vmul.f32 %v1533, %v1754
  %v1757 = vlaneseq
  %v1758 = vshrl.u32 %v1757, 7
  %v1759 = vsub.s32 0, %v1758
  %v1760 = vrot.slane %v1750, %v1759
  %v1762 = vadd.f32 %v1755, %v1760
  %v1763 = vmax.f32 %v1762, 0.0
  %v1764 = vmul.f32 %v1704, %v1754
  %v1765 = vadd.f32 %v1764, %v1760
  %v1766 = vmax.f32 %v1765, 0.0
  %v1767 = vlaneseq
  %v1768 = vshrl.u32 %v1767, 7
  %vm1769 = vcmp.eq.s32.totalorder %v1768, 0
  %v1771 = vcombine.high %v1763, %v1763
  %v1773 = vunpack.c.l.s4 1966171168
  %v1774 = vunpack.c.0.s8 %v1773
  %v1775 = vlaneseq
  %v1776 = vshrl.u32 %v1775, 7
  %v1777 = vsub.s32 %v1774, %v1776
  %v1778 = vrot.slane %v1763, %v1777
  %v1780 = vunpack.c.l.s4 1966171168
  %v1781 = vunpack.c.0.s8 %v1780
  %v1782 = vlaneseq
  %v1783 = vshrl.u32 %v1782, 7
  %v1784 = vsub.s32 %v1781, %v1783
  %v1785 = vrot.slane %v1771, %v1784
  %v1786 = vcombine.high %v1778, %v1778
  %v1787 = vcombine.high %v1785, %v1785
  %v1789 = vunpack.c.l.s4 1966171168
  %v1790 = vunpack.c.0.s8 %v1789
  %v1791 = vlaneseq
  %v1792 = vshrl.u32 %v1791, 7
  %v1793 = vsub.s32 %v1790, %v1792
  %v1794 = vrot.slane %v1778, %v1793
  %v1796 = vunpack.c.l.s4 1966171168
  %v1797 = vunpack.c.0.s8 %v1796
  %v1798 = vlaneseq
  %v1799 = vshrl.u32 %v1798, 7
  %v1800 = vsub.s32 %v1797, %v1799
  %v1801 = vrot.slane %v1785, %v1800
  %v1803 = vunpack.c.l.s4 1966171168
  %v1804 = vunpack.c.0.s8 %v1803
  %v1805 = vlaneseq
  %v1806 = vshrl.u32 %v1805, 7
  %v1807 = vsub.s32 %v1804, %v1806
  %v1808 = vrot.slane %v1786, %v1807
  %v1810 = vunpack.c.l.s4 1966171168
  %v1811 = vunpack.c.0.s8 %v1810
  %v1812 = vlaneseq
  %v1813 = vshrl.u32 %v1812, 7
  %v1814 = vsub.s32 %v1811, %v1813
  %v1815 = vrot.slane %v1787, %v1814
  %v1816 = vcombine.high %v1794, %v1794
  %v1817 = vcombine.high %v1801, %v1801
  %v1818 = vcombine.high %v1808, %v1808
  %v1819 = vcombine.high %v1815, %v1815
  %v1821 = vcombine.high %v1766, %v1766
  %v1823 = vunpack.c.l.s4 1966171168
  %v1824 = vunpack.c.0.s8 %v1823
  %v1825 = vlaneseq
  %v1826 = vshrl.u32 %v1825, 7
  %v1827 = vsub.s32 %v1824, %v1826
  %v1828 = vrot.slane %v1766, %v1827
  %v1830 = vunpack.c.l.s4 1966171168
  %v1831 = vunpack.c.0.s8 %v1830
  %v1832 = vlaneseq
  %v1833 = vshrl.u32 %v1832, 7
  %v1834 = vsub.s32 %v1831, %v1833
  %v1835 = vrot.slane %v1821, %v1834
  %v1836 = vcombine.high %v1828, %v1828
  %v1837 = vcombine.high %v1835, %v1835
  %v1839 = vunpack.c.l.s4 1966171168
  %v1840 = vunpack.c.0.s8 %v1839
  %v1841 = vlaneseq
  %v1842 = vshrl.u32 %v1841, 7
  %v1843 = vsub.s32 %v1840, %v1842
  %v1844 = vrot.slane %v1828, %v1843
  %v1846 = vunpack.c.l.s4 1966171168
  %v1847 = vunpack.c.0.s8 %v1846
  %v1848 = vlaneseq
  %v1849 = vshrl.u32 %v1848, 7
  %v1850 = vsub.s32 %v1847, %v1849
  %v1851 = vrot.slane %v1835, %v1850
  %v1853 = vunpack.c.l.s4 1966171168
  %v1854 = vunpack.c.0.s8 %v1853
  %v1855 = vlaneseq
  %v1856 = vshrl.u32 %v1855, 7
  %v1857 = vsub.s32 %v1854, %v1856
  %v1858 = vrot.slane %v1836, %v1857
  %v1860 = vunpack.c.l.s4 1966171168
  %v1861 = vunpack.c.0.s8 %v1860
  %v1862 = vlaneseq
  %v1863 = vshrl.u32 %v1862, 7
  %v1864 = vsub.s32 %v1861, %v1863
  %v1865 = vrot.slane %v1837, %v1864
  %v1866 = vcombine.high %v1844, %v1844
  %v1867 = vcombine.high %v1851, %v1851
  %v1868 = vcombine.high %v1858, %v1858
  %v1869 = vcombine.high %v1865, %v1865
  %v1870 = vlaneseq
  %v1871 = vshrl.u32 %v1870, 7
  %v1872 = vsub.s32 0, %v1871
  %v1873 = vrot.slane %v1794, %v1872
  %v1874 = vlaneseq
  %v1875 = vshrl.u32 %v1874, 7
  %v1876 = vsub.s32 0, %v1875
  %v1877 = vrot.slane %v1808, %v1876
  %v1878 = vlaneseq
  %v1879 = vshrl.u32 %v1878, 7
  %v1880 = vsub.s32 0, %v1879
  %v1881 = vrot.slane %v1816, %v1880
  %v1882 = vlaneseq
  %v1883 = vshrl.u32 %v1882, 7
  %v1884 = vsub.s32 0, %v1883
  %v1885 = vrot.slane %v1818, %v1884
  %v1886 = vlaneseq
  %v1887 = vshrl.u32 %v1886, 7
  %v1888 = vsub.s32 0, %v1887
  %v1889 = vrot.slane %v1801, %v1888
  %v1890 = vlaneseq
  %v1891 = vshrl.u32 %v1890, 7
  %v1892 = vsub.s32 0, %v1891
  %v1893 = vrot.slane %v1815, %v1892
  %v1894 = vlaneseq
  %v1895 = vshrl.u32 %v1894, 7
  %v1896 = vsub.s32 0, %v1895
  %v1897 = vrot.slane %v1817, %v1896
  %v1898 = vlaneseq
  %v1899 = vshrl.u32 %v1898, 7
  %v1900 = vsub.s32 0, %v1899
  %v1901 = vrot.slane %v1819, %v1900
  %v1910 = vlaneseq
  %v1911 = vshrl.u32 %v1910, 7
  %v1912 = vsub.s32 0, %v1911
  %v1913 = vrot.slane %v1844, %v1912
  %v1914 = vlaneseq
  %v1915 = vshrl.u32 %v1914, 7
  %v1916 = vsub.s32 0, %v1915
  %v1917 = vrot.slane %v1858, %v1916
  %v1918 = vlaneseq
  %v1919 = vshrl.u32 %v1918, 7
  %v1920 = vsub.s32 0, %v1919
  %v1921 = vrot.slane %v1866, %v1920
  %v1922 = vlaneseq
  %v1923 = vshrl.u32 %v1922, 7
  %v1924 = vsub.s32 0, %v1923
  %v1925 = vrot.slane %v1868, %v1924
  %v1926 = vlaneseq
  %v1927 = vshrl.u32 %v1926, 7
  %v1928 = vsub.s32 0, %v1927
  %v1929 = vrot.slane %v1851, %v1928
  %v1930 = vlaneseq
  %v1931 = vshrl.u32 %v1930, 7
  %v1932 = vsub.s32 0, %v1931
  %v1933 = vrot.slane %v1865, %v1932
  %v1934 = vlaneseq
  %v1935 = vshrl.u32 %v1934, 7
  %v1936 = vsub.s32 0, %v1935
  %v1937 = vrot.slane %v1867, %v1936
  %v1938 = vlaneseq
  %v1939 = vshrl.u32 %v1938, 7
  %v1940 = vsub.s32 0, %v1939
  %v1941 = vrot.slane %v1869, %v1940
  %v1950 = vsel %vm1769, %v1873, %v1913
  %v1951 = vsel %vm1769, %v1877, %v1917
  %v1952 = vsel %vm1769, %v1881, %v1921
  %v1953 = vsel %vm1769, %v1885, %v1925
  %v1954 = vsel %vm1769, %v1889, %v1929
  %v1955 = vsel %vm1769, %v1893, %v1933
  %v1956 = vsel %vm1769, %v1897, %v1937
  %v1957 = vsel %vm1769, %v1901, %v1941
  %vm1958 = vcmask 516096
  %1959 = vst.msk [vmem:[#allocation9] sm:$0x1] %vm1958, 0.0
  %1960 = vst.msk [vmem:[#allocation9 + $0x10] sm:$0x1] %vm1958, 0.0
  %v1969 = vcombine.low %v1950, %v1951
  %v1970 = vcombine.low %v1952, %v1953
  %v1972 = vunpack.c.l.s4 1983009808
  %v1973 = vunpack.c.0.s8 %v1972
  %v1974 = vlaneseq
  %v1975 = vshrl.u32 %v1974, 7
  %v1976 = vsub.s32 %v1973, %v1975
  %v1977 = vrot.slane %v1969, %v1976
  %v1979 = vunpack.c.l.s4 1983009808
  %v1980 = vunpack.c.0.s8 %v1979
  %v1981 = vlaneseq
  %v1982 = vshrl.u32 %v1981, 7
  %v1983 = vsub.s32 %v1980, %v1982
  %v1984 = vrot.slane %v1970, %v1983
  %v1985 = vcombine.low %v1977, %v1984
  %v1986 = vcombine.low %v1954, %v1955
  %v1987 = vcombine.low %v1956, %v1957
  %v1989 = vunpack.c.l.s4 1983009808
  %v1990 = vunpack.c.0.s8 %v1989
  %v1991 = vlaneseq
  %v1992 = vshrl.u32 %v1991, 7
  %v1993 = vsub.s32 %v1990, %v1992
  %v1994 = vrot.slane %v1986, %v1993
  %v1996 = vunpack.c.l.s4 1983009808
  %v1997 = vunpack.c.0.s8 %v1996
  %v1998 = vlaneseq
  %v1999 = vshrl.u32 %v1998, 7
  %v2000 = vsub.s32 %v1997, %v1999
  %v2001 = vrot.slane %v1987, %v2000
  %v2002 = vcombine.low %v1994, %v2001
  %2005 = vst.msk [vmem:[#allocation9 + $0x1] sm:$0xff] %vm809, %v1985
  %2006 = vst.msk [vmem:[#allocation9 + $0x11] sm:$0xff] %vm809, %v2002
  %2007 = vst.msk [vmem:[#allocation9 + $0x9] sm:$0x1] %vm1958, 0.0
  %2008 = vst.msk [vmem:[#allocation9 + $0x19] sm:$0x1] %vm1958, 0.0
  %v2009 = vld [vmem:[#allocation9] sm:$0xff]
  %v2010 = vld [vmem:[#allocation9 + $0x10] sm:$0xff]
  %v2011 = vld [vmem:[#allocation9 + $0x1] sm:$0xff]
  %v2012 = vld [vmem:[#allocation9 + $0x11] sm:$0xff]
  %v2013 = vld [vmem:[#allocation9 + $0x2] sm:$0xff]
  %v2014 = vld [vmem:[#allocation9 + $0x12] sm:$0xff]
  %v2015 = vld [vmem:[%s14] sm:$0xff]
  %v2016 = vld [vmem:[%s14 + $0x8] sm:$0xff]
  %v2017 = vld [vmem:[%s14 + $0x10] sm:$0xff]
  %v2018 = vld [vmem:[%s14 + $0x18] sm:$0xff]
  %v2019 = vld [vmem:[%s14 + $0x20] sm:$0xff]
  %v2020 = vld [vmem:[%s14 + $0x28] sm:$0xff]
  %v2021 = vld [vmem:[%s14 + $0x30] sm:$0xff]
  %v2022 = vld [vmem:[%s14 + $0x38] sm:$0xff]
  %s2023 = scalar_lea.vmem %s14, 64
  %v2024 = vld [vmem:[%s2023] sm:$0xff]
  %v2025 = vld [vmem:[%s2023 + $0x8] sm:$0xff]
  %v2026 = vld [vmem:[%s2023 + $0x10] sm:$0xff]
  %v2027 = vld [vmem:[%s2023 + $0x18] sm:$0xff]
  %v2028 = vld [vmem:[%s2023 + $0x20] sm:$0xff]
  %v2029 = vld [vmem:[%s2023 + $0x28] sm:$0xff]
  %v2030 = vld [vmem:[%s2023 + $0x30] sm:$0xff]
  %v2031 = vld [vmem:[%s2023 + $0x38] sm:$0xff]
  %v2033 = vsel %vm809, %v2011, 0
  %v2036 = vsel %vm809, %v2012, 0
  %2038 = vmatprep.subr.mxu0 0.0
  %2039 = vmatpush1.msra.mxu0 %v2024
  %2040 = vmatprep.subr.mxu0 0.0
  %2041 = vmatpush1.msra.mxu0 %v2025
  %2042 = vmatprep.subr.mxu0 0.0
  %2043 = vmatpush1.msra.mxu0 %v2026
  %2044 = vmatprep.subr.mxu0 0.0
  %2045 = vmatpush1.msra.mxu0 %v2027
  %2046 = vmatprep.subr.mxu0 0.0
  %2047 = vmatpush1.msra.mxu0 %v2028
  %2048 = vmatprep.subr.mxu0 0.0
  %2049 = vmatpush1.msra.mxu0 %v2029
  %2050 = vmatprep.subr.mxu0 0.0
  %2051 = vmatpush1.msra.mxu0 %v2030
  %2052 = vmatprep.subr.mxu0 0.0
  %2053 = vmatpush1.msra.mxu0 %v2031
  %2054 = vmatprep.subr.mxu0 0.0
  %2055 = vmatpush1.msra.mxu0 0.0
  %2056 = vmatprep.subr.mxu0 0.0
  %2057 = vmatpush1.msra.mxu0 0.0
  %2058 = vmatprep.subr.mxu0 0.0
  %2059 = vmatpush1.msra.mxu0 0.0
  %2060 = vmatprep.subr.mxu0 0.0
  %2061 = vmatpush1.msra.mxu0 0.0
  %2062 = vmatprep.subr.mxu0 0.0
  %2063 = vmatpush1.msra.mxu0 0.0
  %2064 = vmatprep.subr.mxu0 0.0
  %2065 = vmatpush1.msra.mxu0 0.0
  %2066 = vmatprep.subr.mxu0 0.0
  %2067 = vmatpush1.msra.mxu0 0.0
  %2068 = vmatprep.subr.mxu0 0.0
  %2069 = vmatpush1.msra.mxu0 0.0
  %2070 = vmatprep.subr.mxu0 0.0
  %2071 = vmatpush1.msra.mxu0 0.0
  %2072 = vmatprep.subr.mxu0 0.0
  %2073 = vmatpush1.msra.mxu0 0.0
  %2074 = vmatprep.subr.mxu0 0.0
  %2075 = vmatpush1.msra.mxu0 0.0
  %2076 = vmatprep.subr.mxu0 0.0
  %2077 = vmatpush1.msra.mxu0 0.0
  %2078 = vmatprep.subr.mxu0 0.0
  %2079 = vmatpush1.msra.mxu0 0.0
  %2080 = vmatprep.subr.mxu0 0.0
  %2081 = vmatpush1.msra.mxu0 0.0
  %2082 = vmatprep.subr.mxu0 0.0
  %2083 = vmatpush1.msra.mxu0 0.0
  %2084 = vmatprep.subr.mxu0 0.0
  %2085 = vmatpush1.msra.mxu0 0.0
  %2086 = vmatprep.subr.mxu0 0.0
  %2087 = vmatpush1.msra.mxu0 0.0
  %2088 = vmatprep.subr.mxu0 0.0
  %2089 = vmatpush1.msra.mxu0 0.0
  %2090 = vmatprep.subr.mxu0 0.0
  %2091 = vmatpush1.msra.mxu0 0.0
  %2092 = vmatprep.subr.mxu0 0.0
  %2093 = vmatpush1.msra.mxu0 0.0
  %2094 = vmatprep.subr.mxu0 0.0
  %2095 = vmatpush1.msra.mxu0 0.0
  %2096 = vmatprep.subr.mxu0 0.0
  %2097 = vmatpush1.msra.mxu0 0.0
  %2098 = vmatprep.subr.mxu0 0.0
  %2099 = vmatpush1.msra.mxu0 0.0
  %2100 = vmatprep.subr.mxu0 0.0
  %2101 = vmatpush1.msra.mxu0 0.0
  %2102 = vmatprep.mubr.f32.mxu0 0.0
  %2103 = vmatmul.mubr.f32.gmra.mrb[0].mxu0 %v2033
  %v2104 = vpop.f32.mrb[0].mxu0
  %v2105 = vadd.f32 0.0, %v2104
  %v2106 = vpop.f32.mrb[0].mxu0
  %2107 = vmatprep.mubr.f32.mxu0 0.0
  %2108 = vmatmul.mubr.f32.gmra.mrb[0].mxu0 %v2036
  %v2109 = vpop.f32.mrb[0].mxu0
  %v2110 = vadd.f32 0.0, %v2109
  %v2111 = vpop.f32.mrb[0].mxu0
  %2112 = vdwg.mxu0
  %v2114 = vsel %vm809, %v2009, 0
  %v2117 = vsel %vm809, %v2010, 0
  %2119 = vmatprep.subr.mxu0 0.0
  %2120 = vmatpush1.msra.mxu0 %v2015
  %2121 = vmatprep.subr.mxu0 0.0
  %2122 = vmatpush1.msra.mxu0 %v2016
  %2123 = vmatprep.subr.mxu0 0.0
  %2124 = vmatpush1.msra.mxu0 %v2017
  %2125 = vmatprep.subr.mxu0 0.0
  %2126 = vmatpush1.msra.mxu0 %v2018
  %2127 = vmatprep.subr.mxu0 0.0
  %2128 = vmatpush1.msra.mxu0 %v2019
  %2129 = vmatprep.subr.mxu0 0.0
  %2130 = vmatpush1.msra.mxu0 %v2020
  %2131 = vmatprep.subr.mxu0 0.0
  %2132 = vmatpush1.msra.mxu0 %v2021
  %2133 = vmatprep.subr.mxu0 0.0
  %2134 = vmatpush1.msra.mxu0 %v2022
  %2135 = vmatprep.subr.mxu0 0.0
  %2136 = vmatpush1.msra.mxu0 0.0
  %2137 = vmatprep.subr.mxu0 0.0
  %2138 = vmatpush1.msra.mxu0 0.0
  %2139 = vmatprep.subr.mxu0 0.0
  %2140 = vmatpush1.msra.mxu0 0.0
  %2141 = vmatprep.subr.mxu0 0.0
  %2142 = vmatpush1.msra.mxu0 0.0
  %2143 = vmatprep.subr.mxu0 0.0
  %2144 = vmatpush1.msra.mxu0 0.0
  %2145 = vmatprep.subr.mxu0 0.0
  %2146 = vmatpush1.msra.mxu0 0.0
  %2147 = vmatprep.subr.mxu0 0.0
  %2148 = vmatpush1.msra.mxu0 0.0
  %2149 = vmatprep.subr.mxu0 0.0
  %2150 = vmatpush1.msra.mxu0 0.0
  %2151 = vmatprep.subr.mxu0 0.0
  %2152 = vmatpush1.msra.mxu0 0.0
  %2153 = vmatprep.subr.mxu0 0.0
  %2154 = vmatpush1.msra.mxu0 0.0
  %2155 = vmatprep.subr.mxu0 0.0
  %2156 = vmatpush1.msra.mxu0 0.0
  %2157 = vmatprep.subr.mxu0 0.0
  %2158 = vmatpush1.msra.mxu0 0.0
  %2159 = vmatprep.subr.mxu0 0.0
  %2160 = vmatpush1.msra.mxu0 0.0
  %2161 = vmatprep.subr.mxu0 0.0
  %2162 = vmatpush1.msra.mxu0 0.0
  %2163 = vmatprep.subr.mxu0 0.0
  %2164 = vmatpush1.msra.mxu0 0.0
  %2165 = vmatprep.subr.mxu0 0.0
  %2166 = vmatpush1.msra.mxu0 0.0
  %2167 = vmatprep.subr.mxu0 0.0
  %2168 = vmatpush1.msra.mxu0 0.0
  %2169 = vmatprep.subr.mxu0 0.0
  %2170 = vmatpush1.msra.mxu0 0.0
  %2171 = vmatprep.subr.mxu0 0.0
  %2172 = vmatpush1.msra.mxu0 0.0
  %2173 = vmatprep.subr.mxu0 0.0
  %2174 = vmatpush1.msra.mxu0 0.0
  %2175 = vmatprep.subr.mxu0 0.0
  %2176 = vmatpush1.msra.mxu0 0.0
  %2177 = vmatprep.subr.mxu0 0.0
  %2178 = vmatpush1.msra.mxu0 0.0
  %2179 = vmatprep.subr.mxu0 0.0
  %2180 = vmatpush1.msra.mxu0 0.0
  %2181 = vmatprep.subr.mxu0 0.0
  %2182 = vmatpush1.msra.mxu0 0.0
  %2183 = vmatprep.mubr.f32.mxu0 0.0
  %2184 = vmatmul.mubr.f32.gmra.mrb[0].mxu0 %v2114
  %v2185 = vpop.f32.mrb[0].mxu0
  %v2186 = vadd.f32 %v2105, %v2185
  %v2187 = vpop.f32.mrb[0].mxu0
  %2188 = vmatprep.mubr.f32.mxu0 0.0
  %2189 = vmatmul.mubr.f32.gmra.mrb[0].mxu0 %v2117
  %v2190 = vpop.f32.mrb[0].mxu0
  %v2191 = vadd.f32 %v2110, %v2190
  %v2192 = vpop.f32.mrb[0].mxu0
  %2193 = vdwg.mxu0
  %s2194 = scalar_lea.vmem %s14, 128
  %v2195 = vld [vmem:[%s2194] sm:$0xff]
  %v2196 = vld [vmem:[%s2194 + $0x8] sm:$0xff]
  %v2197 = vld [vmem:[%s2194 + $0x10] sm:$0xff]
  %v2198 = vld [vmem:[%s2194 + $0x18] sm:$0xff]
  %v2199 = vld [vmem:[%s2194 + $0x20] sm:$0xff]
  %v2200 = vld [vmem:[%s2194 + $0x28] sm:$0xff]
  %v2201 = vld [vmem:[%s2194 + $0x30] sm:$0xff]
  %v2202 = vld [vmem:[%s2194 + $0x38] sm:$0xff]
  %v2204 = vsel %vm809, %v2013, 0
  %v2207 = vsel %vm809, %v2014, 0
  %2209 = vmatprep.subr.mxu0 0.0
  %2210 = vmatpush1.msra.mxu0 %v2195
  %2211 = vmatprep.subr.mxu0 0.0
  %2212 = vmatpush1.msra.mxu0 %v2196
  %2213 = vmatprep.subr.mxu0 0.0
  %2214 = vmatpush1.msra.mxu0 %v2197
  %2215 = vmatprep.subr.mxu0 0.0
  %2216 = vmatpush1.msra.mxu0 %v2198
  %2217 = vmatprep.subr.mxu0 0.0
  %2218 = vmatpush1.msra.mxu0 %v2199
  %2219 = vmatprep.subr.mxu0 0.0
  %2220 = vmatpush1.msra.mxu0 %v2200
  %2221 = vmatprep.subr.mxu0 0.0
  %2222 = vmatpush1.msra.mxu0 %v2201
  %2223 = vmatprep.subr.mxu0 0.0
  %2224 = vmatpush1.msra.mxu0 %v2202
  %2225 = vmatprep.subr.mxu0 0.0
  %2226 = vmatpush1.msra.mxu0 0.0
  %2227 = vmatprep.subr.mxu0 0.0
  %2228 = vmatpush1.msra.mxu0 0.0
  %2229 = vmatprep.subr.mxu0 0.0
  %2230 = vmatpush1.msra.mxu0 0.0
  %2231 = vmatprep.subr.mxu0 0.0
  %2232 = vmatpush1.msra.mxu0 0.0
  %2233 = vmatprep.subr.mxu0 0.0
  %2234 = vmatpush1.msra.mxu0 0.0
  %2235 = vmatprep.subr.mxu0 0.0
  %2236 = vmatpush1.msra.mxu0 0.0
  %2237 = vmatprep.subr.mxu0 0.0
  %2238 = vmatpush1.msra.mxu0 0.0
  %2239 = vmatprep.subr.mxu0 0.0
  %2240 = vmatpush1.msra.mxu0 0.0
  %2241 = vmatprep.subr.mxu0 0.0
  %2242 = vmatpush1.msra.mxu0 0.0
  %2243 = vmatprep.subr.mxu0 0.0
  %2244 = vmatpush1.msra.mxu0 0.0
  %2245 = vmatprep.subr.mxu0 0.0
  %2246 = vmatpush1.msra.mxu0 0.0
  %2247 = vmatprep.subr.mxu0 0.0
  %2248 = vmatpush1.msra.mxu0 0.0
  %2249 = vmatprep.subr.mxu0 0.0
  %2250 = vmatpush1.msra.mxu0 0.0
  %2251 = vmatprep.subr.mxu0 0.0
  %2252 = vmatpush1.msra.mxu0 0.0
  %2253 = vmatprep.subr.mxu0 0.0
  %2254 = vmatpush1.msra.mxu0 0.0
  %2255 = vmatprep.subr.mxu0 0.0
  %2256 = vmatpush1.msra.mxu0 0.0
  %2257 = vmatprep.subr.mxu0 0.0
  %2258 = vmatpush1.msra.mxu0 0.0
  %2259 = vmatprep.subr.mxu0 0.0
  %2260 = vmatpush1.msra.mxu0 0.0
  %2261 = vmatprep.subr.mxu0 0.0
  %2262 = vmatpush1.msra.mxu0 0.0
  %2263 = vmatprep.subr.mxu0 0.0
  %2264 = vmatpush1.msra.mxu0 0.0
  %2265 = vmatprep.subr.mxu0 0.0
  %2266 = vmatpush1.msra.mxu0 0.0
  %2267 = vmatprep.subr.mxu0 0.0
  %2268 = vmatpush1.msra.mxu0 0.0
  %2269 = vmatprep.subr.mxu0 0.0
  %2270 = vmatpush1.msra.mxu0 0.0
  %2271 = vmatprep.subr.mxu0 0.0
  %2272 = vmatpush1.msra.mxu0 0.0
  %2273 = vmatprep.mubr.f32.mxu0 0.0
  %2274 = vmatmul.mubr.f32.gmra.mrb[0].mxu0 %v2204
  %v2275 = vpop.f32.mrb[0].mxu0
  %v2276 = vadd.f32 0.0, %v2275
  %v2277 = vpop.f32.mrb[0].mxu0
  %2278 = vmatprep.mubr.f32.mxu0 0.0
  %2279 = vmatmul.mubr.f32.gmra.mrb[0].mxu0 %v2207
  %v2280 = vpop.f32.mrb[0].mxu0
  %v2281 = vadd.f32 0.0, %v2280
  %v2282 = vpop.f32.mrb[0].mxu0
  %2283 = vdwg.mxu0
  %v2284 = vadd.f32 %v2186, %v2276
  %v2285 = vadd.f32 %v2191, %v2281
  %v2286 = vld [vmem:[%s15] sm:$0xff]
  %v2287 = vld [vmem:[%s15 + $0x8] sm:$0xff]
  %v2288 = vld [vmem:[%s15 + $0x10] sm:$0xff]
  %v2289 = vld [vmem:[%s15 + $0x18] sm:$0xff]
  %v2290 = vld [vmem:[%s15 + $0x20] sm:$0xff]
  %v2291 = vld [vmem:[%s15 + $0x28] sm:$0xff]
  %v2292 = vld [vmem:[%s15 + $0x30] sm:$0xff]
  %v2293 = vld [vmem:[%s15 + $0x38] sm:$0xff]
  %s2294 = scalar_lea.vmem %s15, 64
  %v2295 = vld [vmem:[%s2294] sm:$0xff]
  %v2296 = vld [vmem:[%s2294 + $0x8] sm:$0xff]
  %v2297 = vld [vmem:[%s2294 + $0x10] sm:$0xff]
  %v2298 = vld [vmem:[%s2294 + $0x18] sm:$0xff]
  %v2299 = vld [vmem:[%s2294 + $0x20] sm:$0xff]
  %v2300 = vld [vmem:[%s2294 + $0x28] sm:$0xff]
  %v2301 = vld [vmem:[%s2294 + $0x30] sm:$0xff]
  %v2302 = vld [vmem:[%s2294 + $0x38] sm:$0xff]
  %2303 = vmatprep.subr.mxu0 0.0
  %2304 = vmatpush1.msra.mxu0 %v2295
  %2305 = vmatprep.subr.mxu0 0.0
  %2306 = vmatpush1.msra.mxu0 %v2296
  %2307 = vmatprep.subr.mxu0 0.0
  %2308 = vmatpush1.msra.mxu0 %v2297
  %2309 = vmatprep.subr.mxu0 0.0
  %2310 = vmatpush1.msra.mxu0 %v2298
  %2311 = vmatprep.subr.mxu0 0.0
  %2312 = vmatpush1.msra.mxu0 %v2299
  %2313 = vmatprep.subr.mxu0 0.0
  %2314 = vmatpush1.msra.mxu0 %v2300
  %2315 = vmatprep.subr.mxu0 0.0
  %2316 = vmatpush1.msra.mxu0 %v2301
  %2317 = vmatprep.subr.mxu0 0.0
  %2318 = vmatpush1.msra.mxu0 %v2302
  %2319 = vmatprep.subr.mxu0 0.0
  %2320 = vmatpush1.msra.mxu0 0.0
  %2321 = vmatprep.subr.mxu0 0.0
  %2322 = vmatpush1.msra.mxu0 0.0
  %2323 = vmatprep.subr.mxu0 0.0
  %2324 = vmatpush1.msra.mxu0 0.0
  %2325 = vmatprep.subr.mxu0 0.0
  %2326 = vmatpush1.msra.mxu0 0.0
  %2327 = vmatprep.subr.mxu0 0.0
  %2328 = vmatpush1.msra.mxu0 0.0
  %2329 = vmatprep.subr.mxu0 0.0
  %2330 = vmatpush1.msra.mxu0 0.0
  %2331 = vmatprep.subr.mxu0 0.0
  %2332 = vmatpush1.msra.mxu0 0.0
  %2333 = vmatprep.subr.mxu0 0.0
  %2334 = vmatpush1.msra.mxu0 0.0
  %2335 = vmatprep.subr.mxu0 0.0
  %2336 = vmatpush1.msra.mxu0 0.0
  %2337 = vmatprep.subr.mxu0 0.0
  %2338 = vmatpush1.msra.mxu0 0.0
  %2339 = vmatprep.subr.mxu0 0.0
  %2340 = vmatpush1.msra.mxu0 0.0
  %2341 = vmatprep.subr.mxu0 0.0
  %2342 = vmatpush1.msra.mxu0 0.0
  %2343 = vmatprep.subr.mxu0 0.0
  %2344 = vmatpush1.msra.mxu0 0.0
  %2345 = vmatprep.subr.mxu0 0.0
  %2346 = vmatpush1.msra.mxu0 0.0
  %2347 = vmatprep.subr.mxu0 0.0
  %2348 = vmatpush1.msra.mxu0 0.0
  %2349 = vmatprep.subr.mxu0 0.0
  %2350 = vmatpush1.msra.mxu0 0.0
  %2351 = vmatprep.subr.mxu0 0.0
  %2352 = vmatpush1.msra.mxu0 0.0
  %2353 = vmatprep.subr.mxu0 0.0
  %2354 = vmatpush1.msra.mxu0 0.0
  %2355 = vmatprep.subr.mxu0 0.0
  %2356 = vmatpush1.msra.mxu0 0.0
  %2357 = vmatprep.subr.mxu0 0.0
  %2358 = vmatpush1.msra.mxu0 0.0
  %2359 = vmatprep.subr.mxu0 0.0
  %2360 = vmatpush1.msra.mxu0 0.0
  %2361 = vmatprep.subr.mxu0 0.0
  %2362 = vmatpush1.msra.mxu0 0.0
  %2363 = vmatprep.subr.mxu0 0.0
  %2364 = vmatpush1.msra.mxu0 0.0
  %2365 = vmatprep.subr.mxu0 0.0
  %2366 = vmatpush1.msra.mxu0 0.0
  %2367 = vmatprep.mubr.f32.mxu0 0.0
  %2368 = vmatmul.mubr.f32.gmra.mrb[0].mxu0 %v2204
  %v2369 = vpop.f32.mrb[0].mxu0
  %v2370 = vadd.f32 0.0, %v2369
  %v2371 = vpop.f32.mrb[0].mxu0
  %2372 = vmatprep.mubr.f32.mxu0 0.0
  %2373 = vmatmul.mubr.f32.gmra.mrb[0].mxu0 %v2207
  %v2374 = vpop.f32.mrb[0].mxu0
  %v2375 = vadd.f32 0.0, %v2374
  %v2376 = vpop.f32.mrb[0].mxu0
  %2377 = vdwg.mxu0
  %2378 = vmatprep.subr.mxu0 0.0
  %2379 = vmatpush1.msra.mxu0 %v2286
  %2380 = vmatprep.subr.mxu0 0.0
  %2381 = vmatpush1.msra.mxu0 %v2287
  %2382 = vmatprep.subr.mxu0 0.0
  %2383 = vmatpush1.msra.mxu0 %v2288
  %2384 = vmatprep.subr.mxu0 0.0
  %2385 = vmatpush1.msra.mxu0 %v2289
  %2386 = vmatprep.subr.mxu0 0.0
  %2387 = vmatpush1.msra.mxu0 %v2290
  %2388 = vmatprep.subr.mxu0 0.0
  %2389 = vmatpush1.msra.mxu0 %v2291
  %2390 = vmatprep.subr.mxu0 0.0
  %2391 = vmatpush1.msra.mxu0 %v2292
  %2392 = vmatprep.subr.mxu0 0.0
  %2393 = vmatpush1.msra.mxu0 %v2293
  %2394 = vmatprep.subr.mxu0 0.0
  %2395 = vmatpush1.msra.mxu0 0.0
  %2396 = vmatprep.subr.mxu0 0.0
  %2397 = vmatpush1.msra.mxu0 0.0
  %2398 = vmatprep.subr.mxu0 0.0
  %2399 = vmatpush1.msra.mxu0 0.0
  %2400 = vmatprep.subr.mxu0 0.0
  %2401 = vmatpush1.msra.mxu0 0.0
  %2402 = vmatprep.subr.mxu0 0.0
  %2403 = vmatpush1.msra.mxu0 0.0
  %2404 = vmatprep.subr.mxu0 0.0
  %2405 = vmatpush1.msra.mxu0 0.0
  %2406 = vmatprep.subr.mxu0 0.0
  %2407 = vmatpush1.msra.mxu0 0.0
  %2408 = vmatprep.subr.mxu0 0.0
  %2409 = vmatpush1.msra.mxu0 0.0
  %2410 = vmatprep.subr.mxu0 0.0
  %2411 = vmatpush1.msra.mxu0 0.0
  %2412 = vmatprep.subr.mxu0 0.0
  %2413 = vmatpush1.msra.mxu0 0.0
  %2414 = vmatprep.subr.mxu0 0.0
  %2415 = vmatpush1.msra.mxu0 0.0
  %2416 = vmatprep.subr.mxu0 0.0
  %2417 = vmatpush1.msra.mxu0 0.0
  %2418 = vmatprep.subr.mxu0 0.0
  %2419 = vmatpush1.msra.mxu0 0.0
  %2420 = vmatprep.subr.mxu0 0.0
  %2421 = vmatpush1.msra.mxu0 0.0
  %2422 = vmatprep.subr.mxu0 0.0
  %2423 = vmatpush1.msra.mxu0 0.0
  %2424 = vmatprep.subr.mxu0 0.0
  %2425 = vmatpush1.msra.mxu0 0.0
  %2426 = vmatprep.subr.mxu0 0.0
  %2427 = vmatpush1.msra.mxu0 0.0
  %2428 = vmatprep.subr.mxu0 0.0
  %2429 = vmatpush1.msra.mxu0 0.0
  %2430 = vmatprep.subr.mxu0 0.0
  %2431 = vmatpush1.msra.mxu0 0.0
  %2432 = vmatprep.subr.mxu0 0.0
  %2433 = vmatpush1.msra.mxu0 0.0
  %2434 = vmatprep.subr.mxu0 0.0
  %2435 = vmatpush1.msra.mxu0 0.0
  %2436 = vmatprep.subr.mxu0 0.0
  %2437 = vmatpush1.msra.mxu0 0.0
  %2438 = vmatprep.subr.mxu0 0.0
  %2439 = vmatpush1.msra.mxu0 0.0
  %2440 = vmatprep.subr.mxu0 0.0
  %2441 = vmatpush1.msra.mxu0 0.0
  %2442 = vmatprep.mubr.f32.mxu0 0.0
  %2443 = vmatmul.mubr.f32.gmra.mrb[0].mxu0 %v2033
  %v2444 = vpop.f32.mrb[0].mxu0
  %v2445 = vadd.f32 %v2370, %v2444
  %v2446 = vpop.f32.mrb[0].mxu0
  %2447 = vmatprep.mubr.f32.mxu0 0.0
  %2448 = vmatmul.mubr.f32.gmra.mrb[0].mxu0 %v2036
  %v2449 = vpop.f32.mrb[0].mxu0
  %v2450 = vadd.f32 %v2375, %v2449
  %v2451 = vpop.f32.mrb[0].mxu0
  %2452 = vdwg.mxu0
  %v2453 = vsel %vm346, %v2284, 0.0
  %v2454 = vsel %vm346, %v2285, 0.0
  %v2455 = vadd.f32 %v2453, %v2454
  %v2456 = vrot.slane %v2455, 4
  %v2457 = vadd.f32 %v2455, %v2456
  %v2458 = vrot.slane %v2457, 2
  %v2459 = vadd.f32 %v2457, %v2458
  %v2460 = vrot.slane %v2459, 1
  %v2461 = vadd.f32 %v2459, %v2460
  %v2462 = vsel %vm346, %v2445, 0.0
  %v2463 = vsel %vm346, %v2450, 0.0
  %v2464 = vadd.f32 %v2462, %v2463
  %v2465 = vrot.slane %v2464, 4
  %v2466 = vadd.f32 %v2464, %v2465
  %v2467 = vrot.slane %v2466, 2
  %v2468 = vadd.f32 %v2466, %v2467
  %v2469 = vrot.slane %v2468, 1
  %v2470 = vadd.f32 %v2468, %v2469
  %v2471 = vadd.f32 %v2461, %v2470
  %v2472 = vmul.f32 %v2471, 0.03125
  %v2473 = vmul.f32 %v2284, %v2284
  %v2474 = vmul.f32 %v2285, %v2285
  %v2475 = vsel %vm346, %v2473, 0.0
  %v2476 = vsel %vm346, %v2474, 0.0
  %v2477 = vadd.f32 %v2475, %v2476
  %v2478 = vrot.slane %v2477, 4
  %v2479 = vadd.f32 %v2477, %v2478
  %v2480 = vrot.slane %v2479, 2
  %v2481 = vadd.f32 %v2479, %v2480
  %v2482 = vrot.slane %v2481, 1
  %v2483 = vadd.f32 %v2481, %v2482
  %v2484 = vmul.f32 %v2445, %v2445
  %v2485 = vmul.f32 %v2450, %v2450
  %v2486 = vsel %vm346, %v2484, 0.0
  %v2487 = vsel %vm346, %v2485, 0.0
  %v2488 = vadd.f32 %v2486, %v2487
  %v2489 = vrot.slane %v2488, 4
  %v2490 = vadd.f32 %v2488, %v2489
  %v2491 = vrot.slane %v2490, 2
  %v2492 = vadd.f32 %v2490, %v2491
  %v2493 = vrot.slane %v2492, 1
  %v2494 = vadd.f32 %v2492, %v2493
  %v2495 = vadd.f32 %v2483, %v2494
  %v2496 = vmul.f32 %v2495, 0.03125
  %v2497 = vmul.f32 %v2472, %v2472
  %v2498 = vsub.f32 %v2496, %v2497
  %v2499 = vmax.f32 %v2498, 0.0
  %v2500 = vadd.f32 %v2499, 1e-05
  %v2501 = vrsqrt.pop %v2500
  %v2502 = vld [vmem:[%s16] sm:$0x1]
  %v2503 = vmul.f32 %v2501, %v2502
  %v2504 = vld [vmem:[%s17] sm:$0x1]
  %v2505 = vmul.f32 %v2472, %v2503
  %v2506 = vsub.f32 %v2504, %v2505
  %v2507 = vlaneseq
  %v2508 = vshrl.u32 %v2507, 7
  %v2509 = vsub.s32 0, %v2508
  %v2510 = vrot.slane %v2503, %v2509
  %v2511 = vmul.f32 %v2284, %v2510
  %v2512 = vmul.f32 %v2285, %v2510
  %v2514 = vlaneseq
  %v2515 = vshrl.u32 %v2514, 7
  %v2516 = vsub.s32 0, %v2515
  %v2517 = vrot.slane %v2506, %v2516
  %v2519 = vadd.f32 %v2511, %v2517
  %v2520 = vadd.f32 %v2512, %v2517
  %v2521 = vmax.f32 %v2519, 0.0
  %v2522 = vmax.f32 %v2520, 0.0
  %v2523 = vmul.f32 %v2445, %v2510
  %v2524 = vmul.f32 %v2450, %v2510
  %v2525 = vadd.f32 %v2523, %v2517
  %v2526 = vadd.f32 %v2524, %v2517
  %v2527 = vmax.f32 %v2525, 0.0
  %v2528 = vmax.f32 %v2526, 0.0
  %v2531 = vcombine.high %v2521, %v2521
  %v2533 = vunpack.c.l.s4 1966171168
  %v2534 = vunpack.c.0.s8 %v2533
  %v2535 = vlaneseq
  %v2536 = vshrl.u32 %v2535, 7
  %v2537 = vsub.s32 %v2534, %v2536
  %v2538 = vrot.slane %v2521, %v2537
  %v2540 = vunpack.c.l.s4 1966171168
  %v2541 = vunpack.c.0.s8 %v2540
  %v2542 = vlaneseq
  %v2543 = vshrl.u32 %v2542, 7
  %v2544 = vsub.s32 %v2541, %v2543
  %v2545 = vrot.slane %v2531, %v2544
  %v2546 = vcombine.high %v2538, %v2538
  %v2547 = vcombine.high %v2545, %v2545
  %v2549 = vunpack.c.l.s4 1966171168
  %v2550 = vunpack.c.0.s8 %v2549
  %v2551 = vlaneseq
  %v2552 = vshrl.u32 %v2551, 7
  %v2553 = vsub.s32 %v2550, %v2552
  %v2554 = vrot.slane %v2538, %v2553
  %v2556 = vunpack.c.l.s4 1966171168
  %v2557 = vunpack.c.0.s8 %v2556
  %v2558 = vlaneseq
  %v2559 = vshrl.u32 %v2558, 7
  %v2560 = vsub.s32 %v2557, %v2559
  %v2561 = vrot.slane %v2545, %v2560
  %v2563 = vunpack.c.l.s4 1966171168
  %v2564 = vunpack.c.0.s8 %v2563
  %v2565 = vlaneseq
  %v2566 = vshrl.u32 %v2565, 7
  %v2567 = vsub.s32 %v2564, %v2566
  %v2568 = vrot.slane %v2546, %v2567
  %v2570 = vunpack.c.l.s4 1966171168
  %v2571 = vunpack.c.0.s8 %v2570
  %v2572 = vlaneseq
  %v2573 = vshrl.u32 %v2572, 7
  %v2574 = vsub.s32 %v2571, %v2573
  %v2575 = vrot.slane %v2547, %v2574
  %v2576 = vcombine.high %v2554, %v2554
  %v2577 = vcombine.high %v2561, %v2561
  %v2578 = vcombine.high %v2568, %v2568
  %v2579 = vcombine.high %v2575, %v2575
  %v2580 = vcombine.high %v2522, %v2522
  %v2582 = vunpack.c.l.s4 1966171168
  %v2583 = vunpack.c.0.s8 %v2582
  %v2584 = vlaneseq
  %v2585 = vshrl.u32 %v2584, 7
  %v2586 = vsub.s32 %v2583, %v2585
  %v2587 = vrot.slane %v2522, %v2586
  %v2589 = vunpack.c.l.s4 1966171168
  %v2590 = vunpack.c.0.s8 %v2589
  %v2591 = vlaneseq
  %v2592 = vshrl.u32 %v2591, 7
  %v2593 = vsub.s32 %v2590, %v2592
  %v2594 = vrot.slane %v2580, %v2593
  %v2595 = vcombine.high %v2587, %v2587
  %v2596 = vcombine.high %v2594, %v2594
  %v2598 = vunpack.c.l.s4 1966171168
  %v2599 = vunpack.c.0.s8 %v2598
  %v2600 = vlaneseq
  %v2601 = vshrl.u32 %v2600, 7
  %v2602 = vsub.s32 %v2599, %v2601
  %v2603 = vrot.slane %v2587, %v2602
  %v2605 = vunpack.c.l.s4 1966171168
  %v2606 = vunpack.c.0.s8 %v2605
  %v2607 = vlaneseq
  %v2608 = vshrl.u32 %v2607, 7
  %v2609 = vsub.s32 %v2606, %v2608
  %v2610 = vrot.slane %v2594, %v2609
  %v2612 = vunpack.c.l.s4 1966171168
  %v2613 = vunpack.c.0.s8 %v2612
  %v2614 = vlaneseq
  %v2615 = vshrl.u32 %v2614, 7
  %v2616 = vsub.s32 %v2613, %v2615
  %v2617 = vrot.slane %v2595, %v2616
  %v2619 = vunpack.c.l.s4 1966171168
  %v2620 = vunpack.c.0.s8 %v2619
  %v2621 = vlaneseq
  %v2622 = vshrl.u32 %v2621, 7
  %v2623 = vsub.s32 %v2620, %v2622
  %v2624 = vrot.slane %v2596, %v2623
  %v2625 = vcombine.high %v2603, %v2603
  %v2626 = vcombine.high %v2610, %v2610
  %v2627 = vcombine.high %v2617, %v2617
  %v2628 = vcombine.high %v2624, %v2624
  %v2631 = vcombine.high %v2527, %v2527
  %v2633 = vunpack.c.l.s4 1966171168
  %v2634 = vunpack.c.0.s8 %v2633
  %v2635 = vlaneseq
  %v2636 = vshrl.u32 %v2635, 7
  %v2637 = vsub.s32 %v2634, %v2636
  %v2638 = vrot.slane %v2527, %v2637
  %v2640 = vunpack.c.l.s4 1966171168
  %v2641 = vunpack.c.0.s8 %v2640
  %v2642 = vlaneseq
  %v2643 = vshrl.u32 %v2642, 7
  %v2644 = vsub.s32 %v2641, %v2643
  %v2645 = vrot.slane %v2631, %v2644
  %v2646 = vcombine.high %v2638, %v2638
  %v2647 = vcombine.high %v2645, %v2645
  %v2649 = vunpack.c.l.s4 1966171168
  %v2650 = vunpack.c.0.s8 %v2649
  %v2651 = vlaneseq
  %v2652 = vshrl.u32 %v2651, 7
  %v2653 = vsub.s32 %v2650, %v2652
  %v2654 = vrot.slane %v2638, %v2653
  %v2656 = vunpack.c.l.s4 1966171168
  %v2657 = vunpack.c.0.s8 %v2656
  %v2658 = vlaneseq
  %v2659 = vshrl.u32 %v2658, 7
  %v2660 = vsub.s32 %v2657, %v2659
  %v2661 = vrot.slane %v2645, %v2660
  %v2663 = vunpack.c.l.s4 1966171168
  %v2664 = vunpack.c.0.s8 %v2663
  %v2665 = vlaneseq
  %v2666 = vshrl.u32 %v2665, 7
  %v2667 = vsub.s32 %v2664, %v2666
  %v2668 = vrot.slane %v2646, %v2667
  %v2670 = vunpack.c.l.s4 1966171168
  %v2671 = vunpack.c.0.s8 %v2670
  %v2672 = vlaneseq
  %v2673 = vshrl.u32 %v2672, 7
  %v2674 = vsub.s32 %v2671, %v2673
  %v2675 = vrot.slane %v2647, %v2674
  %v2676 = vcombine.high %v2654, %v2654
  %v2677 = vcombine.high %v2661, %v2661
  %v2678 = vcombine.high %v2668, %v2668
  %v2679 = vcombine.high %v2675, %v2675
  %v2680 = vcombine.high %v2528, %v2528
  %v2682 = vunpack.c.l.s4 1966171168
  %v2683 = vunpack.c.0.s8 %v2682
  %v2684 = vlaneseq
  %v2685 = vshrl.u32 %v2684, 7
  %v2686 = vsub.s32 %v2683, %v2685
  %v2687 = vrot.slane %v2528, %v2686
  %v2689 = vunpack.c.l.s4 1966171168
  %v2690 = vunpack.c.0.s8 %v2689
  %v2691 = vlaneseq
  %v2692 = vshrl.u32 %v2691, 7
  %v2693 = vsub.s32 %v2690, %v2692
  %v2694 = vrot.slane %v2680, %v2693
  %v2695 = vcombine.high %v2687, %v2687
  %v2696 = vcombine.high %v2694, %v2694
  %v2698 = vunpack.c.l.s4 1966171168
  %v2699 = vunpack.c.0.s8 %v2698
  %v2700 = vlaneseq
  %v2701 = vshrl.u32 %v2700, 7
  %v2702 = vsub.s32 %v2699, %v2701
  %v2703 = vrot.slane %v2687, %v2702
  %v2705 = vunpack.c.l.s4 1966171168
  %v2706 = vunpack.c.0.s8 %v2705
  %v2707 = vlaneseq
  %v2708 = vshrl.u32 %v2707, 7
  %v2709 = vsub.s32 %v2706, %v2708
  %v2710 = vrot.slane %v2694, %v2709
  %v2712 = vunpack.c.l.s4 1966171168
  %v2713 = vunpack.c.0.s8 %v2712
  %v2714 = vlaneseq
  %v2715 = vshrl.u32 %v2714, 7
  %v2716 = vsub.s32 %v2713, %v2715
  %v2717 = vrot.slane %v2695, %v2716
  %v2719 = vunpack.c.l.s4 1966171168
  %v2720 = vunpack.c.0.s8 %v2719
  %v2721 = vlaneseq
  %v2722 = vshrl.u32 %v2721, 7
  %v2723 = vsub.s32 %v2720, %v2722
  %v2724 = vrot.slane %v2696, %v2723
  %v2725 = vcombine.high %v2703, %v2703
  %v2726 = vcombine.high %v2710, %v2710
  %v2727 = vcombine.high %v2717, %v2717
  %v2728 = vcombine.high %v2724, %v2724
  %v2729 = vlaneseq
  %v2730 = vshrl.u32 %v2729, 7
  %v2731 = vsub.s32 0, %v2730
  %v2732 = vrot.slane %v2554, %v2731
  %v2733 = vlaneseq
  %v2734 = vshrl.u32 %v2733, 7
  %v2735 = vsub.s32 0, %v2734
  %v2736 = vrot.slane %v2568, %v2735
  %v2737 = vlaneseq
  %v2738 = vshrl.u32 %v2737, 7
  %v2739 = vsub.s32 0, %v2738
  %v2740 = vrot.slane %v2576, %v2739
  %v2741 = vlaneseq
  %v2742 = vshrl.u32 %v2741, 7
  %v2743 = vsub.s32 0, %v2742
  %v2744 = vrot.slane %v2578, %v2743
  %v2745 = vlaneseq
  %v2746 = vshrl.u32 %v2745, 7
  %v2747 = vsub.s32 0, %v2746
  %v2748 = vrot.slane %v2561, %v2747
  %v2749 = vlaneseq
  %v2750 = vshrl.u32 %v2749, 7
  %v2751 = vsub.s32 0, %v2750
  %v2752 = vrot.slane %v2575, %v2751
  %v2753 = vlaneseq
  %v2754 = vshrl.u32 %v2753, 7
  %v2755 = vsub.s32 0, %v2754
  %v2756 = vrot.slane %v2577, %v2755
  %v2757 = vlaneseq
  %v2758 = vshrl.u32 %v2757, 7
  %v2759 = vsub.s32 0, %v2758
  %v2760 = vrot.slane %v2579, %v2759
  %v2761 = vlaneseq
  %v2762 = vshrl.u32 %v2761, 7
  %v2763 = vsub.s32 0, %v2762
  %v2764 = vrot.slane %v2603, %v2763
  %v2765 = vlaneseq
  %v2766 = vshrl.u32 %v2765, 7
  %v2767 = vsub.s32 0, %v2766
  %v2768 = vrot.slane %v2617, %v2767
  %v2769 = vlaneseq
  %v2770 = vshrl.u32 %v2769, 7
  %v2771 = vsub.s32 0, %v2770
  %v2772 = vrot.slane %v2625, %v2771
  %v2773 = vlaneseq
  %v2774 = vshrl.u32 %v2773, 7
  %v2775 = vsub.s32 0, %v2774
  %v2776 = vrot.slane %v2627, %v2775
  %v2777 = vlaneseq
  %v2778 = vshrl.u32 %v2777, 7
  %v2779 = vsub.s32 0, %v2778
  %v2780 = vrot.slane %v2610, %v2779
  %v2781 = vlaneseq
  %v2782 = vshrl.u32 %v2781, 7
  %v2783 = vsub.s32 0, %v2782
  %v2784 = vrot.slane %v2624, %v2783
  %v2785 = vlaneseq
  %v2786 = vshrl.u32 %v2785, 7
  %v2787 = vsub.s32 0, %v2786
  %v2788 = vrot.slane %v2626, %v2787
  %v2789 = vlaneseq
  %v2790 = vshrl.u32 %v2789, 7
  %v2791 = vsub.s32 0, %v2790
  %v2792 = vrot.slane %v2628, %v2791
  %v2809 = vlaneseq
  %v2810 = vshrl.u32 %v2809, 7
  %v2811 = vsub.s32 0, %v2810
  %v2812 = vrot.slane %v2654, %v2811
  %v2813 = vlaneseq
  %v2814 = vshrl.u32 %v2813, 7
  %v2815 = vsub.s32 0, %v2814
  %v2816 = vrot.slane %v2668, %v2815
  %v2817 = vlaneseq
  %v2818 = vshrl.u32 %v2817, 7
  %v2819 = vsub.s32 0, %v2818
  %v2820 = vrot.slane %v2676, %v2819
  %v2821 = vlaneseq
  %v2822 = vshrl.u32 %v2821, 7
  %v2823 = vsub.s32 0, %v2822
  %v2824 = vrot.slane %v2678, %v2823
  %v2825 = vlaneseq
  %v2826 = vshrl.u32 %v2825, 7
  %v2827 = vsub.s32 0, %v2826
  %v2828 = vrot.slane %v2661, %v2827
  %v2829 = vlaneseq
  %v2830 = vshrl.u32 %v2829, 7
  %v2831 = vsub.s32 0, %v2830
  %v2832 = vrot.slane %v2675, %v2831
  %v2833 = vlaneseq
  %v2834 = vshrl.u32 %v2833, 7
  %v2835 = vsub.s32 0, %v2834
  %v2836 = vrot.slane %v2677, %v2835
  %v2837 = vlaneseq
  %v2838 = vshrl.u32 %v2837, 7
  %v2839 = vsub.s32 0, %v2838
  %v2840 = vrot.slane %v2679, %v2839
  %v2841 = vlaneseq
  %v2842 = vshrl.u32 %v2841, 7
  %v2843 = vsub.s32 0, %v2842
  %v2844 = vrot.slane %v2703, %v2843
  %v2845 = vlaneseq
  %v2846 = vshrl.u32 %v2845, 7
  %v2847 = vsub.s32 0, %v2846
  %v2848 = vrot.slane %v2717, %v2847
  %v2849 = vlaneseq
  %v2850 = vshrl.u32 %v2849, 7
  %v2851 = vsub.s32 0, %v2850
  %v2852 = vrot.slane %v2725, %v2851
  %v2853 = vlaneseq
  %v2854 = vshrl.u32 %v2853, 7
  %v2855 = vsub.s32 0, %v2854
  %v2856 = vrot.slane %v2727, %v2855
  %v2857 = vlaneseq
  %v2858 = vshrl.u32 %v2857, 7
  %v2859 = vsub.s32 0, %v2858
  %v2860 = vrot.slane %v2710, %v2859
  %v2861 = vlaneseq
  %v2862 = vshrl.u32 %v2861, 7
  %v2863 = vsub.s32 0, %v2862
  %v2864 = vrot.slane %v2724, %v2863
  %v2865 = vlaneseq
  %v2866 = vshrl.u32 %v2865, 7
  %v2867 = vsub.s32 0, %v2866
  %v2868 = vrot.slane %v2726, %v2867
  %v2869 = vlaneseq
  %v2870 = vshrl.u32 %v2869, 7
  %v2871 = vsub.s32 0, %v2870
  %v2872 = vrot.slane %v2728, %v2871
  %v2889 = vsel %vm1769, %v2732, %v2812
  %v2890 = vsel %vm1769, %v2736, %v2816
  %v2891 = vsel %vm1769, %v2740, %v2820
  %v2892 = vsel %vm1769, %v2744, %v2824
  %v2893 = vsel %vm1769, %v2748, %v2828
  %v2894 = vsel %vm1769, %v2752, %v2832
  %v2895 = vsel %vm1769, %v2756, %v2836
  %v2896 = vsel %vm1769, %v2760, %v2840
  %v2897 = vsel %vm1769, %v2764, %v2844
  %v2898 = vsel %vm1769, %v2768, %v2848
  %v2899 = vsel %vm1769, %v2772, %v2852
  %v2900 = vsel %vm1769, %v2776, %v2856
  %v2901 = vsel %vm1769, %v2780, %v2860
  %v2902 = vsel %vm1769, %v2784, %v2864
  %v2903 = vsel %vm1769, %v2788, %v2868
  %v2904 = vsel %vm1769, %v2792, %v2872
  %vm2905 = vcmask 256000
  %2906 = vst.msk [vmem:[#allocation10] sm:$0x7] %vm2905, 0.0
  %2907 = vst.msk [vmem:[#allocation10 + $0x18] sm:$0x7] %vm2905, 0.0
  %v2924 = vcombine.low %v2889, %v2890
  %v2925 = vcombine.low %v2891, %v2892
  %v2927 = vunpack.c.l.s4 1983009808
  %v2928 = vunpack.c.0.s8 %v2927
  %v2929 = vlaneseq
  %v2930 = vshrl.u32 %v2929, 7
  %v2931 = vsub.s32 %v2928, %v2930
  %v2932 = vrot.slane %v2924, %v2931
  %v2934 = vunpack.c.l.s4 1983009808
  %v2935 = vunpack.c.0.s8 %v2934
  %v2936 = vlaneseq
  %v2937 = vshrl.u32 %v2936, 7
  %v2938 = vsub.s32 %v2935, %v2937
  %v2939 = vrot.slane %v2925, %v2938
  %v2940 = vcombine.low %v2932, %v2939
  %v2941 = vcombine.low %v2893, %v2894
  %v2942 = vcombine.low %v2895, %v2896
  %v2944 = vunpack.c.l.s4 1983009808
  %v2945 = vunpack.c.0.s8 %v2944
  %v2946 = vlaneseq
  %v2947 = vshrl.u32 %v2946, 7
  %v2948 = vsub.s32 %v2945, %v2947
  %v2949 = vrot.slane %v2941, %v2948
  %v2951 = vunpack.c.l.s4 1983009808
  %v2952 = vunpack.c.0.s8 %v2951
  %v2953 = vlaneseq
  %v2954 = vshrl.u32 %v2953, 7
  %v2955 = vsub.s32 %v2952, %v2954
  %v2956 = vrot.slane %v2942, %v2955
  %v2957 = vcombine.low %v2949, %v2956
  %v2958 = vcombine.low %v2897, %v2898
  %v2959 = vcombine.low %v2899, %v2900
  %v2961 = vunpack.c.l.s4 1983009808
  %v2962 = vunpack.c.0.s8 %v2961
  %v2963 = vlaneseq
  %v2964 = vshrl.u32 %v2963, 7
  %v2965 = vsub.s32 %v2962, %v2964
  %v2966 = vrot.slane %v2958, %v2965
  %v2968 = vunpack.c.l.s4 1983009808
  %v2969 = vunpack.c.0.s8 %v2968
  %v2970 = vlaneseq
  %v2971 = vshrl.u32 %v2970, 7
  %v2972 = vsub.s32 %v2969, %v2971
  %v2973 = vrot.slane %v2959, %v2972
  %v2974 = vcombine.low %v2966, %v2973
  %v2975 = vcombine.low %v2901, %v2902
  %v2976 = vcombine.low %v2903, %v2904
  %v2978 = vunpack.c.l.s4 1983009808
  %v2979 = vunpack.c.0.s8 %v2978
  %v2980 = vlaneseq
  %v2981 = vshrl.u32 %v2980, 7
  %v2982 = vsub.s32 %v2979, %v2981
  %v2983 = vrot.slane %v2975, %v2982
  %v2985 = vunpack.c.l.s4 1983009808
  %v2986 = vunpack.c.0.s8 %v2985
  %v2987 = vlaneseq
  %v2988 = vshrl.u32 %v2987, 7
  %v2989 = vsub.s32 %v2986, %v2988
  %v2990 = vrot.slane %v2976, %v2989
  %v2991 = vcombine.low %v2983, %v2990
  %2996 = vst.msk [vmem:[#allocation10 + $0x3] sm:$0xff] %vm346, %v2940
  %2997 = vst.msk [vmem:[#allocation10 + $0xb] sm:$0xff] %vm346, %v2957
  %2998 = vst.msk [vmem:[#allocation10 + $0x1b] sm:$0xff] %vm346, %v2974
  %2999 = vst.msk [vmem:[#allocation10 + $0x23] sm:$0xff] %vm346, %v2991
  %3000 = vst.msk [vmem:[#allocation10 + $0x13] sm:$0x7] %vm2905, 0.0
  %3001 = vst.msk [vmem:[#allocation10 + $0x2b] sm:$0x7] %vm2905, 0.0
  %v3002 = vld [vmem:[#allocation10] sm:$0xff]
  %v3003 = vld [vmem:[#allocation10 + $0x8] sm:$0xff]
  %v3004 = vld [vmem:[#allocation10 + $0x18] sm:$0xff]
  %v3005 = vld [vmem:[#allocation10 + $0x20] sm:$0xff]
  %3006 = vst.msk [vmem:[#allocation11] sm:$0xff] %vm346, %v3002
  %3007 = vst.msk [vmem:[#allocation11 + $0x10] sm:$0xff] %vm346, %v3003
  %3008 = vst.msk [vmem:[#allocation11 + $0x20] sm:$0xff] %vm346, %v3004
  %3009 = vst.msk [vmem:[#allocation11 + $0x30] sm:$0xff] %vm346, %v3005
  %v3010 = vld [vmem:[#allocation10 + $0x1] sm:$0xff]
  %v3011 = vld [vmem:[#allocation10 + $0x9] sm:$0xff]
  %v3012 = vld [vmem:[#allocation10 + $0x19] sm:$0xff]
  %v3013 = vld [vmem:[#allocation10 + $0x21] sm:$0xff]
  %3018 = vrot.lane.b32.xlu0 %v3010, 32
  %v3019 = vpop.permute.xlu0 %3018
  %3020 = vrot.lane.b32.xlu0 %v3011, 32
  %v3021 = vpop.permute.xlu0 %3020
  %3022 = vrot.lane.b32.xlu0 %v3012, 32
  %v3023 = vpop.permute.xlu0 %3022
  %3024 = vrot.lane.b32.xlu0 %v3013, 32
  %v3025 = vpop.permute.xlu0 %3024
  %3030 = vst.msk [vmem:[#allocation11] sm:$0xff] %vm671, %v3019
  %3031 = vst.msk [vmem:[#allocation11 + $0x10] sm:$0xff] %vm671, %v3021
  %3032 = vst.msk [vmem:[#allocation11 + $0x20] sm:$0xff] %vm671, %v3023
  %3033 = vst.msk [vmem:[#allocation11 + $0x30] sm:$0xff] %vm671, %v3025
  %v3034 = vld [vmem:[#allocation10 + $0x2] sm:$0xff]
  %v3035 = vld [vmem:[#allocation10 + $0xa] sm:$0xff]
  %v3036 = vld [vmem:[#allocation10 + $0x1a] sm:$0xff]
  %v3037 = vld [vmem:[#allocation10 + $0x22] sm:$0xff]
  %3042 = vrot.lane.b32.xlu0 %v3034, 64
  %v3043 = vpop.permute.xlu0 %3042
  %3044 = vrot.lane.b32.xlu0 %v3035, 64
  %v3045 = vpop.permute.xlu0 %3044
  %3046 = vrot.lane.b32.xlu0 %v3036, 64
  %v3047 = vpop.permute.xlu0 %3046
  %3048 = vrot.lane.b32.xlu0 %v3037, 64
  %v3049 = vpop.permute.xlu0 %3048
  %3054 = vst.msk [vmem:[#allocation11] sm:$0xff] %vm684, %v3043
  %3055 = vst.msk [vmem:[#allocation11 + $0x10] sm:$0xff] %vm684, %v3045
  %3056 = vst.msk [vmem:[#allocation11 + $0x20] sm:$0xff] %vm684, %v3047
  %3057 = vst.msk [vmem:[#allocation11 + $0x30] sm:$0xff] %vm684, %v3049
  %v3058 = vld [vmem:[#allocation10 + $0x3] sm:$0xff]
  %v3059 = vld [vmem:[#allocation10 + $0xb] sm:$0xff]
  %v3060 = vld [vmem:[#allocation10 + $0x1b] sm:$0xff]
  %v3061 = vld [vmem:[#allocation10 + $0x23] sm:$0xff]
  %3066 = vrot.lane.b32.xlu0 %v3058, 96
  %v3067 = vpop.permute.xlu0 %3066
  %3068 = vrot.lane.b32.xlu0 %v3059, 96
  %v3069 = vpop.permute.xlu0 %3068
  %3070 = vrot.lane.b32.xlu0 %v3060, 96
  %v3071 = vpop.permute.xlu0 %3070
  %3072 = vrot.lane.b32.xlu0 %v3061, 96
  %v3073 = vpop.permute.xlu0 %3072
  %3078 = vst.msk [vmem:[#allocation11] sm:$0xff] %vm697, %v3067
  %3079 = vst.msk [vmem:[#allocation11 + $0x10] sm:$0xff] %vm697, %v3069
  %3080 = vst.msk [vmem:[#allocation11 + $0x20] sm:$0xff] %vm697, %v3071
  %3081 = vst.msk [vmem:[#allocation11 + $0x30] sm:$0xff] %vm697, %v3073
  %v3082 = vld [vmem:[#allocation10 + $0x4] sm:$0xff]
  %v3083 = vld [vmem:[#allocation10 + $0xc] sm:$0xff]
  %v3084 = vld [vmem:[#allocation10 + $0x1c] sm:$0xff]
  %v3085 = vld [vmem:[#allocation10 + $0x24] sm:$0xff]
  %3086 = vst.msk [vmem:[#allocation11 + $0x8] sm:$0xff] %vm346, %v3082
  %3087 = vst.msk [vmem:[#allocation11 + $0x18] sm:$0xff] %vm346, %v3083
  %3088 = vst.msk [vmem:[#allocation11 + $0x28] sm:$0xff] %vm346, %v3084
  %3089 = vst.msk [vmem:[#allocation11 + $0x38] sm:$0xff] %vm346, %v3085
  %v3090 = vld [vmem:[#allocation10 + $0x5] sm:$0xff]
  %v3091 = vld [vmem:[#allocation10 + $0xd] sm:$0xff]
  %v3092 = vld [vmem:[#allocation10 + $0x1d] sm:$0xff]
  %v3093 = vld [vmem:[#allocation10 + $0x25] sm:$0xff]
  %3098 = vrot.lane.b32.xlu0 %v3090, 32
  %v3099 = vpop.permute.xlu0 %3098
  %3100 = vrot.lane.b32.xlu0 %v3091, 32
  %v3101 = vpop.permute.xlu0 %3100
  %3102 = vrot.lane.b32.xlu0 %v3092, 32
  %v3103 = vpop.permute.xlu0 %3102
  %3104 = vrot.lane.b32.xlu0 %v3093, 32
  %v3105 = vpop.permute.xlu0 %3104
  %3110 = vst.msk [vmem:[#allocation11 + $0x8] sm:$0xff] %vm671, %v3099
  %3111 = vst.msk [vmem:[#allocation11 + $0x18] sm:$0xff] %vm671, %v3101
  %3112 = vst.msk [vmem:[#allocation11 + $0x28] sm:$0xff] %vm671, %v3103
  %3113 = vst.msk [vmem:[#allocation11 + $0x38] sm:$0xff] %vm671, %v3105
  %v3114 = vld [vmem:[#allocation10 + $0x6] sm:$0xff]
  %v3115 = vld [vmem:[#allocation10 + $0xe] sm:$0xff]
  %v3116 = vld [vmem:[#allocation10 + $0x1e] sm:$0xff]
  %v3117 = vld [vmem:[#allocation10 + $0x26] sm:$0xff]
  %3122 = vrot.lane.b32.xlu0 %v3114, 64
  %v3123 = vpop.permute.xlu0 %3122
  %3124 = vrot.lane.b32.xlu0 %v3115, 64
  %v3125 = vpop.permute.xlu0 %3124
  %3126 = vrot.lane.b32.xlu0 %v3116, 64
  %v3127 = vpop.permute.xlu0 %3126
  %3128 = vrot.lane.b32.xlu0 %v3117, 64
  %v3129 = vpop.permute.xlu0 %3128
  %3134 = vst.msk [vmem:[#allocation11 + $0x8] sm:$0xff] %vm684, %v3123
  %3135 = vst.msk [vmem:[#allocation11 + $0x18] sm:$0xff] %vm684, %v3125
  %3136 = vst.msk [vmem:[#allocation11 + $0x28] sm:$0xff] %vm684, %v3127
  %3137 = vst.msk [vmem:[#allocation11 + $0x38] sm:$0xff] %vm684, %v3129
  %v3138 = vld [vmem:[#allocation11] sm:$0xff]
  %v3139 = vld [vmem:[#allocation11 + $0x8] sm:$0xff]
  %v3140 = vld [vmem:[#allocation11 + $0x10] sm:$0xff]
  %v3141 = vld [vmem:[#allocation11 + $0x18] sm:$0xff]
  %v3142 = vld [vmem:[#allocation11 + $0x20] sm:$0xff]
  %v3143 = vld [vmem:[#allocation11 + $0x28] sm:$0xff]
  %v3144 = vld [vmem:[#allocation11 + $0x30] sm:$0xff]
  %v3145 = vld [vmem:[#allocation11 + $0x38] sm:$0xff]
  %v3146 = vld [vmem:[%s18] sm:$0xff]
  %v3147 = vld [vmem:[%s18 + $0x8] sm:$0xff]
  %v3148 = vld [vmem:[%s18 + $0x10] sm:$0xff]
  %v3149 = vld [vmem:[%s18 + $0x18] sm:$0xff]
  %v3150 = vld [vmem:[%s18 + $0x20] sm:$0xff]
  %v3151 = vld [vmem:[%s18 + $0x28] sm:$0xff]
  %v3152 = vld [vmem:[%s18 + $0x30] sm:$0xff]
  %v3153 = vld [vmem:[%s18 + $0x38] sm:$0xff]
  %v3154 = vld [vmem:[%s18 + $0x40] sm:$0xff]
  %v3155 = vld [vmem:[%s18 + $0x48] sm:$0xff]
  %v3156 = vld [vmem:[%s18 + $0x50] sm:$0xff]
  %v3157 = vld [vmem:[%s18 + $0x58] sm:$0xff]
  %v3158 = vld [vmem:[%s18 + $0x60] sm:$0xff]
  %v3159 = vld [vmem:[%s18 + $0x68] sm:$0xff]
  %v3160 = vld [vmem:[%s18 + $0x70] sm:$0xff]
  %v3161 = vld [vmem:[%s18 + $0x78] sm:$0xff]
  %v3162 = vld [vmem:[%s18 + $0x80] sm:$0xff]
  %v3163 = vld [vmem:[%s18 + $0x88] sm:$0xff]
  %v3164 = vld [vmem:[%s18 + $0x90] sm:$0xff]
  %v3165 = vld [vmem:[%s18 + $0x98] sm:$0xff]
  %v3166 = vld [vmem:[%s18 + $0xa0] sm:$0xff]
  %v3167 = vld [vmem:[%s18 + $0xa8] sm:$0xff]
  %v3168 = vld [vmem:[%s18 + $0xb0] sm:$0xff]
  %v3169 = vld [vmem:[%s18 + $0xb8] sm:$0xff]
  %v3170 = vld [vmem:[%s18 + $0xc0] sm:$0xff]
  %v3171 = vld [vmem:[%s18 + $0xc8] sm:$0xff]
  %v3172 = vld [vmem:[%s18 + $0xd0] sm:$0xff]
  %v3173 = vld [vmem:[%s18 + $0xd8] sm:$0xff]
  %v3174 = vld [vmem:[#allocation12] sm:$0x1]
  %v3176 = vlaneseq
  %v3177 = vshrl.u32 %v3176, 7
  %v3178 = vsub.s32 0, %v3177
  %v3179 = vrot.slane %v3174, %v3178
  %vm3181 = vcmask 785408
  %v3183 = vsel %vm3181, %v3139, 0
  %v3186 = vsel %vm3181, %v3141, 0
  %v3189 = vsel %vm3181, %v3143, 0
  %v3192 = vsel %vm3181, %v3145, 0
  %3194 = vmatprep.subr.mxu0 0.0
  %3195 = vmatpush1.msra.mxu0 %v3146
  %3196 = vmatprep.subr.mxu0 0.0
  %3197 = vmatpush1.msra.mxu0 %v3147
  %3198 = vmatprep.subr.mxu0 0.0
  %3199 = vmatpush1.msra.mxu0 %v3148
  %3200 = vmatprep.subr.mxu0 0.0
  %3201 = vmatpush1.msra.mxu0 %v3149
  %3202 = vmatprep.subr.mxu0 0.0
  %3203 = vmatpush1.msra.mxu0 %v3150
  %3204 = vmatprep.subr.mxu0 0.0
  %3205 = vmatpush1.msra.mxu0 %v3151
  %3206 = vmatprep.subr.mxu0 0.0
  %3207 = vmatpush1.msra.mxu0 %v3152
  %3208 = vmatprep.subr.mxu0 0.0
  %3209 = vmatpush1.msra.mxu0 %v3153
  %3210 = vmatprep.subr.mxu0 0.0
  %3211 = vmatpush1.msra.mxu0 %v3154
  %3212 = vmatprep.subr.mxu0 0.0
  %3213 = vmatpush1.msra.mxu0 %v3155
  %3214 = vmatprep.subr.mxu0 0.0
  %3215 = vmatpush1.msra.mxu0 %v3156
  %3216 = vmatprep.subr.mxu0 0.0
  %3217 = vmatpush1.msra.mxu0 %v3157
  %3218 = vmatprep.subr.mxu0 0.0
  %3219 = vmatpush1.msra.mxu0 %v3158
  %3220 = vmatprep.subr.mxu0 0.0
  %3221 = vmatpush1.msra.mxu0 %v3159
  %3222 = vmatprep.subr.mxu0 0.0
  %3223 = vmatpush1.msra.mxu0 %v3160
  %3224 = vmatprep.subr.mxu0 0.0
  %3225 = vmatpush1.msra.mxu0 %v3161
  %3226 = vmatprep.subr.mxu0 0.0
  %3227 = vmatpush1.msra.mxu0 %v3162
  %3228 = vmatprep.subr.mxu0 0.0
  %3229 = vmatpush1.msra.mxu0 %v3163
  %3230 = vmatprep.subr.mxu0 0.0
  %3231 = vmatpush1.msra.mxu0 %v3164
  %3232 = vmatprep.subr.mxu0 0.0
  %3233 = vmatpush1.msra.mxu0 %v3165
  %3234 = vmatprep.subr.mxu0 0.0
  %3235 = vmatpush1.msra.mxu0 %v3166
  %3236 = vmatprep.subr.mxu0 0.0
  %3237 = vmatpush1.msra.mxu0 %v3167
  %3238 = vmatprep.subr.mxu0 0.0
  %3239 = vmatpush1.msra.mxu0 %v3168
  %3240 = vmatprep.subr.mxu0 0.0
  %3241 = vmatpush1.msra.mxu0 %v3169
  %3242 = vmatprep.subr.mxu0 0.0
  %3243 = vmatpush1.msra.mxu0 %v3170
  %3244 = vmatprep.subr.mxu0 0.0
  %3245 = vmatpush1.msra.mxu0 %v3171
  %3246 = vmatprep.subr.mxu0 0.0
  %3247 = vmatpush1.msra.mxu0 %v3172
  %3248 = vmatprep.subr.mxu0 0.0
  %3249 = vmatpush1.msra.mxu0 %v3173
  %3250 = vmatprep.subr.mxu0 0.0
  %3251 = vmatpush1.msra.mxu0 0.0
  %3252 = vmatprep.subr.mxu0 0.0
  %3253 = vmatpush1.msra.mxu0 0.0
  %3254 = vmatprep.subr.mxu0 0.0
  %3255 = vmatpush1.msra.mxu0 0.0
  %3256 = vmatprep.subr.mxu0 0.0
  %3257 = vmatpush1.msra.mxu0 0.0
  %3258 = vmatprep.mubr.f32.mxu0 %v3183
  %3259 = vmatmul.mubr.f32.gmra.mrb[0].mxu0 %v3138
  %v3260 = vpop.f32.mrb[0].mxu0
  %v3261 = vadd.f32 %v3179, %v3260
  %v3262 = vpop.f32.mrb[0].mxu0
  %3263 = vmatprep.mubr.f32.mxu0 %v3186
  %3264 = vmatmul.mubr.f32.gmra.mrb[0].mxu0 %v3140
  %v3265 = vpop.f32.mrb[0].mxu0
  %v3266 = vadd.f32 %v3179, %v3265
  %v3267 = vpop.f32.mrb[0].mxu0
  %3268 = vmatprep.mubr.f32.mxu0 %v3189
  %3269 = vmatmul.mubr.f32.gmra.mrb[0].mxu0 %v3142
  %v3270 = vpop.f32.mrb[0].mxu0
  %v3271 = vadd.f32 %v3179, %v3270
  %v3272 = vpop.f32.mrb[0].mxu0
  %3273 = vmatprep.mubr.f32.mxu0 %v3192
  %3274 = vmatmul.mubr.f32.gmra.mrb[0].mxu0 %v3144
  %v3275 = vpop.f32.mrb[0].mxu0
  %v3276 = vadd.f32 %v3179, %v3275
  %v3277 = vpop.f32.mrb[0].mxu0
  %3278 = vdwg.mxu0
  %v3279 = vtanh.pop %v3261
  %v3280 = vtanh.pop %v3266
  %v3281 = vtanh.pop %v3271
  %v3282 = vtanh.pop %v3276
  %3283 = vst.msk [vmem:[%s20] sm:$0xff] %vm74, %v3279
  %3284 = vst.msk [vmem:[%s20 + $0x8] sm:$0xff] %vm74, %v3280
  %3285 = vst.msk [vmem:[%s20 + $0x10] sm:$0xff] %vm74, %v3281
  %3286 = vst.msk [vmem:[%s20 + $0x18] sm:$0xff] %vm74, %v3282
  // Predicated region
  $region82: #{ecg_privacy_processor.1} parent=0 // pred_check
    _
  $region83: #{ecg_privacy_processor.1} parent=0 // pred_check_branch
    %3288 = sbr.rel (0) target = $region85
  $region84: #{ecg_privacy_processor.1} parent=0 // pred_region
    _
  $region85: #{ecg_privacy_processor.1} parent=0 // pred_fallthru
    _
  // Predicated region
  $region86: #{ecg_privacy_processor.1} parent=0 // pred_check
    _
  $region87: #{ecg_privacy_processor.1} parent=0 // pred_check_branch
    %3290 = sbr.rel (0) target = $region89
  $region88: #{ecg_privacy_processor.1} parent=0 // pred_region
    _
  $region89: #{ecg_privacy_processor.1} parent=0 // pred_fallthru
    _

</llo_original>
